<compile_context>
chip_gen: v6e
topology: v6e:2x2x1
jax: 0.10.0
libtpu: 0.0.40
codegen_flags: <defaults>
</compile_context>

<pallas_src>
import math
import functools

import jax
import jax.numpy as jnp
from jax import lax
from jax.experimental import pallas as pl
from jax.experimental.pallas import tpu as pltpu

LN_EPS = 1e-5  # PyTorch nn.LayerNorm default eps


def _layernorm(x, gamma, beta):
    mu = jnp.mean(x, axis=-1, keepdims=True)
    var = jnp.mean((x - mu) ** 2, axis=-1, keepdims=True)
    return (x - mu) * lax.rsqrt(var + LN_EPS) * gamma + beta


def _gelu_exact(x):
    # nn.GELU() default is the exact (erf-based) GELU.
    return 0.5 * x * (1.0 + lax.erf(x * (1.0 / math.sqrt(2.0))))


def attn_block_kernel(x_ref, g1_ref, be1_ref,
                      wqkv_ref, bqkv_ref, wo_ref, bo_ref,
                      g2_ref, be2_ref, w1_ref, b1_ref, w2_ref, b2_ref,
                      o_ref, *, num_heads):
    """One grid step == `bt` batch elements.  All refs live in VMEM."""
    bt, C, S = x_ref.shape
    nh = num_heads
    hd = C // nh
    M = bt * S
    bf16 = jnp.bfloat16
    f32 = jnp.float32

    # ---- NCHW (flattened spatial) -> tokens-major (M, C): one batched
    #      minor-dims transpose + leading-dim merge (no per-batch loop) ----
    x = jnp.transpose(x_ref[...], (0, 2, 1)).reshape(M, C).astype(f32)

    # ---- LayerNorm (f32, VPU) ----
    x_ln = _layernorm(x, g1_ref[...], be1_ref[...])                   # (M, C)

    # ---- fused QKV projection: ONE (M, C) @ (C, 3C) MXU matmul ----
    # Column layout is [Q | K | V], each ordered head-major (h*hd + d), so
    # per-head slabs are static lane slices.  Softmax scale is pre-folded
    # into the Q columns / bias by the wrapper.
    qkv = jnp.dot(x_ln.astype(bf16), wqkv_ref[...],
                  preferred_element_type=f32) + bqkv_ref[...]         # (M, 3C)

    # ---- head-major views (nh*bt, S, hd); rows ordered (head, batch, token).
    #      nh is a tiny compile-time constant, so the slice list below is a
    #      fixed 4-way lane split, not a per-batch op chain. ----
    def to_heads(base):
        cols = [qkv[:, base + h * hd: base + (h + 1) * hd] for h in range(nh)]
        return jnp.stack(cols, axis=0).reshape(nh * bt, S, hd)

    q = to_heads(0).astype(bf16)          # scale already folded into Wq / bq
    k = to_heads(C).astype(bf16)
    v = to_heads(2 * C).astype(bf16)

    # ---- scores + softmax + AV, each a single einsum batched over (h, b) ----
    s = jnp.einsum("bqd,bkd->bqk", q, k,
                   preferred_element_type=f32)                        # (nh*bt,S,S)
    s = s - jnp.max(s, axis=-1, keepdims=True)                        # stable
    p = jnp.exp(s)
    p = p * pl.reciprocal(jnp.sum(p, axis=-1, keepdims=True), approx=True)

    oh = jnp.einsum("bqk,bkd->bqd", p.astype(bf16), v,
                    preferred_element_type=f32)                       # (nh*bt,S,hd)

    # ---- merge heads back to (M, C) once, then a single out-proj matmul ----
    merged = jnp.concatenate(
        [oh[h * bt:(h + 1) * bt].reshape(M, hd) for h in range(nh)], axis=-1)
    attn = jnp.dot(merged.astype(bf16), wo_ref[...],
                   preferred_element_type=f32) + bo_ref[...]          # (M, C)

    # ---- first residual ----
    h1 = attn + x

    # ---- ff_self: LayerNorm -> Linear -> GELU -> Linear, + residual ----
    y = _layernorm(h1, g2_ref[...], be2_ref[...])
    y = jnp.dot(y.astype(bf16), w1_ref[...],
                preferred_element_type=f32) + b1_ref[...]
    y = _gelu_exact(y)
    y = jnp.dot(y.astype(bf16), w2_ref[...],
                preferred_element_type=f32) + b2_ref[...]
    out = y + h1                                                      # (M, C)

    # ---- tokens-major -> channel-major flat slab: lane-dense (bt, C*S) store
    out_cs = jnp.transpose(out.reshape(bt, S, C), (0, 2, 1))          # (bt, C, S)
    o_ref[...] = out_cs.reshape(bt, C * S).astype(o_ref.dtype)


def _pick_batch_block(B, S):
    """Single fat block on single-TC chips.  On dual-TC v7x, split into two
    'parallel' grid steps only when each core gets >= 256 token rows and the
    lane-dense output block stays sublane-aligned."""
    try:
        kind = jax.devices()[0].device_kind.lower()
    except Exception:
        kind = ""
    dual_tc = ("v7" in kind) or ("7x" in kind)
    if dual_tc and B % 2 == 0:
        bt = B // 2
        if bt * S >= 256 and bt % 8 == 0:
            return bt
    return B


def self_attention_block(x, params, *, num_heads=4, batch_block=None):
    """x: (B, C, H, W) float32.  Returns (B, C, H, W).
    Matches SelfAttentionBlock.forward: LN -> MHA -> +res -> FF -> +res."""
    B, C, H, W = x.shape
    S = H * W
    hd = C // num_heads
    bt = _pick_batch_block(B, S) if batch_block is None else batch_block
    assert B % bt == 0, "batch block must divide batch"
    grid = (B // bt,)

    # NCHW -> (B, C, S): pure metadata reshape, no HBM copy.
    x_cs = x.reshape(B, C, S)

    # --- weight repack (all outside the kernel, tiny one-time XLA ops) ---
    # Weights are stored in "x @ W" layout, i.e. already transposed relative
    # to PyTorch's in_proj_weight / Linear.weight storage.
    scale = 1.0 / math.sqrt(hd)
    wqkv = jnp.concatenate(
        [params["wq"] * scale, params["wk"], params["wv"]],
        axis=1).astype(jnp.bfloat16)                                   # (C, 3C)
    bqkv = jnp.concatenate(
        [params["bq"] * scale, params["bk"], params["bv"]],
        axis=1).astype(jnp.float32)                                    # (1, 3C)
    wo = params["wo"].astype(jnp.bfloat16)                             # (C, C)
    w1 = params["w1"].astype(jnp.bfloat16)
    w2 = params["w2"].astype(jnp.bfloat16)

    vec_spec = pl.BlockSpec((1, C), lambda i: (0, 0))
    mat_spec = pl.BlockSpec((C, C), lambda i: (0, 0))
    x_spec = pl.BlockSpec((bt, C, S), lambda i: (i, 0, 0))
    wqkv_spec = pl.BlockSpec((C, 3 * C), lambda i: (0, 0))
    bqkv_spec = pl.BlockSpec((1, 3 * C), lambda i: (0, 0))
    out_spec = pl.BlockSpec((bt, C * S), lambda i: (i, 0))             # lane-dense

    kernel = functools.partial(attn_block_kernel, num_heads=num_heads)

    out_flat = pl.pallas_call(
        kernel,
        out_shape=jax.ShapeDtypeStruct((B, C * S), x.dtype),
        grid_spec=pltpu.PrefetchScalarGridSpec(
            num_scalar_prefetch=0,
            grid=grid,
            in_specs=[
                x_spec,                    # x (NCHW with flattened spatial)
                vec_spec, vec_spec,        # ln gamma / beta
                wqkv_spec, bqkv_spec,      # fused QKV weight / bias (scale folded)
                mat_spec, vec_spec,        # out-proj weight / bias
                vec_spec, vec_spec,        # ff ln gamma / beta
                mat_spec, vec_spec,        # W1^T (bf16), b1
                mat_spec, vec_spec,        # W2^T (bf16), b2
            ],
            out_specs=out_spec,
        ),
        compiler_params=pltpu.CompilerParams(
            dimension_semantics=("parallel",)),
    )(
        x_cs,
        params["ln_g"], params["ln_b"],
        wqkv, bqkv, wo, params["bo"],
        params["ff_ln_g"], params["ff_ln_b"],
        w1, params["b1"], w2, params["b2"],
    )

    # Flat (B, C*S) -> NCHW: metadata-only reshape.
    return out_flat.reshape(B, C, H, W)


def make_params(key, C):
    """Deterministic synthetic parameters.  Weight matrices are stored
    pre-transposed (shape (C, C)) so the kernel computes x @ W directly.
    (Real PyTorch in_proj_weight / out_proj.weight / Linear.weight must be
    transposed before being dropped in here.)"""
    ks = jax.random.split(key, 12)
    s = 0.05
    f32 = jnp.float32
    return {
        "ln_g": jnp.ones((1, C), f32),
        "ln_b": jnp.zeros((1, C), f32),
        "wq": s * jax.random.normal(ks[0], (C, C), f32),
        "wk": s * jax.random.normal(ks[1], (C, C), f32),
        "wv": s * jax.random.normal(ks[2], (C, C), f32),
        "bq": s * jax.random.normal(ks[3], (1, C), f32),
        "bk": s * jax.random.normal(ks[4], (1, C), f32),
        "bv": s * jax.random.normal(ks[5], (1, C), f32),
        "wo": s * jax.random.normal(ks[6], (C, C), f32),
        "bo": s * jax.random.normal(ks[7], (1, C), f32),
        "ff_ln_g": jnp.ones((1, C), f32),
        "ff_ln_b": jnp.zeros((1, C), f32),
        "w1": s * jax.random.normal(ks[8], (C, C), f32),
        "b1": s * jax.random.normal(ks[9], (1, C), f32),
        "w2": s * jax.random.normal(ks[10], (C, C), f32),
        "b2": s * jax.random.normal(ks[11], (1, C), f32),
    }


if __name__ == "__main__":
    # SelfAttentionBlock(in_ch=32, size=8): in_ch must be divisible by 4 heads.
    B, C, SIZE = 2, 32, 8
    key = jax.random.PRNGKey(0)
    kx, kp = jax.random.split(key)
    x = jax.random.normal(kx, (B, C, SIZE, SIZE), jnp.float32)
    params = make_params(kp, C)

    out = self_attention_block(x, params, num_heads=4)
    jax.block_until_ready(out)
    assert out.shape == (B, C, SIZE, SIZE)
    print("KERNEL_OK")
</pallas_src>

<mosaic_0001>
module attributes {stable_mosaic.version = 11 : i64} {
  func.func @attn_block_kernel(%arg0: i32, %arg1: memref<2x32x64xf32, #tpu.memory_space<vmem>>, %arg2: memref<1x32xf32, #tpu.memory_space<vmem>>, %arg3: memref<1x32xf32, #tpu.memory_space<vmem>>, %arg4: memref<32x96xbf16, #tpu.memory_space<vmem>>, %arg5: memref<1x96xf32, #tpu.memory_space<vmem>>, %arg6: memref<32x32xbf16, #tpu.memory_space<vmem>>, %arg7: memref<1x32xf32, #tpu.memory_space<vmem>>, %arg8: memref<1x32xf32, #tpu.memory_space<vmem>>, %arg9: memref<1x32xf32, #tpu.memory_space<vmem>>, %arg10: memref<32x32xbf16, #tpu.memory_space<vmem>>, %arg11: memref<1x32xf32, #tpu.memory_space<vmem>>, %arg12: memref<32x32xbf16, #tpu.memory_space<vmem>>, %arg13: memref<1x32xf32, #tpu.memory_space<vmem>>, %arg14: memref<2x2048xf32, #tpu.memory_space<vmem>>) attributes {dimension_semantics = [#tpu.dimension_semantics<parallel>], iteration_bounds = array<i64: 1>, scalar_prefetch = 0 : i64, scratch_operands = 0 : i64, tpu.core_type = #tpu.core_type<tc>, window_params = [{transform_indices = @transform_0, window_bounds = array<i64: 2, 32, 64>}, {pipeline_mode = #tpu.pipeline_mode<synchronous>, transform_indices = @transform_1, window_bounds = array<i64: 1, 32>}, {pipeline_mode = #tpu.pipeline_mode<synchronous>, transform_indices = @transform_2, window_bounds = array<i64: 1, 32>}, {pipeline_mode = #tpu.pipeline_mode<synchronous>, transform_indices = @transform_3, window_bounds = array<i64: 32, 96>}, {pipeline_mode = #tpu.pipeline_mode<synchronous>, transform_indices = @transform_4, window_bounds = array<i64: 1, 96>}, {pipeline_mode = #tpu.pipeline_mode<synchronous>, transform_indices = @transform_5, window_bounds = array<i64: 32, 32>}, {pipeline_mode = #tpu.pipeline_mode<synchronous>, transform_indices = @transform_6, window_bounds = array<i64: 1, 32>}, {pipeline_mode = #tpu.pipeline_mode<synchronous>, transform_indices = @transform_7, window_bounds = array<i64: 1, 32>}, {pipeline_mode = #tpu.pipeline_mode<synchronous>, transform_indices = @transform_8, window_bounds = array<i64: 1, 32>}, {pipeline_mode = #tpu.pipeline_mode<synchronous>, transform_indices = @transform_9, window_bounds = array<i64: 32, 32>}, {pipeline_mode = #tpu.pipeline_mode<synchronous>, transform_indices = @transform_10, window_bounds = array<i64: 1, 32>}, {pipeline_mode = #tpu.pipeline_mode<synchronous>, transform_indices = @transform_11, window_bounds = array<i64: 32, 32>}, {pipeline_mode = #tpu.pipeline_mode<synchronous>, transform_indices = @transform_12, window_bounds = array<i64: 1, 32>}, {transform_indices = @transform_13, window_bounds = array<i64: 2, 2048>}]} {
    %c0 = arith.constant 0 : index
    %c0_0 = arith.constant 0 : index
    %c0_1 = arith.constant 0 : index
    %0 = vector.load %arg1[%c0, %c0_0, %c0_1] : memref<2x32x64xf32, #tpu.memory_space<vmem>>, vector<2x32x64xf32>
    %1 = tpu.transpose %0, [0, 2, 1] : vector<2x32x64xf32> -> vector<2x64x32xf32>
    %2 = vector.shape_cast %1 : vector<2x64x32xf32> to vector<128x32xf32>
    %c0_2 = arith.constant 0 : index
    %c0_3 = arith.constant 0 : index
    %3 = vector.load %arg2[%c0_2, %c0_3] : memref<1x32xf32, #tpu.memory_space<vmem>>, vector<1x32xf32>
    %c0_4 = arith.constant 0 : index
    %c0_5 = arith.constant 0 : index
    %4 = vector.load %arg3[%c0_4, %c0_5] : memref<1x32xf32, #tpu.memory_space<vmem>>, vector<1x32xf32>
    %cst = arith.constant dense<0.000000e+00> : vector<128xf32>
    %5 = vector.multi_reduction <add>, %2, %cst [1] : vector<128x32xf32> to vector<128xf32>
    %6 = vector.shape_cast %5 : vector<128xf32> to vector<128x1xf32>
    %cst_6 = arith.constant 3.200000e+01 : f32
    %7 = vector.broadcast %cst_6 : f32 to vector<128x1xf32>
    %8 = arith.divf %6, %7 : vector<128x1xf32>
    %9 = vector.broadcast %8 : vector<128x1xf32> to vector<128x32xf32>
    %10 = arith.subf %2, %9 : vector<128x32xf32>
    %11 = arith.mulf %10, %10 : vector<128x32xf32>
    %cst_7 = arith.constant dense<0.000000e+00> : vector<128xf32>
    %12 = vector.multi_reduction <add>, %11, %cst_7 [1] : vector<128x32xf32> to vector<128xf32>
    %13 = vector.shape_cast %12 : vector<128xf32> to vector<128x1xf32>
    %cst_8 = arith.constant 3.200000e+01 : f32
    %14 = vector.broadcast %cst_8 : f32 to vector<128x1xf32>
    %15 = arith.divf %13, %14 : vector<128x1xf32>
    %16 = vector.broadcast %8 : vector<128x1xf32> to vector<128x32xf32>
    %17 = arith.subf %2, %16 : vector<128x32xf32>
    %cst_9 = arith.constant 9.99999974E-6 : f32
    %18 = vector.broadcast %cst_9 : f32 to vector<128x1xf32>
    %19 = arith.addf %15, %18 : vector<128x1xf32>
    %20 = math.rsqrt %19 : vector<128x1xf32>
    %21 = vector.broadcast %20 : vector<128x1xf32> to vector<128x32xf32>
    %22 = arith.mulf %17, %21 : vector<128x32xf32>
    %23 = vector.broadcast %3 : vector<1x32xf32> to vector<128x32xf32>
    %24 = arith.mulf %22, %23 : vector<128x32xf32>
    %25 = vector.broadcast %4 : vector<1x32xf32> to vector<128x32xf32>
    %26 = arith.addf %24, %25 : vector<128x32xf32>
    %27 = arith.truncf %26 : vector<128x32xf32> to vector<128x32xbf16>
    %c0_10 = arith.constant 0 : index
    %c0_11 = arith.constant 0 : index
    %28 = vector.load %arg4[%c0_10, %c0_11] : memref<32x96xbf16, #tpu.memory_space<vmem>>, vector<32x96xbf16>
    %cst_12 = arith.constant dense<0.000000e+00> : vector<128x96xf32>
    %29 = tpu.matmul %27, %28, %cst_12 {dimension_numbers = #tpu.dot_dimension_numbers<[1], [0], [0], [1], [0, 0, 1, 1], [], []>} : vector<128x32xbf16>, vector<32x96xbf16>, vector<128x96xf32> -> vector<128x96xf32>
    %c0_13 = arith.constant 0 : index
    %c0_14 = arith.constant 0 : index
    %30 = vector.load %arg5[%c0_13, %c0_14] : memref<1x96xf32, #tpu.memory_space<vmem>>, vector<1x96xf32>
    %31 = vector.broadcast %30 : vector<1x96xf32> to vector<128x96xf32>
    %32 = arith.addf %29, %31 : vector<128x96xf32>
    %33 = vector.extract_strided_slice %32 {offsets = [0, 0], sizes = [128, 8], strides = [1, 1]} : vector<128x96xf32> to vector<128x8xf32>
    %34 = vector.extract_strided_slice %32 {offsets = [0, 8], sizes = [128, 8], strides = [1, 1]} : vector<128x96xf32> to vector<128x8xf32>
    %35 = vector.extract_strided_slice %32 {offsets = [0, 16], sizes = [128, 8], strides = [1, 1]} : vector<128x96xf32> to vector<128x8xf32>
    %36 = vector.extract_strided_slice %32 {offsets = [0, 24], sizes = [128, 8], strides = [1, 1]} : vector<128x96xf32> to vector<128x8xf32>
    %37 = vector.shape_cast %33 : vector<128x8xf32> to vector<1x128x8xf32>
    %38 = vector.shape_cast %34 : vector<128x8xf32> to vector<1x128x8xf32>
    %39 = vector.shape_cast %35 : vector<128x8xf32> to vector<1x128x8xf32>
    %40 = vector.shape_cast %36 : vector<128x8xf32> to vector<1x128x8xf32>
    %41 = tpu.concatenate %37, %38, %39, %40 in 0 : vector<1x128x8xf32>, vector<1x128x8xf32>, vector<1x128x8xf32>, vector<1x128x8xf32> -> vector<4x128x8xf32>
    %42 = vector.shape_cast %41 : vector<4x128x8xf32> to vector<8x64x8xf32>
    %43 = arith.truncf %42 : vector<8x64x8xf32> to vector<8x64x8xbf16>
    %44 = vector.extract_strided_slice %32 {offsets = [0, 32], sizes = [128, 8], strides = [1, 1]} : vector<128x96xf32> to vector<128x8xf32>
    %45 = vector.extract_strided_slice %32 {offsets = [0, 40], sizes = [128, 8], strides = [1, 1]} : vector<128x96xf32> to vector<128x8xf32>
    %46 = vector.extract_strided_slice %32 {offsets = [0, 48], sizes = [128, 8], strides = [1, 1]} : vector<128x96xf32> to vector<128x8xf32>
    %47 = vector.extract_strided_slice %32 {offsets = [0, 56], sizes = [128, 8], strides = [1, 1]} : vector<128x96xf32> to vector<128x8xf32>
    %48 = vector.shape_cast %44 : vector<128x8xf32> to vector<1x128x8xf32>
    %49 = vector.shape_cast %45 : vector<128x8xf32> to vector<1x128x8xf32>
    %50 = vector.shape_cast %46 : vector<128x8xf32> to vector<1x128x8xf32>
    %51 = vector.shape_cast %47 : vector<128x8xf32> to vector<1x128x8xf32>
    %52 = tpu.concatenate %48, %49, %50, %51 in 0 : vector<1x128x8xf32>, vector<1x128x8xf32>, vector<1x128x8xf32>, vector<1x128x8xf32> -> vector<4x128x8xf32>
    %53 = vector.shape_cast %52 : vector<4x128x8xf32> to vector<8x64x8xf32>
    %54 = arith.truncf %53 : vector<8x64x8xf32> to vector<8x64x8xbf16>
    %55 = vector.extract_strided_slice %32 {offsets = [0, 64], sizes = [128, 8], strides = [1, 1]} : vector<128x96xf32> to vector<128x8xf32>
    %56 = vector.extract_strided_slice %32 {offsets = [0, 72], sizes = [128, 8], strides = [1, 1]} : vector<128x96xf32> to vector<128x8xf32>
    %57 = vector.extract_strided_slice %32 {offsets = [0, 80], sizes = [128, 8], strides = [1, 1]} : vector<128x96xf32> to vector<128x8xf32>
    %58 = vector.extract_strided_slice %32 {offsets = [0, 88], sizes = [128, 8], strides = [1, 1]} : vector<128x96xf32> to vector<128x8xf32>
    %59 = vector.shape_cast %55 : vector<128x8xf32> to vector<1x128x8xf32>
    %60 = vector.shape_cast %56 : vector<128x8xf32> to vector<1x128x8xf32>
    %61 = vector.shape_cast %57 : vector<128x8xf32> to vector<1x128x8xf32>
    %62 = vector.shape_cast %58 : vector<128x8xf32> to vector<1x128x8xf32>
    %63 = tpu.concatenate %59, %60, %61, %62 in 0 : vector<1x128x8xf32>, vector<1x128x8xf32>, vector<1x128x8xf32>, vector<1x128x8xf32> -> vector<4x128x8xf32>
    %64 = vector.shape_cast %63 : vector<4x128x8xf32> to vector<8x64x8xf32>
    %65 = arith.truncf %64 : vector<8x64x8xf32> to vector<8x64x8xbf16>
    "tpu.trace_start"() <{level = 10 : i32, message = "bqd,bkd->bqk"}> : () -> ()
    %cst_15 = arith.constant dense<0.000000e+00> : vector<8x64x64xf32>
    %66 = tpu.matmul %43, %54, %cst_15 {dimension_numbers = #tpu.dot_dimension_numbers<[2], [2], [1], [1], [0, 0, 0, 1, 1, 1], [0], [0]>} : vector<8x64x8xbf16>, vector<8x64x8xbf16>, vector<8x64x64xf32> -> vector<8x64x64xf32>
    "tpu.trace_stop"() : () -> ()
    %cst_16 = arith.constant dense<0xFF800000> : vector<8x64xf32>
    %67 = vector.multi_reduction <maximumf>, %66, %cst_16 [2] : vector<8x64x64xf32> to vector<8x64xf32>
    %68 = vector.shape_cast %67 : vector<8x64xf32> to vector<8x64x1xf32>
    %69 = vector.broadcast %68 : vector<8x64x1xf32> to vector<8x64x64xf32>
    %70 = arith.subf %66, %69 : vector<8x64x64xf32>
    %71 = math.exp %70 : vector<8x64x64xf32>
    %cst_17 = arith.constant dense<0.000000e+00> : vector<8x64xf32>
    %72 = vector.multi_reduction <add>, %71, %cst_17 [2] : vector<8x64x64xf32> to vector<8x64xf32>
    %73 = vector.shape_cast %72 : vector<8x64xf32> to vector<8x64x1xf32>
    %74 = tpu.reciprocal %73 {approx = true} : vector<8x64x1xf32> -> vector<8x64x1xf32>
    %75 = vector.broadcast %74 : vector<8x64x1xf32> to vector<8x64x64xf32>
    %76 = arith.mulf %71, %75 : vector<8x64x64xf32>
    %77 = arith.truncf %76 : vector<8x64x64xf32> to vector<8x64x64xbf16>
    "tpu.trace_start"() <{level = 10 : i32, message = "bqk,bkd->bqd"}> : () -> ()
    %cst_18 = arith.constant dense<0.000000e+00> : vector<8x64x8xf32>
    %78 = tpu.matmul %77, %65, %cst_18 {dimension_numbers = #tpu.dot_dimension_numbers<[2], [1], [1], [2], [0, 0, 0, 1, 1, 2], [0], [0]>} : vector<8x64x64xbf16>, vector<8x64x8xbf16>, vector<8x64x8xf32> -> vector<8x64x8xf32>
    "tpu.trace_stop"() : () -> ()
    %79 = vector.extract_strided_slice %78 {offsets = [0, 0, 0], sizes = [2, 64, 8], strides = [1, 1, 1]} : vector<8x64x8xf32> to vector<2x64x8xf32>
    %80 = vector.shape_cast %79 : vector<2x64x8xf32> to vector<128x8xf32>
    %81 = vector.extract_strided_slice %78 {offsets = [2, 0, 0], sizes = [2, 64, 8], strides = [1, 1, 1]} : vector<8x64x8xf32> to vector<2x64x8xf32>
    %82 = vector.shape_cast %81 : vector<2x64x8xf32> to vector<128x8xf32>
    %83 = vector.extract_strided_slice %78 {offsets = [4, 0, 0], sizes = [2, 64, 8], strides = [1, 1, 1]} : vector<8x64x8xf32> to vector<2x64x8xf32>
    %84 = vector.shape_cast %83 : vector<2x64x8xf32> to vector<128x8xf32>
    %85 = vector.extract_strided_slice %78 {offsets = [6, 0, 0], sizes = [2, 64, 8], strides = [1, 1, 1]} : vector<8x64x8xf32> to vector<2x64x8xf32>
    %86 = vector.shape_cast %85 : vector<2x64x8xf32> to vector<128x8xf32>
    %87 = tpu.concatenate %80, %82, %84, %86 in 1 : vector<128x8xf32>, vector<128x8xf32>, vector<128x8xf32>, vector<128x8xf32> -> vector<128x32xf32>
    %88 = arith.truncf %87 : vector<128x32xf32> to vector<128x32xbf16>
    %c0_19 = arith.constant 0 : index
    %c0_20 = arith.constant 0 : index
    %89 = vector.load %arg6[%c0_19, %c0_20] : memref<32x32xbf16, #tpu.memory_space<vmem>>, vector<32x32xbf16>
    %cst_21 = arith.constant dense<0.000000e+00> : vector<128x32xf32>
    %90 = tpu.matmul %88, %89, %cst_21 {dimension_numbers = #tpu.dot_dimension_numbers<[1], [0], [0], [1], [0, 0, 1, 1], [], []>} : vector<128x32xbf16>, vector<32x32xbf16>, vector<128x32xf32> -> vector<128x32xf32>
    %c0_22 = arith.constant 0 : index
    %c0_23 = arith.constant 0 : index
    %91 = vector.load %arg7[%c0_22, %c0_23] : memref<1x32xf32, #tpu.memory_space<vmem>>, vector<1x32xf32>
    %92 = vector.broadcast %91 : vector<1x32xf32> to vector<128x32xf32>
    %93 = arith.addf %90, %92 : vector<128x32xf32>
    %94 = arith.addf %93, %2 : vector<128x32xf32>
    %c0_24 = arith.constant 0 : index
    %c0_25 = arith.constant 0 : index
    %95 = vector.load %arg8[%c0_24, %c0_25] : memref<1x32xf32, #tpu.memory_space<vmem>>, vector<1x32xf32>
    %c0_26 = arith.constant 0 : index
    %c0_27 = arith.constant 0 : index
    %96 = vector.load %arg9[%c0_26, %c0_27] : memref<1x32xf32, #tpu.memory_space<vmem>>, vector<1x32xf32>
    %cst_28 = arith.constant dense<0.000000e+00> : vector<128xf32>
    %97 = vector.multi_reduction <add>, %94, %cst_28 [1] : vector<128x32xf32> to vector<128xf32>
    %98 = vector.shape_cast %97 : vector<128xf32> to vector<128x1xf32>
    %cst_29 = arith.constant 3.200000e+01 : f32
    %99 = vector.broadcast %cst_29 : f32 to vector<128x1xf32>
    %100 = arith.divf %98, %99 : vector<128x1xf32>
    %101 = vector.broadcast %100 : vector<128x1xf32> to vector<128x32xf32>
    %102 = arith.subf %94, %101 : vector<128x32xf32>
    %103 = arith.mulf %102, %102 : vector<128x32xf32>
    %cst_30 = arith.constant dense<0.000000e+00> : vector<128xf32>
    %104 = vector.multi_reduction <add>, %103, %cst_30 [1] : vector<128x32xf32> to vector<128xf32>
    %105 = vector.shape_cast %104 : vector<128xf32> to vector<128x1xf32>
    %cst_31 = arith.constant 3.200000e+01 : f32
    %106 = vector.broadcast %cst_31 : f32 to vector<128x1xf32>
    %107 = arith.divf %105, %106 : vector<128x1xf32>
    %108 = vector.broadcast %100 : vector<128x1xf32> to vector<128x32xf32>
    %109 = arith.subf %94, %108 : vector<128x32xf32>
    %cst_32 = arith.constant 9.99999974E-6 : f32
    %110 = vector.broadcast %cst_32 : f32 to vector<128x1xf32>
    %111 = arith.addf %107, %110 : vector<128x1xf32>
    %112 = math.rsqrt %111 : vector<128x1xf32>
    %113 = vector.broadcast %112 : vector<128x1xf32> to vector<128x32xf32>
    %114 = arith.mulf %109, %113 : vector<128x32xf32>
    %115 = vector.broadcast %95 : vector<1x32xf32> to vector<128x32xf32>
    %116 = arith.mulf %114, %115 : vector<128x32xf32>
    %117 = vector.broadcast %96 : vector<1x32xf32> to vector<128x32xf32>
    %118 = arith.addf %116, %117 : vector<128x32xf32>
    %119 = arith.truncf %118 : vector<128x32xf32> to vector<128x32xbf16>
    %c0_33 = arith.constant 0 : index
    %c0_34 = arith.constant 0 : index
    %120 = vector.load %arg10[%c0_33, %c0_34] : memref<32x32xbf16, #tpu.memory_space<vmem>>, vector<32x32xbf16>
    %cst_35 = arith.constant dense<0.000000e+00> : vector<128x32xf32>
    %121 = tpu.matmul %119, %120, %cst_35 {dimension_numbers = #tpu.dot_dimension_numbers<[1], [0], [0], [1], [0, 0, 1, 1], [], []>} : vector<128x32xbf16>, vector<32x32xbf16>, vector<128x32xf32> -> vector<128x32xf32>
    %c0_36 = arith.constant 0 : index
    %c0_37 = arith.constant 0 : index
    %122 = vector.load %arg11[%c0_36, %c0_37] : memref<1x32xf32, #tpu.memory_space<vmem>>, vector<1x32xf32>
    %123 = vector.broadcast %122 : vector<1x32xf32> to vector<128x32xf32>
    %124 = arith.addf %121, %123 : vector<128x32xf32>
    %cst_38 = arith.constant 5.000000e-01 : f32
    %125 = vector.broadcast %cst_38 : f32 to vector<128x32xf32>
    %126 = arith.mulf %125, %124 : vector<128x32xf32>
    %cst_39 = arith.constant 0.707106769 : f32
    %127 = vector.broadcast %cst_39 : f32 to vector<128x32xf32>
    %128 = arith.mulf %124, %127 : vector<128x32xf32>
    %129 = math.erf %128 : vector<128x32xf32>
    %cst_40 = arith.constant 1.000000e+00 : f32
    %130 = vector.broadcast %cst_40 : f32 to vector<128x32xf32>
    %131 = arith.addf %130, %129 : vector<128x32xf32>
    %132 = arith.mulf %126, %131 : vector<128x32xf32>
    %133 = arith.truncf %132 : vector<128x32xf32> to vector<128x32xbf16>
    %c0_41 = arith.constant 0 : index
    %c0_42 = arith.constant 0 : index
    %134 = vector.load %arg12[%c0_41, %c0_42] : memref<32x32xbf16, #tpu.memory_space<vmem>>, vector<32x32xbf16>
    %cst_43 = arith.constant dense<0.000000e+00> : vector<128x32xf32>
    %135 = tpu.matmul %133, %134, %cst_43 {dimension_numbers = #tpu.dot_dimension_numbers<[1], [0], [0], [1], [0, 0, 1, 1], [], []>} : vector<128x32xbf16>, vector<32x32xbf16>, vector<128x32xf32> -> vector<128x32xf32>
    %c0_44 = arith.constant 0 : index
    %c0_45 = arith.constant 0 : index
    %136 = vector.load %arg13[%c0_44, %c0_45] : memref<1x32xf32, #tpu.memory_space<vmem>>, vector<1x32xf32>
    %137 = vector.broadcast %136 : vector<1x32xf32> to vector<128x32xf32>
    %138 = arith.addf %135, %137 : vector<128x32xf32>
    %139 = arith.addf %138, %94 : vector<128x32xf32>
    %140 = vector.shape_cast %139 : vector<128x32xf32> to vector<2x64x32xf32>
    %141 = tpu.transpose %140, [0, 2, 1] : vector<2x64x32xf32> -> vector<2x32x64xf32>
    %142 = vector.shape_cast %141 : vector<2x32x64xf32> to vector<2x2048xf32>
    %c0_46 = arith.constant 0 : index
    %c0_47 = arith.constant 0 : index
    %143 = vector.load %arg14[%c0_46, %c0_47] : memref<2x2048xf32, #tpu.memory_space<vmem>>, vector<2x2048xf32>
    tpu.vector_store %arg14[%c0_46, %c0_47], %142 {strides = array<i32>} : memref<2x2048xf32, #tpu.memory_space<vmem>>, vector<2x2048xf32>,
    return
  }
  func.func @transform_0(%arg0: i32) -> (i32, i32, i32) {
    %c0_i32 = arith.constant 0 : i32
    %c0_i32_0 = arith.constant 0 : i32
    %c0_i32_1 = arith.constant 0 : i32
    return %arg0, %c0_i32, %c0_i32_0 : i32, i32, i32
  }
  func.func @transform_1(%arg0: i32) -> (i32, i32) {
    %c0_i32 = arith.constant 0 : i32
    %c0_i32_0 = arith.constant 0 : i32
    %c0_i32_1 = arith.constant 0 : i32
    return %c0_i32, %c0_i32_0 : i32, i32
  }
  func.func @transform_2(%arg0: i32) -> (i32, i32) {
    %c0_i32 = arith.constant 0 : i32
    %c0_i32_0 = arith.constant 0 : i32
    %c0_i32_1 = arith.constant 0 : i32
    return %c0_i32, %c0_i32_0 : i32, i32
  }
  func.func @transform_3(%arg0: i32) -> (i32, i32) {
    %c0_i32 = arith.constant 0 : i32
    %c0_i32_0 = arith.constant 0 : i32
    %c0_i32_1 = arith.constant 0 : i32
    return %c0_i32, %c0_i32_0 : i32, i32
  }
  func.func @transform_4(%arg0: i32) -> (i32, i32) {
    %c0_i32 = arith.constant 0 : i32
    %c0_i32_0 = arith.constant 0 : i32
    %c0_i32_1 = arith.constant 0 : i32
    return %c0_i32, %c0_i32_0 : i32, i32
  }
  func.func @transform_5(%arg0: i32) -> (i32, i32) {
    %c0_i32 = arith.constant 0 : i32
    %c0_i32_0 = arith.constant 0 : i32
    %c0_i32_1 = arith.constant 0 : i32
    return %c0_i32, %c0_i32_0 : i32, i32
  }
  func.func @transform_6(%arg0: i32) -> (i32, i32) {
    %c0_i32 = arith.constant 0 : i32
    %c0_i32_0 = arith.constant 0 : i32
    %c0_i32_1 = arith.constant 0 : i32
    return %c0_i32, %c0_i32_0 : i32, i32
  }
  func.func @transform_7(%arg0: i32) -> (i32, i32) {
    %c0_i32 = arith.constant 0 : i32
    %c0_i32_0 = arith.constant 0 : i32
    %c0_i32_1 = arith.constant 0 : i32
    return %c0_i32, %c0_i32_0 : i32, i32
  }
  func.func @transform_8(%arg0: i32) -> (i32, i32) {
    %c0_i32 = arith.constant 0 : i32
    %c0_i32_0 = arith.constant 0 : i32
    %c0_i32_1 = arith.constant 0 : i32
    return %c0_i32, %c0_i32_0 : i32, i32
  }
  func.func @transform_9(%arg0: i32) -> (i32, i32) {
    %c0_i32 = arith.constant 0 : i32
    %c0_i32_0 = arith.constant 0 : i32
    %c0_i32_1 = arith.constant 0 : i32
    return %c0_i32, %c0_i32_0 : i32, i32
  }
  func.func @transform_10(%arg0: i32) -> (i32, i32) {
    %c0_i32 = arith.constant 0 : i32
    %c0_i32_0 = arith.constant 0 : i32
    %c0_i32_1 = arith.constant 0 : i32
    return %c0_i32, %c0_i32_0 : i32, i32
  }
  func.func @transform_11(%arg0: i32) -> (i32, i32) {
    %c0_i32 = arith.constant 0 : i32
    %c0_i32_0 = arith.constant 0 : i32
    %c0_i32_1 = arith.constant 0 : i32
    return %c0_i32, %c0_i32_0 : i32, i32
  }
  func.func @transform_12(%arg0: i32) -> (i32, i32) {
    %c0_i32 = arith.constant 0 : i32
    %c0_i32_0 = arith.constant 0 : i32
    %c0_i32_1 = arith.constant 0 : i32
    return %c0_i32, %c0_i32_0 : i32, i32
  }
  func.func @transform_13(%arg0: i32) -> (i32, i32) {
    %c0_i32 = arith.constant 0 : i32
    %c0_i32_0 = arith.constant 0 : i32
    return %arg0, %c0_i32 : i32, i32
  }
}

</mosaic_0001>

<llo_original>
// kernel: tpu_custom_call.1
$region0: #{tpu_custom_call.1}
  #allocation0 [shape = 'u32[]', space=smem, size = 0x4, offset = 0x4, fixed_abs, tag = 'smem constant byte address 0x4 - core index']
  #allocation1 [shape = 'u32[144,128]{1,0:T(1,128)}', space=vmem, size = 0x12000, scoped, tag = 'internal scratch']
  %s0 = inlined_call_operand.hbm [shape: f32[2,32,64], index: 0, kind: input, shape index: {}]
  %s1 = inlined_call_operand.hbm [shape: f32[1,32], index: 1, kind: input, shape index: {}]
  %s2 = inlined_call_operand.hbm [shape: f32[1,32], index: 2, kind: input, shape index: {}]
  %s3 = inlined_call_operand.hbm [shape: bf16[32,96], index: 3, kind: input, shape index: {}]
  %s4 = inlined_call_operand.hbm [shape: f32[1,96], index: 4, kind: input, shape index: {}]
  %s5 = inlined_call_operand.hbm [shape: bf16[32,32], index: 5, kind: input, shape index: {}]
  %s6 = inlined_call_operand.hbm [shape: f32[1,32], index: 6, kind: input, shape index: {}]
  %s7 = inlined_call_operand.hbm [shape: f32[1,32], index: 7, kind: input, shape index: {}]
  %s8 = inlined_call_operand.hbm [shape: f32[1,32], index: 8, kind: input, shape index: {}]
  %s9 = inlined_call_operand.vmem [shape: bf16[32,32], index: 9, kind: input, shape index: {}]
  %s10 = inlined_call_operand.vmem [shape: f32[1,32], index: 10, kind: input, shape index: {}]
  %s11 = inlined_call_operand.hbm [shape: bf16[32,32], index: 11, kind: input, shape index: {}]
  %s12 = inlined_call_operand.vmem [shape: f32[1,32], index: 12, kind: input, shape index: {}]
  %s13 = inlined_call_operand.hbm [shape: f32[2,2048], index: 13, kind: output, shape index: {}]
  %s14 = sld [smem:[#allocation0]]
  $region102: #{tpu_custom_call.1} parent=0
    _
  %s16 = ssub.s32 1, %s14
  %s17 = scalar_select 0, %s16, %s14
  $region1: #{tpu_custom_call.1} parent=0
    #allocation2 [shape = 'u8[32768]{0}', space=vmem, size = 0x8000, scoped, tag = 'input window, operand 0, single buffered']
    #allocation3 [shape = 's32[1]{0}', space=sflag, size = 0x4, scoped, tag = 'scoped memory for tpu_custom_call.1']
    #allocation4 [shape = 's32[1]{0}', space=sflag, size = 0x4, scoped, tag = 'scoped memory for tpu_custom_call.1']
    #allocation5 [shape = 'u8[512]{0}', space=vmem, size = 0x400, scoped, tag = 'input window, operand 1, single buffered']
    #allocation6 [shape = 's32[1]{0}', space=sflag, size = 0x4, scoped, tag = 'scoped memory for tpu_custom_call.1']
    #allocation7 [shape = 'u8[512]{0}', space=vmem, size = 0x400, scoped, tag = 'input window, operand 2, single buffered']
    #allocation8 [shape = 'u8[8192]{0}', space=vmem, size = 0x2000, scoped, tag = 'input window, operand 3, single buffered']
    #allocation9 [shape = 's32[1]{0}', space=sflag, size = 0x4, scoped, tag = 'scoped memory for tpu_custom_call.1']
    #allocation10 [shape = 'u8[512]{0}', space=vmem, size = 0x400, scoped, tag = 'input window, operand 4, single buffered']
    #allocation11 [shape = 'u8[8192]{0}', space=vmem, size = 0x2000, scoped, tag = 'input window, operand 5, single buffered']
    #allocation12 [shape = 's32[1]{0}', space=sflag, size = 0x4, scoped, tag = 'scoped memory for tpu_custom_call.1']
    #allocation13 [shape = 'u8[512]{0}', space=vmem, size = 0x400, scoped, tag = 'input window, operand 6, single buffered']
    #allocation14 [shape = 'u8[512]{0}', space=vmem, size = 0x400, scoped, tag = 'input window, operand 7, single buffered']
    #allocation15 [shape = 's32[1]{0}', space=sflag, size = 0x4, scoped, tag = 'scoped memory for tpu_custom_call.1']
    #allocation16 [shape = 'u8[512]{0}', space=vmem, size = 0x400, scoped, tag = 'input window, operand 8, single buffered']
    #allocation17 [shape = 'u8[8192]{0}', space=vmem, size = 0x2000, scoped, tag = 'input window, operand 11, single buffered']
    #allocation18 [shape = 's32[1]{0}', space=sflag, size = 0x4, scoped, tag = 'scoped memory for tpu_custom_call.1']
    #allocation19 [shape = 'u8[16384]{0}', space=vmem, size = 0x4000, scoped, tag = 'output window, operand 0, single buffered']
    %18 = vsyncpa [#allocation3], 0
    %19 = vsyncpa [#allocation6], 0
    %20 = vsyncpa [#allocation9], 0
    %21 = vsyncpa [#allocation12], 0
    %22 = vsyncpa [#allocation15], 0
    %23 = vsyncpa [#allocation18], 0
    %24 = vsyncpa [#allocation4], 0
    // Predicated region
    $region2: #{tpu_custom_call.1} parent=1 // pred_check
      _
    $region3: #{tpu_custom_call.1} parent=1 // pred_check_branch
      %26 = sbr.rel (0) target = $region5
    $region4: #{tpu_custom_call.1} parent=1 // pred_region
      %s28 = ssub.s32 1024, 1024
      %29 = vsyncadd [#allocation3], %s28
      %s30 = sshll.u32 [#allocation2], 4
      %s31 = int_to_ptr.vmem [resolvable:$true] %s30
      %36 = dma.hbm_to_vmem [thread:$0]  %s0, 1024, %s31, [#allocation3], 128, 128, 8
    $region5: #{tpu_custom_call.1} parent=1 // pred_fallthru
      _
    // Predicated region
    $region6: #{tpu_custom_call.1} parent=1 // pred_check
      _
    $region7: #{tpu_custom_call.1} parent=1 // pred_check_branch
      %38 = sbr.rel (0) target = $region9
    $region8: #{tpu_custom_call.1} parent=1 // pred_region
      %s40 = ssub.s32 16, 16
      %41 = vsyncadd [#allocation6], %s40
      %s43 = sshll.u32 [#allocation5], 4
      %s44 = int_to_ptr.vmem [resolvable:$true] %s43
      %46 = dma.hbm_to_vmem [thread:$0]  %s1, 16, %s44, [#allocation6]
    $region9: #{tpu_custom_call.1} parent=1 // pred_fallthru
      _
    // Predicated region
    $region10: #{tpu_custom_call.1} parent=1 // pred_check
      _
    $region11: #{tpu_custom_call.1} parent=1 // pred_check_branch
      %48 = sbr.rel (0) target = $region13
    $region12: #{tpu_custom_call.1} parent=1 // pred_region
      %s50 = ssub.s32 16, 16
      %51 = vsyncadd [#allocation6], %s50
      %s53 = sshll.u32 [#allocation7], 4
      %s54 = int_to_ptr.vmem [resolvable:$true] %s53
      %56 = dma.hbm_to_vmem [thread:$0]  %s2, 16, %s54, [#allocation6]
    $region13: #{tpu_custom_call.1} parent=1 // pred_fallthru
      _
    // Predicated region
    $region14: #{tpu_custom_call.1} parent=1 // pred_check
      _
    $region15: #{tpu_custom_call.1} parent=1 // pred_check_branch
      %58 = sbr.rel (0) target = $region17
    $region16: #{tpu_custom_call.1} parent=1 // pred_region
      %s60 = ssub.s32 256, 256
      %61 = vsyncadd [#allocation9], %s60
      %s62 = sshll.u32 [#allocation8], 4
      %s63 = int_to_ptr.vmem [resolvable:$true] %s62
      %68 = dma.hbm_to_vmem [thread:$0]  %s3, 256, %s63, [#allocation9], 64, 64, 4
    $region17: #{tpu_custom_call.1} parent=1 // pred_fallthru
      _
    // Predicated region
    $region18: #{tpu_custom_call.1} parent=1 // pred_check
      _
    $region19: #{tpu_custom_call.1} parent=1 // pred_check_branch
      %70 = sbr.rel (0) target = $region21
    $region20: #{tpu_custom_call.1} parent=1 // pred_region
      %s72 = ssub.s32 16, 16
      %73 = vsyncadd [#allocation9], %s72
      %s75 = sshll.u32 [#allocation10], 4
      %s76 = int_to_ptr.vmem [resolvable:$true] %s75
      %78 = dma.hbm_to_vmem [thread:$0]  %s4, 16, %s76, [#allocation9]
    $region21: #{tpu_custom_call.1} parent=1 // pred_fallthru
      _
    // Predicated region
    $region22: #{tpu_custom_call.1} parent=1 // pred_check
      _
    $region23: #{tpu_custom_call.1} parent=1 // pred_check_branch
      %80 = sbr.rel (0) target = $region25
    $region24: #{tpu_custom_call.1} parent=1 // pred_region
      %s82 = ssub.s32 256, 256
      %83 = vsyncadd [#allocation12], %s82
      %s84 = sshll.u32 [#allocation11], 4
      %s85 = int_to_ptr.vmem [resolvable:$true] %s84
      %90 = dma.hbm_to_vmem [thread:$0]  %s5, 256, %s85, [#allocation12], 64, 64, 4
    $region25: #{tpu_custom_call.1} parent=1 // pred_fallthru
      _
    // Predicated region
    $region26: #{tpu_custom_call.1} parent=1 // pred_check
      _
    $region27: #{tpu_custom_call.1} parent=1 // pred_check_branch
      %92 = sbr.rel (0) target = $region29
    $region28: #{tpu_custom_call.1} parent=1 // pred_region
      %s94 = ssub.s32 16, 16
      %95 = vsyncadd [#allocation12], %s94
      %s97 = sshll.u32 [#allocation13], 4
      %s98 = int_to_ptr.vmem [resolvable:$true] %s97
      %100 = dma.hbm_to_vmem [thread:$0]  %s6, 16, %s98, [#allocation12]
    $region29: #{tpu_custom_call.1} parent=1 // pred_fallthru
      _
    // Predicated region
    $region30: #{tpu_custom_call.1} parent=1 // pred_check
      _
    $region31: #{tpu_custom_call.1} parent=1 // pred_check_branch
      %102 = sbr.rel (0) target = $region33
    $region32: #{tpu_custom_call.1} parent=1 // pred_region
      %s104 = ssub.s32 16, 16
      %105 = vsyncadd [#allocation15], %s104
      %s107 = sshll.u32 [#allocation14], 4
      %s108 = int_to_ptr.vmem [resolvable:$true] %s107
      %110 = dma.hbm_to_vmem [thread:$0]  %s7, 16, %s108, [#allocation15]
    $region33: #{tpu_custom_call.1} parent=1 // pred_fallthru
      _
    // Predicated region
    $region34: #{tpu_custom_call.1} parent=1 // pred_check
      _
    $region35: #{tpu_custom_call.1} parent=1 // pred_check_branch
      %112 = sbr.rel (0) target = $region37
    $region36: #{tpu_custom_call.1} parent=1 // pred_region
      %s114 = ssub.s32 16, 16
      %115 = vsyncadd [#allocation15], %s114
      %s117 = sshll.u32 [#allocation16], 4
      %s118 = int_to_ptr.vmem [resolvable:$true] %s117
      %120 = dma.hbm_to_vmem [thread:$0]  %s8, 16, %s118, [#allocation15]
    $region37: #{tpu_custom_call.1} parent=1 // pred_fallthru
      _
    // Predicated region
    $region38: #{tpu_custom_call.1} parent=1 // pred_check
      _
    $region39: #{tpu_custom_call.1} parent=1 // pred_check_branch
      %122 = sbr.rel (0) target = $region41
    $region40: #{tpu_custom_call.1} parent=1 // pred_region
      _
    $region41: #{tpu_custom_call.1} parent=1 // pred_fallthru
      _
    // Predicated region
    $region42: #{tpu_custom_call.1} parent=1 // pred_check
      _
    $region43: #{tpu_custom_call.1} parent=1 // pred_check_branch
      %124 = sbr.rel (0) target = $region45
    $region44: #{tpu_custom_call.1} parent=1 // pred_region
      _
    $region45: #{tpu_custom_call.1} parent=1 // pred_fallthru
      _
    // Predicated region
    $region46: #{tpu_custom_call.1} parent=1 // pred_check
      _
    $region47: #{tpu_custom_call.1} parent=1 // pred_check_branch
      %126 = sbr.rel (0) target = $region49
    $region48: #{tpu_custom_call.1} parent=1 // pred_region
      %s128 = ssub.s32 256, 256
      %129 = vsyncadd [#allocation18], %s128
      %s130 = sshll.u32 [#allocation17], 4
      %s131 = int_to_ptr.vmem [resolvable:$true] %s130
      %136 = dma.hbm_to_vmem [thread:$0]  %s11, 256, %s131, [#allocation18], 64, 64, 4
    $region49: #{tpu_custom_call.1} parent=1 // pred_fallthru
      _
    // Predicated region
    $region50: #{tpu_custom_call.1} parent=1 // pred_check
      _
    $region51: #{tpu_custom_call.1} parent=1 // pred_check_branch
      %138 = sbr.rel (0) target = $region53
    $region52: #{tpu_custom_call.1} parent=1 // pred_region
      _
    $region53: #{tpu_custom_call.1} parent=1 // pred_fallthru
      _
    // Predicated region
    $region54: #{tpu_custom_call.1} parent=1 // pred_check
      _
    $region55: #{tpu_custom_call.1} parent=1 // pred_check_branch
      %140 = sbr.rel (0) target = $region57
    $region56: #{tpu_custom_call.1} parent=1 // pred_region
      %141 = dma.done [#allocation3], 1024
    $region57: #{tpu_custom_call.1} parent=1 // pred_fallthru
      _
    // Predicated region
    $region58: #{tpu_custom_call.1} parent=1 // pred_check
      _
    $region59: #{tpu_custom_call.1} parent=1 // pred_check_branch
      %143 = sbr.rel (0) target = $region61
    $region60: #{tpu_custom_call.1} parent=1 // pred_region
      %144 = dma.done [#allocation6], 16
    $region61: #{tpu_custom_call.1} parent=1 // pred_fallthru
      _
    // Predicated region
    $region62: #{tpu_custom_call.1} parent=1 // pred_check
      _
    $region63: #{tpu_custom_call.1} parent=1 // pred_check_branch
      %146 = sbr.rel (0) target = $region65
    $region64: #{tpu_custom_call.1} parent=1 // pred_region
      %147 = dma.done [#allocation6], 16
    $region65: #{tpu_custom_call.1} parent=1 // pred_fallthru
      _
    // Predicated region
    $region66: #{tpu_custom_call.1} parent=1 // pred_check
      _
    $region67: #{tpu_custom_call.1} parent=1 // pred_check_branch
      %149 = sbr.rel (0) target = $region69
    $region68: #{tpu_custom_call.1} parent=1 // pred_region
      %150 = dma.done [#allocation9], 256
    $region69: #{tpu_custom_call.1} parent=1 // pred_fallthru
      _
    // Predicated region
    $region70: #{tpu_custom_call.1} parent=1 // pred_check
      _
    $region71: #{tpu_custom_call.1} parent=1 // pred_check_branch
      %152 = sbr.rel (0) target = $region73
    $region72: #{tpu_custom_call.1} parent=1 // pred_region
      %153 = dma.done [#allocation9], 16
    $region73: #{tpu_custom_call.1} parent=1 // pred_fallthru
      _
    // Predicated region
    $region74: #{tpu_custom_call.1} parent=1 // pred_check
      _
    $region75: #{tpu_custom_call.1} parent=1 // pred_check_branch
      %155 = sbr.rel (0) target = $region77
    $region76: #{tpu_custom_call.1} parent=1 // pred_region
      %156 = dma.done [#allocation12], 256
    $region77: #{tpu_custom_call.1} parent=1 // pred_fallthru
      _
    // Predicated region
    $region78: #{tpu_custom_call.1} parent=1 // pred_check
      _
    $region79: #{tpu_custom_call.1} parent=1 // pred_check_branch
      %158 = sbr.rel (0) target = $region81
    $region80: #{tpu_custom_call.1} parent=1 // pred_region
      %159 = dma.done [#allocation12], 16
    $region81: #{tpu_custom_call.1} parent=1 // pred_fallthru
      _
    // Predicated region
    $region82: #{tpu_custom_call.1} parent=1 // pred_check
      _
    $region83: #{tpu_custom_call.1} parent=1 // pred_check_branch
      %161 = sbr.rel (0) target = $region85
    $region84: #{tpu_custom_call.1} parent=1 // pred_region
      %162 = dma.done [#allocation15], 16
    $region85: #{tpu_custom_call.1} parent=1 // pred_fallthru
      _
    // Predicated region
    $region86: #{tpu_custom_call.1} parent=1 // pred_check
      _
    $region87: #{tpu_custom_call.1} parent=1 // pred_check_branch
      %164 = sbr.rel (0) target = $region89
    $region88: #{tpu_custom_call.1} parent=1 // pred_region
      %165 = dma.done [#allocation15], 16
    $region89: #{tpu_custom_call.1} parent=1 // pred_fallthru
      _
    // Predicated region
    $region90: #{tpu_custom_call.1} parent=1 // pred_check
      _
    $region91: #{tpu_custom_call.1} parent=1 // pred_check_branch
      %167 = sbr.rel (0) target = $region93
    $region92: #{tpu_custom_call.1} parent=1 // pred_region
      %168 = dma.done [#allocation18], 256
    $region93: #{tpu_custom_call.1} parent=1 // pred_fallthru
      _
    %v170 = vld [vmem:[#allocation2] sm:$0xff]
    %v171 = vld [vmem:[#allocation2 + $0x8] sm:$0xff]
    %v172 = vld [vmem:[#allocation2 + $0x10] sm:$0xff]
    %v173 = vld [vmem:[#allocation2 + $0x18] sm:$0xff]
    %v174 = vld [vmem:[#allocation2 + $0x20] sm:$0xff]
    %v175 = vld [vmem:[#allocation2 + $0x28] sm:$0xff]
    %v176 = vld [vmem:[#allocation2 + $0x30] sm:$0xff]
    %v177 = vld [vmem:[#allocation2 + $0x38] sm:$0xff]
    %178 = vxpose.xlu0.b32.start [1/16] %v170, 128
    %179 = vxpose.xlu0.b32.cont [2/16] %v171, 128
    %180 = vxpose.xlu0.b32.cont [3/16] %v172, 128
    %181 = vxpose.xlu0.b32.cont [4/16] %v173, 128
    %182 = vxpose.xlu0.b32.cont [5/16] 0.0, 128
    %183 = vxpose.xlu0.b32.cont [6/16] 0.0, 128
    %184 = vxpose.xlu0.b32.cont [7/16] 0.0, 128
    %185 = vxpose.xlu0.b32.cont [8/16] 0.0, 128
    %186 = vxpose.xlu0.b32.cont [9/16] 0.0, 128
    %187 = vxpose.xlu0.b32.cont [10/16] 0.0, 128
    %188 = vxpose.xlu0.b32.cont [11/16] 0.0, 128
    %189 = vxpose.xlu0.b32.cont [12/16] 0.0, 128
    %190 = vxpose.xlu0.b32.cont [13/16] 0.0, 128
    %191 = vxpose.xlu0.b32.cont [14/16] 0.0, 128
    %192 = vxpose.xlu0.b32.cont [15/16] 0.0, 128
    %193 = vxpose.xlu0.b32.end [16/16] 0.0, 128
    %v194 = vpop.trf.xlu0
    %v195 = vpop.trf.xlu0
    %v196 = vpop.trf.xlu0
    %v197 = vpop.trf.xlu0
    %v198 = vpop.trf.xlu0
    %v199 = vpop.trf.xlu0
    %v200 = vpop.trf.xlu0
    %v201 = vpop.trf.xlu0
    %v202 = vpop.trf.xlu0
    %v203 = vpop.trf.xlu0
    %v204 = vpop.trf.xlu0
    %v205 = vpop.trf.xlu0
    %v206 = vpop.trf.xlu0
    %v207 = vpop.trf.xlu0
    %v208 = vpop.trf.xlu0
    %v209 = vpop.trf.xlu0
    %210 = vxpose.xlu0.b32.start [1/16] %v174, 128
    %211 = vxpose.xlu0.b32.cont [2/16] %v175, 128
    %212 = vxpose.xlu0.b32.cont [3/16] %v176, 128
    %213 = vxpose.xlu0.b32.cont [4/16] %v177, 128
    %214 = vxpose.xlu0.b32.cont [5/16] 0.0, 128
    %215 = vxpose.xlu0.b32.cont [6/16] 0.0, 128
    %216 = vxpose.xlu0.b32.cont [7/16] 0.0, 128
    %217 = vxpose.xlu0.b32.cont [8/16] 0.0, 128
    %218 = vxpose.xlu0.b32.cont [9/16] 0.0, 128
    %219 = vxpose.xlu0.b32.cont [10/16] 0.0, 128
    %220 = vxpose.xlu0.b32.cont [11/16] 0.0, 128
    %221 = vxpose.xlu0.b32.cont [12/16] 0.0, 128
    %222 = vxpose.xlu0.b32.cont [13/16] 0.0, 128
    %223 = vxpose.xlu0.b32.cont [14/16] 0.0, 128
    %224 = vxpose.xlu0.b32.cont [15/16] 0.0, 128
    %225 = vxpose.xlu0.b32.end [16/16] 0.0, 128
    %v226 = vpop.trf.xlu0
    %v227 = vpop.trf.xlu0
    %v228 = vpop.trf.xlu0
    %v229 = vpop.trf.xlu0
    %v230 = vpop.trf.xlu0
    %v231 = vpop.trf.xlu0
    %v232 = vpop.trf.xlu0
    %v233 = vpop.trf.xlu0
    %v234 = vpop.trf.xlu0
    %v235 = vpop.trf.xlu0
    %v236 = vpop.trf.xlu0
    %v237 = vpop.trf.xlu0
    %v238 = vpop.trf.xlu0
    %v239 = vpop.trf.xlu0
    %v240 = vpop.trf.xlu0
    %v241 = vpop.trf.xlu0
    %v242 = vld [vmem:[#allocation5] sm:$0x1]
    %v243 = vld [vmem:[#allocation7] sm:$0x1]
    %vm244 = vcmask 261120
    %v245 = vsel %vm244, %v194, 0.0
    %246 = vadd.xlane.f32.xlu0 %v245
    %v247 = vpop.xlane.xlu0 %246
    %v248 = vsel %vm244, %v195, 0.0
    %249 = vadd.xlane.f32.xlu0 %v248
    %v250 = vpop.xlane.xlu0 %249
    %v251 = vsel %vm244, %v196, 0.0
    %252 = vadd.xlane.f32.xlu0 %v251
    %v253 = vpop.xlane.xlu0 %252
    %v254 = vsel %vm244, %v197, 0.0
    %255 = vadd.xlane.f32.xlu0 %v254
    %v256 = vpop.xlane.xlu0 %255
    %v257 = vsel %vm244, %v198, 0.0
    %258 = vadd.xlane.f32.xlu0 %v257
    %v259 = vpop.xlane.xlu0 %258
    %v260 = vsel %vm244, %v199, 0.0
    %261 = vadd.xlane.f32.xlu0 %v260
    %v262 = vpop.xlane.xlu0 %261
    %v263 = vsel %vm244, %v200, 0.0
    %264 = vadd.xlane.f32.xlu0 %v263
    %v265 = vpop.xlane.xlu0 %264
    %v266 = vsel %vm244, %v201, 0.0
    %267 = vadd.xlane.f32.xlu0 %v266
    %v268 = vpop.xlane.xlu0 %267
    %v269 = vsel %vm244, %v226, 0.0
    %270 = vadd.xlane.f32.xlu0 %v269
    %v271 = vpop.xlane.xlu0 %270
    %v272 = vsel %vm244, %v227, 0.0
    %273 = vadd.xlane.f32.xlu0 %v272
    %v274 = vpop.xlane.xlu0 %273
    %v275 = vsel %vm244, %v228, 0.0
    %276 = vadd.xlane.f32.xlu0 %v275
    %v277 = vpop.xlane.xlu0 %276
    %v278 = vsel %vm244, %v229, 0.0
    %279 = vadd.xlane.f32.xlu0 %v278
    %v280 = vpop.xlane.xlu0 %279
    %v281 = vsel %vm244, %v230, 0.0
    %282 = vadd.xlane.f32.xlu0 %v281
    %v283 = vpop.xlane.xlu0 %282
    %v284 = vsel %vm244, %v231, 0.0
    %285 = vadd.xlane.f32.xlu0 %v284
    %v286 = vpop.xlane.xlu0 %285
    %v287 = vsel %vm244, %v232, 0.0
    %288 = vadd.xlane.f32.xlu0 %v287
    %v289 = vpop.xlane.xlu0 %288
    %v290 = vsel %vm244, %v233, 0.0
    %291 = vadd.xlane.f32.xlu0 %v290
    %v292 = vpop.xlane.xlu0 %291
    %v293 = vrcp.pop 32.0
    %v294 = vmul.f32 %v247, %v293
    %v295 = vmul.f32 %v250, %v293
    %v296 = vmul.f32 %v253, %v293
    %v297 = vmul.f32 %v256, %v293
    %v298 = vmul.f32 %v259, %v293
    %v299 = vmul.f32 %v262, %v293
    %v300 = vmul.f32 %v265, %v293
    %v301 = vmul.f32 %v268, %v293
    %v302 = vmul.f32 %v271, %v293
    %v303 = vmul.f32 %v274, %v293
    %v304 = vmul.f32 %v277, %v293
    %v305 = vmul.f32 %v280, %v293
    %v306 = vmul.f32 %v283, %v293
    %v307 = vmul.f32 %v286, %v293
    %v308 = vmul.f32 %v289, %v293
    %v309 = vmul.f32 %v292, %v293
    %v310 = vsub.f32 %v194, %v294
    %v311 = vsub.f32 %v195, %v295
    %v312 = vsub.f32 %v196, %v296
    %v313 = vsub.f32 %v197, %v297
    %v314 = vsub.f32 %v198, %v298
    %v315 = vsub.f32 %v199, %v299
    %v316 = vsub.f32 %v200, %v300
    %v317 = vsub.f32 %v201, %v301
    %v318 = vsub.f32 %v226, %v302
    %v319 = vsub.f32 %v227, %v303
    %v320 = vsub.f32 %v228, %v304
    %v321 = vsub.f32 %v229, %v305
    %v322 = vsub.f32 %v230, %v306
    %v323 = vsub.f32 %v231, %v307
    %v324 = vsub.f32 %v232, %v308
    %v325 = vsub.f32 %v233, %v309
    %v326 = vmul.f32 %v310, %v310
    %v327 = vmul.f32 %v311, %v311
    %v328 = vmul.f32 %v312, %v312
    %v329 = vmul.f32 %v313, %v313
    %v330 = vmul.f32 %v314, %v314
    %v331 = vmul.f32 %v315, %v315
    %v332 = vmul.f32 %v316, %v316
    %v333 = vmul.f32 %v317, %v317
    %v334 = vmul.f32 %v318, %v318
    %v335 = vmul.f32 %v319, %v319
    %v336 = vmul.f32 %v320, %v320
    %v337 = vmul.f32 %v321, %v321
    %v338 = vmul.f32 %v322, %v322
    %v339 = vmul.f32 %v323, %v323
    %v340 = vmul.f32 %v324, %v324
    %v341 = vmul.f32 %v325, %v325
    %v342 = vsel %vm244, %v326, 0.0
    %343 = vadd.xlane.f32.xlu0 %v342
    %v344 = vpop.xlane.xlu0 %343
    %v345 = vsel %vm244, %v327, 0.0
    %346 = vadd.xlane.f32.xlu0 %v345
    %v347 = vpop.xlane.xlu0 %346
    %v348 = vsel %vm244, %v328, 0.0
    %349 = vadd.xlane.f32.xlu0 %v348
    %v350 = vpop.xlane.xlu0 %349
    %v351 = vsel %vm244, %v329, 0.0
    %352 = vadd.xlane.f32.xlu0 %v351
    %v353 = vpop.xlane.xlu0 %352
    %v354 = vsel %vm244, %v330, 0.0
    %355 = vadd.xlane.f32.xlu0 %v354
    %v356 = vpop.xlane.xlu0 %355
    %v357 = vsel %vm244, %v331, 0.0
    %358 = vadd.xlane.f32.xlu0 %v357
    %v359 = vpop.xlane.xlu0 %358
    %v360 = vsel %vm244, %v332, 0.0
    %361 = vadd.xlane.f32.xlu0 %v360
    %v362 = vpop.xlane.xlu0 %361
    %v363 = vsel %vm244, %v333, 0.0
    %364 = vadd.xlane.f32.xlu0 %v363
    %v365 = vpop.xlane.xlu0 %364
    %v366 = vsel %vm244, %v334, 0.0
    %367 = vadd.xlane.f32.xlu0 %v366
    %v368 = vpop.xlane.xlu0 %367
    %v369 = vsel %vm244, %v335, 0.0
    %370 = vadd.xlane.f32.xlu0 %v369
    %v371 = vpop.xlane.xlu0 %370
    %v372 = vsel %vm244, %v336, 0.0
    %373 = vadd.xlane.f32.xlu0 %v372
    %v374 = vpop.xlane.xlu0 %373
    %v375 = vsel %vm244, %v337, 0.0
    %376 = vadd.xlane.f32.xlu0 %v375
    %v377 = vpop.xlane.xlu0 %376
    %v378 = vsel %vm244, %v338, 0.0
    %379 = vadd.xlane.f32.xlu0 %v378
    %v380 = vpop.xlane.xlu0 %379
    %v381 = vsel %vm244, %v339, 0.0
    %382 = vadd.xlane.f32.xlu0 %v381
    %v383 = vpop.xlane.xlu0 %382
    %v384 = vsel %vm244, %v340, 0.0
    %385 = vadd.xlane.f32.xlu0 %v384
    %v386 = vpop.xlane.xlu0 %385
    %v387 = vsel %vm244, %v341, 0.0
    %388 = vadd.xlane.f32.xlu0 %v387
    %v389 = vpop.xlane.xlu0 %388
    %v390 = vmul.f32 %v344, %v293
    %v391 = vmul.f32 %v347, %v293
    %v392 = vmul.f32 %v350, %v293
    %v393 = vmul.f32 %v353, %v293
    %v394 = vmul.f32 %v356, %v293
    %v395 = vmul.f32 %v359, %v293
    %v396 = vmul.f32 %v362, %v293
    %v397 = vmul.f32 %v365, %v293
    %v398 = vmul.f32 %v368, %v293
    %v399 = vmul.f32 %v371, %v293
    %v400 = vmul.f32 %v374, %v293
    %v401 = vmul.f32 %v377, %v293
    %v402 = vmul.f32 %v380, %v293
    %v403 = vmul.f32 %v383, %v293
    %v404 = vmul.f32 %v386, %v293
    %v405 = vmul.f32 %v389, %v293
    %v406 = vadd.f32 %v390, 1e-05
    %v407 = vadd.f32 %v391, 1e-05
    %v408 = vadd.f32 %v392, 1e-05
    %v409 = vadd.f32 %v393, 1e-05
    %v410 = vadd.f32 %v394, 1e-05
    %v411 = vadd.f32 %v395, 1e-05
    %v412 = vadd.f32 %v396, 1e-05
    %v413 = vadd.f32 %v397, 1e-05
    %v414 = vadd.f32 %v398, 1e-05
    %v415 = vadd.f32 %v399, 1e-05
    %v416 = vadd.f32 %v400, 1e-05
    %v417 = vadd.f32 %v401, 1e-05
    %v418 = vadd.f32 %v402, 1e-05
    %v419 = vadd.f32 %v403, 1e-05
    %v420 = vadd.f32 %v404, 1e-05
    %v421 = vadd.f32 %v405, 1e-05
    %v422 = vrsqrt.pop %v406
    %v423 = vrsqrt.pop %v407
    %v424 = vrsqrt.pop %v408
    %v425 = vrsqrt.pop %v409
    %v426 = vrsqrt.pop %v410
    %v427 = vrsqrt.pop %v411
    %v428 = vrsqrt.pop %v412
    %v429 = vrsqrt.pop %v413
    %v430 = vrsqrt.pop %v414
    %v431 = vrsqrt.pop %v415
    %v432 = vrsqrt.pop %v416
    %v433 = vrsqrt.pop %v417
    %v434 = vrsqrt.pop %v418
    %v435 = vrsqrt.pop %v419
    %v436 = vrsqrt.pop %v420
    %v437 = vrsqrt.pop %v421
    %v438 = vmul.f32 %v310, %v422
    %v439 = vmul.f32 %v311, %v423
    %v440 = vmul.f32 %v312, %v424
    %v441 = vmul.f32 %v313, %v425
    %v442 = vmul.f32 %v314, %v426
    %v443 = vmul.f32 %v315, %v427
    %v444 = vmul.f32 %v316, %v428
    %v445 = vmul.f32 %v317, %v429
    %v446 = vmul.f32 %v318, %v430
    %v447 = vmul.f32 %v319, %v431
    %v448 = vmul.f32 %v320, %v432
    %v449 = vmul.f32 %v321, %v433
    %v450 = vmul.f32 %v322, %v434
    %v451 = vmul.f32 %v323, %v435
    %v452 = vmul.f32 %v324, %v436
    %v453 = vmul.f32 %v325, %v437
    %v455 = vlaneseq
    %v456 = vshrl.u32 %v455, 7
    %v457 = vsub.s32 0, %v456
    %v458 = vrot.slane %v242, %v457
    %v460 = vmul.f32 %v438, %v458
    %v461 = vmul.f32 %v439, %v458
    %v462 = vmul.f32 %v440, %v458
    %v463 = vmul.f32 %v441, %v458
    %v464 = vmul.f32 %v442, %v458
    %v465 = vmul.f32 %v443, %v458
    %v466 = vmul.f32 %v444, %v458
    %v467 = vmul.f32 %v445, %v458
    %v468 = vmul.f32 %v446, %v458
    %v469 = vmul.f32 %v447, %v458
    %v470 = vmul.f32 %v448, %v458
    %v471 = vmul.f32 %v449, %v458
    %v472 = vmul.f32 %v450, %v458
    %v473 = vmul.f32 %v451, %v458
    %v474 = vmul.f32 %v452, %v458
    %v475 = vmul.f32 %v453, %v458
    %v477 = vlaneseq
    %v478 = vshrl.u32 %v477, 7
    %v479 = vsub.s32 0, %v478
    %v480 = vrot.slane %v243, %v479
    %v482 = vadd.f32 %v460, %v480
    %v483 = vadd.f32 %v461, %v480
    %v484 = vadd.f32 %v462, %v480
    %v485 = vadd.f32 %v463, %v480
    %v486 = vadd.f32 %v464, %v480
    %v487 = vadd.f32 %v465, %v480
    %v488 = vadd.f32 %v466, %v480
    %v489 = vadd.f32 %v467, %v480
    %v490 = vadd.f32 %v468, %v480
    %v491 = vadd.f32 %v469, %v480
    %v492 = vadd.f32 %v470, %v480
    %v493 = vadd.f32 %v471, %v480
    %v494 = vadd.f32 %v472, %v480
    %v495 = vadd.f32 %v473, %v480
    %v496 = vadd.f32 %v474, %v480
    %v497 = vadd.f32 %v475, %v480
    %v498 = vpack.c.bf16 %v483, %v482
    %v499 = vpack.c.bf16 %v485, %v484
    %v500 = vpack.c.bf16 %v487, %v486
    %v501 = vpack.c.bf16 %v489, %v488
    %v502 = vpack.c.bf16 %v491, %v490
    %v503 = vpack.c.bf16 %v493, %v492
    %v504 = vpack.c.bf16 %v495, %v494
    %v505 = vpack.c.bf16 %v497, %v496
    %v506 = vld [vmem:[#allocation8] sm:$0xf]
    %v507 = vld [vmem:[#allocation8 + $0x4] sm:$0xf]
    %v508 = vld [vmem:[#allocation8 + $0x8] sm:$0xf]
    %v509 = vld [vmem:[#allocation8 + $0xc] sm:$0xf]
    %v510 = vld [vmem:[#allocation10] sm:$0x1]
    %v512 = vlaneseq
    %v513 = vshrl.u32 %v512, 7
    %v514 = vsub.s32 0, %v513
    %v515 = vrot.slane %v510, %v514
    %v521 = vunpack.c.l.b16 %v506
    %v522 = vunpack.c.l.b16 %v507
    %v523 = vunpack.c.l.b16 %v508
    %v524 = vunpack.c.l.b16 %v509
    %v525 = vpack.c.b16 %v522, %v521
    %v526 = vpack.c.b16 %v524, %v523
    %v530 = vsel %vm244, %v498, 0
    %v533 = vsel %vm244, %v499, 0
    %v536 = vsel %vm244, %v500, 0
    %v539 = vsel %vm244, %v501, 0
    %v542 = vsel %vm244, %v502, 0
    %v545 = vsel %vm244, %v503, 0
    %v548 = vsel %vm244, %v504, 0
    %v551 = vsel %vm244, %v505, 0
    %553 = vmatprep.subr.bf16.mxu0 0
    %554 = vmatpush1.bf16.msra.mxu0 0
    %555 = vmatprep.subr.bf16.mxu0 0
    %556 = vmatpush1.bf16.msra.mxu0 0
    %557 = vmatprep.subr.bf16.mxu0 0
    %558 = vmatpush1.bf16.msra.mxu0 0
    %559 = vmatprep.subr.bf16.mxu0 0
    %560 = vmatpush1.bf16.msra.mxu0 0
    %561 = vmatprep.subr.bf16.mxu0 0
    %562 = vmatpush1.bf16.msra.mxu0 0
    %563 = vmatprep.subr.bf16.mxu0 0
    %564 = vmatpush1.bf16.msra.mxu0 0
    %565 = vmatprep.subr.bf16.mxu0 0
    %566 = vmatpush1.bf16.msra.mxu0 %v526
    %567 = vmatprep.subr.bf16.mxu0 0
    %568 = vmatpush1.bf16.msra.mxu0 %v525
    %569 = vmatprep.subr.bf16.mxu0 0
    %570 = vmatpush2.bf16.msra.mxu0 0
    %571 = vmatprep.subr.bf16.mxu0 0
    %572 = vmatpush2.bf16.msra.mxu0 0
    %573 = vmatprep.subr.bf16.mxu0 0
    %574 = vmatpush2.bf16.msra.mxu0 0
    %575 = vmatprep.subr.bf16.mxu0 0
    %576 = vmatpush2.bf16.msra.mxu0 0
    %577 = vmatprep.subr.bf16.mxu0 0
    %578 = vmatpush2.bf16.msra.mxu0 0
    %579 = vmatprep.subr.bf16.mxu0 0
    %580 = vmatpush2.bf16.msra.mxu0 0
    %581 = vmatprep.subr.bf16.mxu0 0
    %582 = vmatpush2.bf16.msra.mxu0 0
    %583 = vmatprep.subr.bf16.mxu0 0
    %584 = vmatpush2.bf16.msra.mxu0 0
    %585 = vmatprep.mubr.bf16.mxu0 0
    %586 = vmatmul.mubr.bf16.gmra.mxu0 %v530
    %v587 = vpop.f32.mrf.mxu0
    %v588 = vadd.f32 %v515, %v587
    %v589 = vpop.f32.mrf.mxu0
    %v590 = vpop.f32.mrf.mxu0
    %v591 = vadd.f32 %v515, %v590
    %v592 = vpop.f32.mrf.mxu0
    %593 = vmatprep.mubr.bf16.mxu0 0
    %594 = vmatmul.mubr.bf16.gmra.mxu0 %v533
    %v595 = vpop.f32.mrf.mxu0
    %v596 = vadd.f32 %v515, %v595
    %v597 = vpop.f32.mrf.mxu0
    %v598 = vpop.f32.mrf.mxu0
    %v599 = vadd.f32 %v515, %v598
    %v600 = vpop.f32.mrf.mxu0
    %601 = vmatprep.mubr.bf16.mxu0 0
    %602 = vmatmul.mubr.bf16.gmra.mxu0 %v536
    %v603 = vpop.f32.mrf.mxu0
    %v604 = vadd.f32 %v515, %v603
    %v605 = vpop.f32.mrf.mxu0
    %v606 = vpop.f32.mrf.mxu0
    %v607 = vadd.f32 %v515, %v606
    %v608 = vpop.f32.mrf.mxu0
    %609 = vmatprep.mubr.bf16.mxu0 0
    %610 = vmatmul.mubr.bf16.gmra.mxu0 %v539
    %v611 = vpop.f32.mrf.mxu0
    %v612 = vadd.f32 %v515, %v611
    %v613 = vpop.f32.mrf.mxu0
    %v614 = vpop.f32.mrf.mxu0
    %v615 = vadd.f32 %v515, %v614
    %v616 = vpop.f32.mrf.mxu0
    %617 = vmatprep.mubr.bf16.mxu0 0
    %618 = vmatmul.mubr.bf16.gmra.mxu0 %v542
    %v619 = vpop.f32.mrf.mxu0
    %v620 = vadd.f32 %v515, %v619
    %v621 = vpop.f32.mrf.mxu0
    %v622 = vpop.f32.mrf.mxu0
    %v623 = vadd.f32 %v515, %v622
    %v624 = vpop.f32.mrf.mxu0
    %625 = vmatprep.mubr.bf16.mxu0 0
    %626 = vmatmul.mubr.bf16.gmra.mxu0 %v545
    %v627 = vpop.f32.mrf.mxu0
    %v628 = vadd.f32 %v515, %v627
    %v629 = vpop.f32.mrf.mxu0
    %v630 = vpop.f32.mrf.mxu0
    %v631 = vadd.f32 %v515, %v630
    %v632 = vpop.f32.mrf.mxu0
    %633 = vmatprep.mubr.bf16.mxu0 0
    %634 = vmatmul.mubr.bf16.gmra.mxu0 %v548
    %v635 = vpop.f32.mrf.mxu0
    %v636 = vadd.f32 %v515, %v635
    %v637 = vpop.f32.mrf.mxu0
    %v638 = vpop.f32.mrf.mxu0
    %v639 = vadd.f32 %v515, %v638
    %v640 = vpop.f32.mrf.mxu0
    %641 = vmatprep.mubr.bf16.mxu0 0
    %642 = vmatmul.mubr.bf16.gmra.mxu0 %v551
    %v643 = vpop.f32.mrf.mxu0
    %v644 = vadd.f32 %v515, %v643
    %v645 = vpop.f32.mrf.mxu0
    %v646 = vpop.f32.mrf.mxu0
    %v647 = vadd.f32 %v515, %v646
    %v648 = vpop.f32.mrf.mxu0
    %649 = vdwg.mxu0
    %666 = vrot.lane.b32.xlu0 %v588, 120
    %v667 = vpop.permute.xlu0 %666
    %668 = vrot.lane.b32.xlu0 %v591, 120
    %v669 = vpop.permute.xlu0 %668
    %670 = vrot.lane.b32.xlu0 %v596, 120
    %v671 = vpop.permute.xlu0 %670
    %672 = vrot.lane.b32.xlu0 %v599, 120
    %v673 = vpop.permute.xlu0 %672
    %674 = vrot.lane.b32.xlu0 %v604, 120
    %v675 = vpop.permute.xlu0 %674
    %676 = vrot.lane.b32.xlu0 %v607, 120
    %v677 = vpop.permute.xlu0 %676
    %678 = vrot.lane.b32.xlu0 %v612, 120
    %v679 = vpop.permute.xlu0 %678
    %680 = vrot.lane.b32.xlu0 %v615, 120
    %v681 = vpop.permute.xlu0 %680
    %682 = vrot.lane.b32.xlu0 %v620, 120
    %v683 = vpop.permute.xlu0 %682
    %684 = vrot.lane.b32.xlu0 %v623, 120
    %v685 = vpop.permute.xlu0 %684
    %686 = vrot.lane.b32.xlu0 %v628, 120
    %v687 = vpop.permute.xlu0 %686
    %688 = vrot.lane.b32.xlu0 %v631, 120
    %v689 = vpop.permute.xlu0 %688
    %690 = vrot.lane.b32.xlu0 %v636, 120
    %v691 = vpop.permute.xlu0 %690
    %692 = vrot.lane.b32.xlu0 %v639, 120
    %v693 = vpop.permute.xlu0 %692
    %694 = vrot.lane.b32.xlu0 %v644, 120
    %v695 = vpop.permute.xlu0 %694
    %696 = vrot.lane.b32.xlu0 %v647, 120
    %v697 = vpop.permute.xlu0 %696
    %714 = vrot.lane.b32.xlu0 %v588, 112
    %v715 = vpop.permute.xlu0 %714
    %716 = vrot.lane.b32.xlu0 %v591, 112
    %v717 = vpop.permute.xlu0 %716
    %718 = vrot.lane.b32.xlu0 %v596, 112
    %v719 = vpop.permute.xlu0 %718
    %720 = vrot.lane.b32.xlu0 %v599, 112
    %v721 = vpop.permute.xlu0 %720
    %722 = vrot.lane.b32.xlu0 %v604, 112
    %v723 = vpop.permute.xlu0 %722
    %724 = vrot.lane.b32.xlu0 %v607, 112
    %v725 = vpop.permute.xlu0 %724
    %726 = vrot.lane.b32.xlu0 %v612, 112
    %v727 = vpop.permute.xlu0 %726
    %728 = vrot.lane.b32.xlu0 %v615, 112
    %v729 = vpop.permute.xlu0 %728
    %730 = vrot.lane.b32.xlu0 %v620, 112
    %v731 = vpop.permute.xlu0 %730
    %732 = vrot.lane.b32.xlu0 %v623, 112
    %v733 = vpop.permute.xlu0 %732
    %734 = vrot.lane.b32.xlu0 %v628, 112
    %v735 = vpop.permute.xlu0 %734
    %736 = vrot.lane.b32.xlu0 %v631, 112
    %v737 = vpop.permute.xlu0 %736
    %738 = vrot.lane.b32.xlu0 %v636, 112
    %v739 = vpop.permute.xlu0 %738
    %740 = vrot.lane.b32.xlu0 %v639, 112
    %v741 = vpop.permute.xlu0 %740
    %742 = vrot.lane.b32.xlu0 %v644, 112
    %v743 = vpop.permute.xlu0 %742
    %744 = vrot.lane.b32.xlu0 %v647, 112
    %v745 = vpop.permute.xlu0 %744
    %762 = vrot.lane.b32.xlu0 %v588, 104
    %v763 = vpop.permute.xlu0 %762
    %764 = vrot.lane.b32.xlu0 %v591, 104
    %v765 = vpop.permute.xlu0 %764
    %766 = vrot.lane.b32.xlu0 %v596, 104
    %v767 = vpop.permute.xlu0 %766
    %768 = vrot.lane.b32.xlu0 %v599, 104
    %v769 = vpop.permute.xlu0 %768
    %770 = vrot.lane.b32.xlu0 %v604, 104
    %v771 = vpop.permute.xlu0 %770
    %772 = vrot.lane.b32.xlu0 %v607, 104
    %v773 = vpop.permute.xlu0 %772
    %774 = vrot.lane.b32.xlu0 %v612, 104
    %v775 = vpop.permute.xlu0 %774
    %776 = vrot.lane.b32.xlu0 %v615, 104
    %v777 = vpop.permute.xlu0 %776
    %778 = vrot.lane.b32.xlu0 %v620, 104
    %v779 = vpop.permute.xlu0 %778
    %780 = vrot.lane.b32.xlu0 %v623, 104
    %v781 = vpop.permute.xlu0 %780
    %782 = vrot.lane.b32.xlu0 %v628, 104
    %v783 = vpop.permute.xlu0 %782
    %784 = vrot.lane.b32.xlu0 %v631, 104
    %v785 = vpop.permute.xlu0 %784
    %786 = vrot.lane.b32.xlu0 %v636, 104
    %v787 = vpop.permute.xlu0 %786
    %788 = vrot.lane.b32.xlu0 %v639, 104
    %v789 = vpop.permute.xlu0 %788
    %790 = vrot.lane.b32.xlu0 %v644, 104
    %v791 = vpop.permute.xlu0 %790
    %792 = vrot.lane.b32.xlu0 %v647, 104
    %v793 = vpop.permute.xlu0 %792
    %v810 = vpack.c.bf16 %v591, %v588
    %v811 = vpack.c.bf16 %v599, %v596
    %v812 = vpack.c.bf16 %v607, %v604
    %v813 = vpack.c.bf16 %v615, %v612
    %v814 = vpack.c.bf16 %v623, %v620
    %v815 = vpack.c.bf16 %v631, %v628
    %v816 = vpack.c.bf16 %v639, %v636
    %v817 = vpack.c.bf16 %v647, %v644
    %v818 = vpack.c.bf16 %v669, %v667
    %v819 = vpack.c.bf16 %v673, %v671
    %v820 = vpack.c.bf16 %v677, %v675
    %v821 = vpack.c.bf16 %v681, %v679
    %v822 = vpack.c.bf16 %v685, %v683
    %v823 = vpack.c.bf16 %v689, %v687
    %v824 = vpack.c.bf16 %v693, %v691
    %v825 = vpack.c.bf16 %v697, %v695
    %v826 = vpack.c.bf16 %v717, %v715
    %v827 = vpack.c.bf16 %v721, %v719
    %v828 = vpack.c.bf16 %v725, %v723
    %v829 = vpack.c.bf16 %v729, %v727
    %v830 = vpack.c.bf16 %v733, %v731
    %v831 = vpack.c.bf16 %v737, %v735
    %v832 = vpack.c.bf16 %v741, %v739
    %v833 = vpack.c.bf16 %v745, %v743
    %v834 = vpack.c.bf16 %v765, %v763
    %v835 = vpack.c.bf16 %v769, %v767
    %v836 = vpack.c.bf16 %v773, %v771
    %v837 = vpack.c.bf16 %v777, %v775
    %v838 = vpack.c.bf16 %v781, %v779
    %v839 = vpack.c.bf16 %v785, %v783
    %v840 = vpack.c.bf16 %v789, %v787
    %v841 = vpack.c.bf16 %v793, %v791
    %846 = vrot.lane.b32.xlu0 %v810, 96
    %v847 = vpop.permute.xlu0 %846
    %848 = vrot.lane.b32.xlu0 %v811, 96
    %v849 = vpop.permute.xlu0 %848
    %850 = vrot.lane.b32.xlu0 %v812, 96
    %v851 = vpop.permute.xlu0 %850
    %852 = vrot.lane.b32.xlu0 %v813, 96
    %v853 = vpop.permute.xlu0 %852
    %vm854 = vcmask 64512
    %v856 = vsel %vm854, %v810, 0
    %v859 = vsel %vm854, %v811, 0
    %v862 = vsel %vm854, %v812, 0
    %v865 = vsel %vm854, %v813, 0
    %v868 = vsel %vm854, %v847, 0
    %v871 = vsel %vm854, %v849, 0
    %v874 = vsel %vm854, %v851, 0
    %v877 = vsel %vm854, %v853, 0
    %879 = vmatprep.subr.bf16.mxu0 0
    %880 = vmatpush1.bf16.xpose.msra.mxu0 0
    %881 = vmatprep.subr.bf16.mxu0 0
    %882 = vmatpush1.bf16.xpose.msra.mxu0 0
    %883 = vmatprep.subr.bf16.mxu0 0
    %884 = vmatpush1.bf16.xpose.msra.mxu0 0
    %885 = vmatprep.subr.bf16.mxu0 0
    %886 = vmatpush1.bf16.xpose.msra.mxu0 0
    %887 = vmatprep.subr.bf16.mxu0 0
    %888 = vmatpush1.bf16.xpose.msra.mxu0 %v877
    %889 = vmatprep.subr.bf16.mxu0 0
    %890 = vmatpush1.bf16.xpose.msra.mxu0 %v874
    %891 = vmatprep.subr.bf16.mxu0 0
    %892 = vmatpush1.bf16.xpose.msra.mxu0 %v871
    %893 = vmatprep.subr.bf16.mxu0 0
    %894 = vmatpush1.bf16.xpose.msra.mxu0 %v868
    %895 = vmatprep.subr.bf16.mxu0 0
    %896 = vmatpush2.bf16.xpose.msra.mxu0 0
    %897 = vmatprep.subr.bf16.mxu0 0
    %898 = vmatpush2.bf16.xpose.msra.mxu0 0
    %899 = vmatprep.subr.bf16.mxu0 0
    %900 = vmatpush2.bf16.xpose.msra.mxu0 0
    %901 = vmatprep.subr.bf16.mxu0 0
    %902 = vmatpush2.bf16.xpose.msra.mxu0 0
    %903 = vmatprep.subr.bf16.mxu0 0
    %904 = vmatpush2.bf16.xpose.msra.mxu0 0
    %905 = vmatprep.subr.bf16.mxu0 0
    %906 = vmatpush2.bf16.xpose.msra.mxu0 0
    %907 = vmatprep.subr.bf16.mxu0 0
    %908 = vmatpush2.bf16.xpose.msra.mxu0 0
    %909 = vmatprep.subr.bf16.mxu0 0
    %910 = vmatpush2.bf16.xpose.msra.mxu0 0
    %911 = vmatprep.mubr.bf16.mxu0 0
    %912 = vmatmul.mubr.bf16.gmra.mxu0 %v856
    %v913 = vpop.f32.mrf.mxu0
    %v914 = vadd.f32 0.0, %v913
    %v915 = vpop.f32.mrf.mxu0
    %v916 = vpop.f32.mrf.mxu0
    %v917 = vadd.f32 0.0, %v916
    %v918 = vpop.f32.mrf.mxu0
    %919 = vmatprep.mubr.bf16.mxu0 0
    %920 = vmatmul.mubr.bf16.gmra.mxu0 %v859
    %v921 = vpop.f32.mrf.mxu0
    %v922 = vadd.f32 0.0, %v921
    %v923 = vpop.f32.mrf.mxu0
    %v924 = vpop.f32.mrf.mxu0
    %v925 = vadd.f32 0.0, %v924
    %v926 = vpop.f32.mrf.mxu0
    %927 = vmatprep.mubr.bf16.mxu0 0
    %928 = vmatmul.mubr.bf16.gmra.mxu0 %v862
    %v929 = vpop.f32.mrf.mxu0
    %v930 = vadd.f32 0.0, %v929
    %v931 = vpop.f32.mrf.mxu0
    %v932 = vpop.f32.mrf.mxu0
    %v933 = vadd.f32 0.0, %v932
    %v934 = vpop.f32.mrf.mxu0
    %935 = vmatprep.mubr.bf16.mxu0 0
    %936 = vmatmul.mubr.bf16.gmra.mxu0 %v865
    %v937 = vpop.f32.mrf.mxu0
    %v938 = vadd.f32 0.0, %v937
    %v939 = vpop.f32.mrf.mxu0
    %v940 = vpop.f32.mrf.mxu0
    %v941 = vadd.f32 0.0, %v940
    %v942 = vpop.f32.mrf.mxu0
    %943 = vdwg.mxu0
    %948 = vrot.lane.b32.xlu0 %v814, 96
    %v949 = vpop.permute.xlu0 %948
    %950 = vrot.lane.b32.xlu0 %v815, 96
    %v951 = vpop.permute.xlu0 %950
    %952 = vrot.lane.b32.xlu0 %v816, 96
    %v953 = vpop.permute.xlu0 %952
    %954 = vrot.lane.b32.xlu0 %v817, 96
    %v955 = vpop.permute.xlu0 %954
    %v957 = vsel %vm854, %v814, 0
    %v960 = vsel %vm854, %v815, 0
    %v963 = vsel %vm854, %v816, 0
    %v966 = vsel %vm854, %v817, 0
    %v969 = vsel %vm854, %v949, 0
    %v972 = vsel %vm854, %v951, 0
    %v975 = vsel %vm854, %v953, 0
    %v978 = vsel %vm854, %v955, 0
    %980 = vmatprep.subr.bf16.mxu0 0
    %981 = vmatpush1.bf16.xpose.msra.mxu0 0
    %982 = vmatprep.subr.bf16.mxu0 0
    %983 = vmatpush1.bf16.xpose.msra.mxu0 0
    %984 = vmatprep.subr.bf16.mxu0 0
    %985 = vmatpush1.bf16.xpose.msra.mxu0 0
    %986 = vmatprep.subr.bf16.mxu0 0
    %987 = vmatpush1.bf16.xpose.msra.mxu0 0
    %988 = vmatprep.subr.bf16.mxu0 0
    %989 = vmatpush1.bf16.xpose.msra.mxu0 %v978
    %990 = vmatprep.subr.bf16.mxu0 0
    %991 = vmatpush1.bf16.xpose.msra.mxu0 %v975
    %992 = vmatprep.subr.bf16.mxu0 0
    %993 = vmatpush1.bf16.xpose.msra.mxu0 %v972
    %994 = vmatprep.subr.bf16.mxu0 0
    %995 = vmatpush1.bf16.xpose.msra.mxu0 %v969
    %996 = vmatprep.subr.bf16.mxu0 0
    %997 = vmatpush2.bf16.xpose.msra.mxu0 0
    %998 = vmatprep.subr.bf16.mxu0 0
    %999 = vmatpush2.bf16.xpose.msra.mxu0 0
    %1000 = vmatprep.subr.bf16.mxu0 0
    %1001 = vmatpush2.bf16.xpose.msra.mxu0 0
    %1002 = vmatprep.subr.bf16.mxu0 0
    %1003 = vmatpush2.bf16.xpose.msra.mxu0 0
    %1004 = vmatprep.subr.bf16.mxu0 0
    %1005 = vmatpush2.bf16.xpose.msra.mxu0 0
    %1006 = vmatprep.subr.bf16.mxu0 0
    %1007 = vmatpush2.bf16.xpose.msra.mxu0 0
    %1008 = vmatprep.subr.bf16.mxu0 0
    %1009 = vmatpush2.bf16.xpose.msra.mxu0 0
    %1010 = vmatprep.subr.bf16.mxu0 0
    %1011 = vmatpush2.bf16.xpose.msra.mxu0 0
    %1012 = vmatprep.mubr.bf16.mxu0 0
    %1013 = vmatmul.mubr.bf16.gmra.mxu0 %v957
    %v1014 = vpop.f32.mrf.mxu0
    %v1015 = vadd.f32 0.0, %v1014
    %v1016 = vpop.f32.mrf.mxu0
    %v1017 = vpop.f32.mrf.mxu0
    %v1018 = vadd.f32 0.0, %v1017
    %v1019 = vpop.f32.mrf.mxu0
    %1020 = vmatprep.mubr.bf16.mxu0 0
    %1021 = vmatmul.mubr.bf16.gmra.mxu0 %v960
    %v1022 = vpop.f32.mrf.mxu0
    %v1023 = vadd.f32 0.0, %v1022
    %v1024 = vpop.f32.mrf.mxu0
    %v1025 = vpop.f32.mrf.mxu0
    %v1026 = vadd.f32 0.0, %v1025
    %v1027 = vpop.f32.mrf.mxu0
    %1028 = vmatprep.mubr.bf16.mxu0 0
    %1029 = vmatmul.mubr.bf16.gmra.mxu0 %v963
    %v1030 = vpop.f32.mrf.mxu0
    %v1031 = vadd.f32 0.0, %v1030
    %v1032 = vpop.f32.mrf.mxu0
    %v1033 = vpop.f32.mrf.mxu0
    %v1034 = vadd.f32 0.0, %v1033
    %v1035 = vpop.f32.mrf.mxu0
    %1036 = vmatprep.mubr.bf16.mxu0 0
    %1037 = vmatmul.mubr.bf16.gmra.mxu0 %v966
    %v1038 = vpop.f32.mrf.mxu0
    %v1039 = vadd.f32 0.0, %v1038
    %v1040 = vpop.f32.mrf.mxu0
    %v1041 = vpop.f32.mrf.mxu0
    %v1042 = vadd.f32 0.0, %v1041
    %v1043 = vpop.f32.mrf.mxu0
    %1044 = vdwg.mxu0
    %1049 = vrot.lane.b32.xlu0 %v818, 96
    %v1050 = vpop.permute.xlu0 %1049
    %1051 = vrot.lane.b32.xlu0 %v819, 96
    %v1052 = vpop.permute.xlu0 %1051
    %1053 = vrot.lane.b32.xlu0 %v820, 96
    %v1054 = vpop.permute.xlu0 %1053
    %1055 = vrot.lane.b32.xlu0 %v821, 96
    %v1056 = vpop.permute.xlu0 %1055
    %v1058 = vsel %vm854, %v818, 0
    %v1061 = vsel %vm854, %v819, 0
    %v1064 = vsel %vm854, %v820, 0
    %v1067 = vsel %vm854, %v821, 0
    %v1070 = vsel %vm854, %v1050, 0
    %v1073 = vsel %vm854, %v1052, 0
    %v1076 = vsel %vm854, %v1054, 0
    %v1079 = vsel %vm854, %v1056, 0
    %1081 = vmatprep.subr.bf16.mxu0 0
    %1082 = vmatpush1.bf16.xpose.msra.mxu0 0
    %1083 = vmatprep.subr.bf16.mxu0 0
    %1084 = vmatpush1.bf16.xpose.msra.mxu0 0
    %1085 = vmatprep.subr.bf16.mxu0 0
    %1086 = vmatpush1.bf16.xpose.msra.mxu0 0
    %1087 = vmatprep.subr.bf16.mxu0 0
    %1088 = vmatpush1.bf16.xpose.msra.mxu0 0
    %1089 = vmatprep.subr.bf16.mxu0 0
    %1090 = vmatpush1.bf16.xpose.msra.mxu0 %v1079
    %1091 = vmatprep.subr.bf16.mxu0 0
    %1092 = vmatpush1.bf16.xpose.msra.mxu0 %v1076
    %1093 = vmatprep.subr.bf16.mxu0 0
    %1094 = vmatpush1.bf16.xpose.msra.mxu0 %v1073
    %1095 = vmatprep.subr.bf16.mxu0 0
    %1096 = vmatpush1.bf16.xpose.msra.mxu0 %v1070
    %1097 = vmatprep.subr.bf16.mxu0 0
    %1098 = vmatpush2.bf16.xpose.msra.mxu0 0
    %1099 = vmatprep.subr.bf16.mxu0 0
    %1100 = vmatpush2.bf16.xpose.msra.mxu0 0
    %1101 = vmatprep.subr.bf16.mxu0 0
    %1102 = vmatpush2.bf16.xpose.msra.mxu0 0
    %1103 = vmatprep.subr.bf16.mxu0 0
    %1104 = vmatpush2.bf16.xpose.msra.mxu0 0
    %1105 = vmatprep.subr.bf16.mxu0 0
    %1106 = vmatpush2.bf16.xpose.msra.mxu0 0
    %1107 = vmatprep.subr.bf16.mxu0 0
    %1108 = vmatpush2.bf16.xpose.msra.mxu0 0
    %1109 = vmatprep.subr.bf16.mxu0 0
    %1110 = vmatpush2.bf16.xpose.msra.mxu0 0
    %1111 = vmatprep.subr.bf16.mxu0 0
    %1112 = vmatpush2.bf16.xpose.msra.mxu0 0
    %1113 = vmatprep.mubr.bf16.mxu0 0
    %1114 = vmatmul.mubr.bf16.gmra.mxu0 %v1058
    %v1115 = vpop.f32.mrf.mxu0
    %v1116 = vadd.f32 0.0, %v1115
    %v1117 = vpop.f32.mrf.mxu0
    %v1118 = vpop.f32.mrf.mxu0
    %v1119 = vadd.f32 0.0, %v1118
    %v1120 = vpop.f32.mrf.mxu0
    %1121 = vmatprep.mubr.bf16.mxu0 0
    %1122 = vmatmul.mubr.bf16.gmra.mxu0 %v1061
    %v1123 = vpop.f32.mrf.mxu0
    %v1124 = vadd.f32 0.0, %v1123
    %v1125 = vpop.f32.mrf.mxu0
    %v1126 = vpop.f32.mrf.mxu0
    %v1127 = vadd.f32 0.0, %v1126
    %v1128 = vpop.f32.mrf.mxu0
    %1129 = vmatprep.mubr.bf16.mxu0 0
    %1130 = vmatmul.mubr.bf16.gmra.mxu0 %v1064
    %v1131 = vpop.f32.mrf.mxu0
    %v1132 = vadd.f32 0.0, %v1131
    %v1133 = vpop.f32.mrf.mxu0
    %v1134 = vpop.f32.mrf.mxu0
    %v1135 = vadd.f32 0.0, %v1134
    %v1136 = vpop.f32.mrf.mxu0
    %1137 = vmatprep.mubr.bf16.mxu0 0
    %1138 = vmatmul.mubr.bf16.gmra.mxu0 %v1067
    %v1139 = vpop.f32.mrf.mxu0
    %v1140 = vadd.f32 0.0, %v1139
    %v1141 = vpop.f32.mrf.mxu0
    %v1142 = vpop.f32.mrf.mxu0
    %v1143 = vadd.f32 0.0, %v1142
    %v1144 = vpop.f32.mrf.mxu0
    %1145 = vdwg.mxu0
    %1150 = vrot.lane.b32.xlu0 %v822, 96
    %v1151 = vpop.permute.xlu0 %1150
    %1152 = vrot.lane.b32.xlu0 %v823, 96
    %v1153 = vpop.permute.xlu0 %1152
    %1154 = vrot.lane.b32.xlu0 %v824, 96
    %v1155 = vpop.permute.xlu0 %1154
    %1156 = vrot.lane.b32.xlu0 %v825, 96
    %v1157 = vpop.permute.xlu0 %1156
    %v1159 = vsel %vm854, %v822, 0
    %v1162 = vsel %vm854, %v823, 0
    %v1165 = vsel %vm854, %v824, 0
    %v1168 = vsel %vm854, %v825, 0
    %v1171 = vsel %vm854, %v1151, 0
    %v1174 = vsel %vm854, %v1153, 0
    %v1177 = vsel %vm854, %v1155, 0
    %v1180 = vsel %vm854, %v1157, 0
    %1182 = vmatprep.subr.bf16.mxu0 0
    %1183 = vmatpush1.bf16.xpose.msra.mxu0 0
    %1184 = vmatprep.subr.bf16.mxu0 0
    %1185 = vmatpush1.bf16.xpose.msra.mxu0 0
    %1186 = vmatprep.subr.bf16.mxu0 0
    %1187 = vmatpush1.bf16.xpose.msra.mxu0 0
    %1188 = vmatprep.subr.bf16.mxu0 0
    %1189 = vmatpush1.bf16.xpose.msra.mxu0 0
    %1190 = vmatprep.subr.bf16.mxu0 0
    %1191 = vmatpush1.bf16.xpose.msra.mxu0 %v1180
    %1192 = vmatprep.subr.bf16.mxu0 0
    %1193 = vmatpush1.bf16.xpose.msra.mxu0 %v1177
    %1194 = vmatprep.subr.bf16.mxu0 0
    %1195 = vmatpush1.bf16.xpose.msra.mxu0 %v1174
    %1196 = vmatprep.subr.bf16.mxu0 0
    %1197 = vmatpush1.bf16.xpose.msra.mxu0 %v1171
    %1198 = vmatprep.subr.bf16.mxu0 0
    %1199 = vmatpush2.bf16.xpose.msra.mxu0 0
    %1200 = vmatprep.subr.bf16.mxu0 0
    %1201 = vmatpush2.bf16.xpose.msra.mxu0 0
    %1202 = vmatprep.subr.bf16.mxu0 0
    %1203 = vmatpush2.bf16.xpose.msra.mxu0 0
    %1204 = vmatprep.subr.bf16.mxu0 0
    %1205 = vmatpush2.bf16.xpose.msra.mxu0 0
    %1206 = vmatprep.subr.bf16.mxu0 0
    %1207 = vmatpush2.bf16.xpose.msra.mxu0 0
    %1208 = vmatprep.subr.bf16.mxu0 0
    %1209 = vmatpush2.bf16.xpose.msra.mxu0 0
    %1210 = vmatprep.subr.bf16.mxu0 0
    %1211 = vmatpush2.bf16.xpose.msra.mxu0 0
    %1212 = vmatprep.subr.bf16.mxu0 0
    %1213 = vmatpush2.bf16.xpose.msra.mxu0 0
    %1214 = vmatprep.mubr.bf16.mxu0 0
    %1215 = vmatmul.mubr.bf16.gmra.mxu0 %v1159
    %v1216 = vpop.f32.mrf.mxu0
    %v1217 = vadd.f32 0.0, %v1216
    %v1218 = vpop.f32.mrf.mxu0
    %v1219 = vpop.f32.mrf.mxu0
    %v1220 = vadd.f32 0.0, %v1219
    %v1221 = vpop.f32.mrf.mxu0
    %1222 = vmatprep.mubr.bf16.mxu0 0
    %1223 = vmatmul.mubr.bf16.gmra.mxu0 %v1162
    %v1224 = vpop.f32.mrf.mxu0
    %v1225 = vadd.f32 0.0, %v1224
    %v1226 = vpop.f32.mrf.mxu0
    %v1227 = vpop.f32.mrf.mxu0
    %v1228 = vadd.f32 0.0, %v1227
    %v1229 = vpop.f32.mrf.mxu0
    %1230 = vmatprep.mubr.bf16.mxu0 0
    %1231 = vmatmul.mubr.bf16.gmra.mxu0 %v1165
    %v1232 = vpop.f32.mrf.mxu0
    %v1233 = vadd.f32 0.0, %v1232
    %v1234 = vpop.f32.mrf.mxu0
    %v1235 = vpop.f32.mrf.mxu0
    %v1236 = vadd.f32 0.0, %v1235
    %v1237 = vpop.f32.mrf.mxu0
    %1238 = vmatprep.mubr.bf16.mxu0 0
    %1239 = vmatmul.mubr.bf16.gmra.mxu0 %v1168
    %v1240 = vpop.f32.mrf.mxu0
    %v1241 = vadd.f32 0.0, %v1240
    %v1242 = vpop.f32.mrf.mxu0
    %v1243 = vpop.f32.mrf.mxu0
    %v1244 = vadd.f32 0.0, %v1243
    %v1245 = vpop.f32.mrf.mxu0
    %1246 = vdwg.mxu0
    %1251 = vrot.lane.b32.xlu0 %v826, 96
    %v1252 = vpop.permute.xlu0 %1251
    %1253 = vrot.lane.b32.xlu0 %v827, 96
    %v1254 = vpop.permute.xlu0 %1253
    %1255 = vrot.lane.b32.xlu0 %v828, 96
    %v1256 = vpop.permute.xlu0 %1255
    %1257 = vrot.lane.b32.xlu0 %v829, 96
    %v1258 = vpop.permute.xlu0 %1257
    %v1260 = vsel %vm854, %v826, 0
    %v1263 = vsel %vm854, %v827, 0
    %v1266 = vsel %vm854, %v828, 0
    %v1269 = vsel %vm854, %v829, 0
    %v1272 = vsel %vm854, %v1252, 0
    %v1275 = vsel %vm854, %v1254, 0
    %v1278 = vsel %vm854, %v1256, 0
    %v1281 = vsel %vm854, %v1258, 0
    %1283 = vmatprep.subr.bf16.mxu0 0
    %1284 = vmatpush1.bf16.xpose.msra.mxu0 0
    %1285 = vmatprep.subr.bf16.mxu0 0
    %1286 = vmatpush1.bf16.xpose.msra.mxu0 0
    %1287 = vmatprep.subr.bf16.mxu0 0
    %1288 = vmatpush1.bf16.xpose.msra.mxu0 0
    %1289 = vmatprep.subr.bf16.mxu0 0
    %1290 = vmatpush1.bf16.xpose.msra.mxu0 0
    %1291 = vmatprep.subr.bf16.mxu0 0
    %1292 = vmatpush1.bf16.xpose.msra.mxu0 %v1281
    %1293 = vmatprep.subr.bf16.mxu0 0
    %1294 = vmatpush1.bf16.xpose.msra.mxu0 %v1278
    %1295 = vmatprep.subr.bf16.mxu0 0
    %1296 = vmatpush1.bf16.xpose.msra.mxu0 %v1275
    %1297 = vmatprep.subr.bf16.mxu0 0
    %1298 = vmatpush1.bf16.xpose.msra.mxu0 %v1272
    %1299 = vmatprep.subr.bf16.mxu0 0
    %1300 = vmatpush2.bf16.xpose.msra.mxu0 0
    %1301 = vmatprep.subr.bf16.mxu0 0
    %1302 = vmatpush2.bf16.xpose.msra.mxu0 0
    %1303 = vmatprep.subr.bf16.mxu0 0
    %1304 = vmatpush2.bf16.xpose.msra.mxu0 0
    %1305 = vmatprep.subr.bf16.mxu0 0
    %1306 = vmatpush2.bf16.xpose.msra.mxu0 0
    %1307 = vmatprep.subr.bf16.mxu0 0
    %1308 = vmatpush2.bf16.xpose.msra.mxu0 0
    %1309 = vmatprep.subr.bf16.mxu0 0
    %1310 = vmatpush2.bf16.xpose.msra.mxu0 0
    %1311 = vmatprep.subr.bf16.mxu0 0
    %1312 = vmatpush2.bf16.xpose.msra.mxu0 0
    %1313 = vmatprep.subr.bf16.mxu0 0
    %1314 = vmatpush2.bf16.xpose.msra.mxu0 0
    %1315 = vmatprep.mubr.bf16.mxu0 0
    %1316 = vmatmul.mubr.bf16.gmra.mxu0 %v1260
    %v1317 = vpop.f32.mrf.mxu0
    %v1318 = vadd.f32 0.0, %v1317
    %v1319 = vpop.f32.mrf.mxu0
    %v1320 = vpop.f32.mrf.mxu0
    %v1321 = vadd.f32 0.0, %v1320
    %v1322 = vpop.f32.mrf.mxu0
    %1323 = vmatprep.mubr.bf16.mxu0 0
    %1324 = vmatmul.mubr.bf16.gmra.mxu0 %v1263
    %v1325 = vpop.f32.mrf.mxu0
    %v1326 = vadd.f32 0.0, %v1325
    %v1327 = vpop.f32.mrf.mxu0
    %v1328 = vpop.f32.mrf.mxu0
    %v1329 = vadd.f32 0.0, %v1328
    %v1330 = vpop.f32.mrf.mxu0
    %1331 = vmatprep.mubr.bf16.mxu0 0
    %1332 = vmatmul.mubr.bf16.gmra.mxu0 %v1266
    %v1333 = vpop.f32.mrf.mxu0
    %v1334 = vadd.f32 0.0, %v1333
    %v1335 = vpop.f32.mrf.mxu0
    %v1336 = vpop.f32.mrf.mxu0
    %v1337 = vadd.f32 0.0, %v1336
    %v1338 = vpop.f32.mrf.mxu0
    %1339 = vmatprep.mubr.bf16.mxu0 0
    %1340 = vmatmul.mubr.bf16.gmra.mxu0 %v1269
    %v1341 = vpop.f32.mrf.mxu0
    %v1342 = vadd.f32 0.0, %v1341
    %v1343 = vpop.f32.mrf.mxu0
    %v1344 = vpop.f32.mrf.mxu0
    %v1345 = vadd.f32 0.0, %v1344
    %v1346 = vpop.f32.mrf.mxu0
    %1347 = vdwg.mxu0
    %1352 = vrot.lane.b32.xlu0 %v830, 96
    %v1353 = vpop.permute.xlu0 %1352
    %1354 = vrot.lane.b32.xlu0 %v831, 96
    %v1355 = vpop.permute.xlu0 %1354
    %1356 = vrot.lane.b32.xlu0 %v832, 96
    %v1357 = vpop.permute.xlu0 %1356
    %1358 = vrot.lane.b32.xlu0 %v833, 96
    %v1359 = vpop.permute.xlu0 %1358
    %v1361 = vsel %vm854, %v830, 0
    %v1364 = vsel %vm854, %v831, 0
    %v1367 = vsel %vm854, %v832, 0
    %v1370 = vsel %vm854, %v833, 0
    %v1373 = vsel %vm854, %v1353, 0
    %v1376 = vsel %vm854, %v1355, 0
    %v1379 = vsel %vm854, %v1357, 0
    %v1382 = vsel %vm854, %v1359, 0
    %1384 = vmatprep.subr.bf16.mxu0 0
    %1385 = vmatpush1.bf16.xpose.msra.mxu0 0
    %1386 = vmatprep.subr.bf16.mxu0 0
    %1387 = vmatpush1.bf16.xpose.msra.mxu0 0
    %1388 = vmatprep.subr.bf16.mxu0 0
    %1389 = vmatpush1.bf16.xpose.msra.mxu0 0
    %1390 = vmatprep.subr.bf16.mxu0 0
    %1391 = vmatpush1.bf16.xpose.msra.mxu0 0
    %1392 = vmatprep.subr.bf16.mxu0 0
    %1393 = vmatpush1.bf16.xpose.msra.mxu0 %v1382
    %1394 = vmatprep.subr.bf16.mxu0 0
    %1395 = vmatpush1.bf16.xpose.msra.mxu0 %v1379
    %1396 = vmatprep.subr.bf16.mxu0 0
    %1397 = vmatpush1.bf16.xpose.msra.mxu0 %v1376
    %1398 = vmatprep.subr.bf16.mxu0 0
    %1399 = vmatpush1.bf16.xpose.msra.mxu0 %v1373
    %1400 = vmatprep.subr.bf16.mxu0 0
    %1401 = vmatpush2.bf16.xpose.msra.mxu0 0
    %1402 = vmatprep.subr.bf16.mxu0 0
    %1403 = vmatpush2.bf16.xpose.msra.mxu0 0
    %1404 = vmatprep.subr.bf16.mxu0 0
    %1405 = vmatpush2.bf16.xpose.msra.mxu0 0
    %1406 = vmatprep.subr.bf16.mxu0 0
    %1407 = vmatpush2.bf16.xpose.msra.mxu0 0
    %1408 = vmatprep.subr.bf16.mxu0 0
    %1409 = vmatpush2.bf16.xpose.msra.mxu0 0
    %1410 = vmatprep.subr.bf16.mxu0 0
    %1411 = vmatpush2.bf16.xpose.msra.mxu0 0
    %1412 = vmatprep.subr.bf16.mxu0 0
    %1413 = vmatpush2.bf16.xpose.msra.mxu0 0
    %1414 = vmatprep.subr.bf16.mxu0 0
    %1415 = vmatpush2.bf16.xpose.msra.mxu0 0
    %1416 = vmatprep.mubr.bf16.mxu0 0
    %1417 = vmatmul.mubr.bf16.gmra.mxu0 %v1361
    %v1418 = vpop.f32.mrf.mxu0
    %v1419 = vadd.f32 0.0, %v1418
    %v1420 = vpop.f32.mrf.mxu0
    %v1421 = vpop.f32.mrf.mxu0
    %v1422 = vadd.f32 0.0, %v1421
    %v1423 = vpop.f32.mrf.mxu0
    %1424 = vmatprep.mubr.bf16.mxu0 0
    %1425 = vmatmul.mubr.bf16.gmra.mxu0 %v1364
    %v1426 = vpop.f32.mrf.mxu0
    %v1427 = vadd.f32 0.0, %v1426
    %v1428 = vpop.f32.mrf.mxu0
    %v1429 = vpop.f32.mrf.mxu0
    %v1430 = vadd.f32 0.0, %v1429
    %v1431 = vpop.f32.mrf.mxu0
    %1432 = vmatprep.mubr.bf16.mxu0 0
    %1433 = vmatmul.mubr.bf16.gmra.mxu0 %v1367
    %v1434 = vpop.f32.mrf.mxu0
    %v1435 = vadd.f32 0.0, %v1434
    %v1436 = vpop.f32.mrf.mxu0
    %v1437 = vpop.f32.mrf.mxu0
    %v1438 = vadd.f32 0.0, %v1437
    %v1439 = vpop.f32.mrf.mxu0
    %1440 = vmatprep.mubr.bf16.mxu0 0
    %1441 = vmatmul.mubr.bf16.gmra.mxu0 %v1370
    %v1442 = vpop.f32.mrf.mxu0
    %v1443 = vadd.f32 0.0, %v1442
    %v1444 = vpop.f32.mrf.mxu0
    %v1445 = vpop.f32.mrf.mxu0
    %v1446 = vadd.f32 0.0, %v1445
    %v1447 = vpop.f32.mrf.mxu0
    %1448 = vdwg.mxu0
    %1453 = vrot.lane.b32.xlu0 %v834, 96
    %v1454 = vpop.permute.xlu0 %1453
    %1455 = vrot.lane.b32.xlu0 %v835, 96
    %v1456 = vpop.permute.xlu0 %1455
    %1457 = vrot.lane.b32.xlu0 %v836, 96
    %v1458 = vpop.permute.xlu0 %1457
    %1459 = vrot.lane.b32.xlu0 %v837, 96
    %v1460 = vpop.permute.xlu0 %1459
    %v1462 = vsel %vm854, %v834, 0
    %v1465 = vsel %vm854, %v835, 0
    %v1468 = vsel %vm854, %v836, 0
    %v1471 = vsel %vm854, %v837, 0
    %v1474 = vsel %vm854, %v1454, 0
    %v1477 = vsel %vm854, %v1456, 0
    %v1480 = vsel %vm854, %v1458, 0
    %v1483 = vsel %vm854, %v1460, 0
    %1485 = vmatprep.subr.bf16.mxu0 0
    %1486 = vmatpush1.bf16.xpose.msra.mxu0 0
    %1487 = vmatprep.subr.bf16.mxu0 0
    %1488 = vmatpush1.bf16.xpose.msra.mxu0 0
    %1489 = vmatprep.subr.bf16.mxu0 0
    %1490 = vmatpush1.bf16.xpose.msra.mxu0 0
    %1491 = vmatprep.subr.bf16.mxu0 0
    %1492 = vmatpush1.bf16.xpose.msra.mxu0 0
    %1493 = vmatprep.subr.bf16.mxu0 0
    %1494 = vmatpush1.bf16.xpose.msra.mxu0 %v1483
    %1495 = vmatprep.subr.bf16.mxu0 0
    %1496 = vmatpush1.bf16.xpose.msra.mxu0 %v1480
    %1497 = vmatprep.subr.bf16.mxu0 0
    %1498 = vmatpush1.bf16.xpose.msra.mxu0 %v1477
    %1499 = vmatprep.subr.bf16.mxu0 0
    %1500 = vmatpush1.bf16.xpose.msra.mxu0 %v1474
    %1501 = vmatprep.subr.bf16.mxu0 0
    %1502 = vmatpush2.bf16.xpose.msra.mxu0 0
    %1503 = vmatprep.subr.bf16.mxu0 0
    %1504 = vmatpush2.bf16.xpose.msra.mxu0 0
    %1505 = vmatprep.subr.bf16.mxu0 0
    %1506 = vmatpush2.bf16.xpose.msra.mxu0 0
    %1507 = vmatprep.subr.bf16.mxu0 0
    %1508 = vmatpush2.bf16.xpose.msra.mxu0 0
    %1509 = vmatprep.subr.bf16.mxu0 0
    %1510 = vmatpush2.bf16.xpose.msra.mxu0 0
    %1511 = vmatprep.subr.bf16.mxu0 0
    %1512 = vmatpush2.bf16.xpose.msra.mxu0 0
    %1513 = vmatprep.subr.bf16.mxu0 0
    %1514 = vmatpush2.bf16.xpose.msra.mxu0 0
    %1515 = vmatprep.subr.bf16.mxu0 0
    %1516 = vmatpush2.bf16.xpose.msra.mxu0 0
    %1517 = vmatprep.mubr.bf16.mxu0 0
    %1518 = vmatmul.mubr.bf16.gmra.mxu0 %v1462
    %v1519 = vpop.f32.mrf.mxu0
    %v1520 = vadd.f32 0.0, %v1519
    %v1521 = vpop.f32.mrf.mxu0
    %v1522 = vpop.f32.mrf.mxu0
    %v1523 = vadd.f32 0.0, %v1522
    %v1524 = vpop.f32.mrf.mxu0
    %1525 = vmatprep.mubr.bf16.mxu0 0
    %1526 = vmatmul.mubr.bf16.gmra.mxu0 %v1465
    %v1527 = vpop.f32.mrf.mxu0
    %v1528 = vadd.f32 0.0, %v1527
    %v1529 = vpop.f32.mrf.mxu0
    %v1530 = vpop.f32.mrf.mxu0
    %v1531 = vadd.f32 0.0, %v1530
    %v1532 = vpop.f32.mrf.mxu0
    %1533 = vmatprep.mubr.bf16.mxu0 0
    %1534 = vmatmul.mubr.bf16.gmra.mxu0 %v1468
    %v1535 = vpop.f32.mrf.mxu0
    %v1536 = vadd.f32 0.0, %v1535
    %v1537 = vpop.f32.mrf.mxu0
    %v1538 = vpop.f32.mrf.mxu0
    %v1539 = vadd.f32 0.0, %v1538
    %v1540 = vpop.f32.mrf.mxu0
    %1541 = vmatprep.mubr.bf16.mxu0 0
    %1542 = vmatmul.mubr.bf16.gmra.mxu0 %v1471
    %v1543 = vpop.f32.mrf.mxu0
    %v1544 = vadd.f32 0.0, %v1543
    %v1545 = vpop.f32.mrf.mxu0
    %v1546 = vpop.f32.mrf.mxu0
    %v1547 = vadd.f32 0.0, %v1546
    %v1548 = vpop.f32.mrf.mxu0
    %1549 = vdwg.mxu0
    %1554 = vrot.lane.b32.xlu0 %v838, 96
    %v1555 = vpop.permute.xlu0 %1554
    %1556 = vrot.lane.b32.xlu0 %v839, 96
    %v1557 = vpop.permute.xlu0 %1556
    %1558 = vrot.lane.b32.xlu0 %v840, 96
    %v1559 = vpop.permute.xlu0 %1558
    %1560 = vrot.lane.b32.xlu0 %v841, 96
    %v1561 = vpop.permute.xlu0 %1560
    %v1563 = vsel %vm854, %v838, 0
    %v1566 = vsel %vm854, %v839, 0
    %v1569 = vsel %vm854, %v840, 0
    %v1572 = vsel %vm854, %v841, 0
    %v1575 = vsel %vm854, %v1555, 0
    %v1578 = vsel %vm854, %v1557, 0
    %v1581 = vsel %vm854, %v1559, 0
    %v1584 = vsel %vm854, %v1561, 0
    %1586 = vmatprep.subr.bf16.mxu0 0
    %1587 = vmatpush1.bf16.xpose.msra.mxu0 0
    %1588 = vmatprep.subr.bf16.mxu0 0
    %1589 = vmatpush1.bf16.xpose.msra.mxu0 0
    %1590 = vmatprep.subr.bf16.mxu0 0
    %1591 = vmatpush1.bf16.xpose.msra.mxu0 0
    %1592 = vmatprep.subr.bf16.mxu0 0
    %1593 = vmatpush1.bf16.xpose.msra.mxu0 0
    %1594 = vmatprep.subr.bf16.mxu0 0
    %1595 = vmatpush1.bf16.xpose.msra.mxu0 %v1584
    %1596 = vmatprep.subr.bf16.mxu0 0
    %1597 = vmatpush1.bf16.xpose.msra.mxu0 %v1581
    %1598 = vmatprep.subr.bf16.mxu0 0
    %1599 = vmatpush1.bf16.xpose.msra.mxu0 %v1578
    %1600 = vmatprep.subr.bf16.mxu0 0
    %1601 = vmatpush1.bf16.xpose.msra.mxu0 %v1575
    %1602 = vmatprep.subr.bf16.mxu0 0
    %1603 = vmatpush2.bf16.xpose.msra.mxu0 0
    %1604 = vmatprep.subr.bf16.mxu0 0
    %1605 = vmatpush2.bf16.xpose.msra.mxu0 0
    %1606 = vmatprep.subr.bf16.mxu0 0
    %1607 = vmatpush2.bf16.xpose.msra.mxu0 0
    %1608 = vmatprep.subr.bf16.mxu0 0
    %1609 = vmatpush2.bf16.xpose.msra.mxu0 0
    %1610 = vmatprep.subr.bf16.mxu0 0
    %1611 = vmatpush2.bf16.xpose.msra.mxu0 0
    %1612 = vmatprep.subr.bf16.mxu0 0
    %1613 = vmatpush2.bf16.xpose.msra.mxu0 0
    %1614 = vmatprep.subr.bf16.mxu0 0
    %1615 = vmatpush2.bf16.xpose.msra.mxu0 0
    %1616 = vmatprep.subr.bf16.mxu0 0
    %1617 = vmatpush2.bf16.xpose.msra.mxu0 0
    %1618 = vmatprep.mubr.bf16.mxu0 0
    %1619 = vmatmul.mubr.bf16.gmra.mxu0 %v1563
    %v1620 = vpop.f32.mrf.mxu0
    %v1621 = vadd.f32 0.0, %v1620
    %v1622 = vpop.f32.mrf.mxu0
    %v1623 = vpop.f32.mrf.mxu0
    %v1624 = vadd.f32 0.0, %v1623
    %v1625 = vpop.f32.mrf.mxu0
    %1626 = vmatprep.mubr.bf16.mxu0 0
    %1627 = vmatmul.mubr.bf16.gmra.mxu0 %v1566
    %v1628 = vpop.f32.mrf.mxu0
    %v1629 = vadd.f32 0.0, %v1628
    %v1630 = vpop.f32.mrf.mxu0
    %v1631 = vpop.f32.mrf.mxu0
    %v1632 = vadd.f32 0.0, %v1631
    %v1633 = vpop.f32.mrf.mxu0
    %1634 = vmatprep.mubr.bf16.mxu0 0
    %1635 = vmatmul.mubr.bf16.gmra.mxu0 %v1569
    %v1636 = vpop.f32.mrf.mxu0
    %v1637 = vadd.f32 0.0, %v1636
    %v1638 = vpop.f32.mrf.mxu0
    %v1639 = vpop.f32.mrf.mxu0
    %v1640 = vadd.f32 0.0, %v1639
    %v1641 = vpop.f32.mrf.mxu0
    %1642 = vmatprep.mubr.bf16.mxu0 0
    %1643 = vmatmul.mubr.bf16.gmra.mxu0 %v1572
    %v1644 = vpop.f32.mrf.mxu0
    %v1645 = vadd.f32 0.0, %v1644
    %v1646 = vpop.f32.mrf.mxu0
    %v1647 = vpop.f32.mrf.mxu0
    %v1648 = vadd.f32 0.0, %v1647
    %v1649 = vpop.f32.mrf.mxu0
    %1650 = vdwg.mxu0
    %vm1651 = vcmask 523264
    %v1652 = vsel %vm1651, %v914, -inf
    %1653 = vmax.xlane.f32.xlu0 %v1652
    %v1654 = vpop.xlane.xlu0 %1653
    %v1655 = vsel %vm1651, %v917, -inf
    %1656 = vmax.xlane.f32.xlu0 %v1655
    %v1657 = vpop.xlane.xlu0 %1656
    %v1658 = vsel %vm1651, %v922, -inf
    %1659 = vmax.xlane.f32.xlu0 %v1658
    %v1660 = vpop.xlane.xlu0 %1659
    %v1661 = vsel %vm1651, %v925, -inf
    %1662 = vmax.xlane.f32.xlu0 %v1661
    %v1663 = vpop.xlane.xlu0 %1662
    %v1664 = vsel %vm1651, %v930, -inf
    %1665 = vmax.xlane.f32.xlu0 %v1664
    %v1666 = vpop.xlane.xlu0 %1665
    %v1667 = vsel %vm1651, %v933, -inf
    %1668 = vmax.xlane.f32.xlu0 %v1667
    %v1669 = vpop.xlane.xlu0 %1668
    %v1670 = vsel %vm1651, %v938, -inf
    %1671 = vmax.xlane.f32.xlu0 %v1670
    %v1672 = vpop.xlane.xlu0 %1671
    %v1673 = vsel %vm1651, %v941, -inf
    %1674 = vmax.xlane.f32.xlu0 %v1673
    %v1675 = vpop.xlane.xlu0 %1674
    %v1676 = vsel %vm1651, %v1015, -inf
    %1677 = vmax.xlane.f32.xlu0 %v1676
    %v1678 = vpop.xlane.xlu0 %1677
    %v1679 = vsel %vm1651, %v1018, -inf
    %1680 = vmax.xlane.f32.xlu0 %v1679
    %v1681 = vpop.xlane.xlu0 %1680
    %v1682 = vsel %vm1651, %v1023, -inf
    %1683 = vmax.xlane.f32.xlu0 %v1682
    %v1684 = vpop.xlane.xlu0 %1683
    %v1685 = vsel %vm1651, %v1026, -inf
    %1686 = vmax.xlane.f32.xlu0 %v1685
    %v1687 = vpop.xlane.xlu0 %1686
    %v1688 = vsel %vm1651, %v1031, -inf
    %1689 = vmax.xlane.f32.xlu0 %v1688
    %v1690 = vpop.xlane.xlu0 %1689
    %v1691 = vsel %vm1651, %v1034, -inf
    %1692 = vmax.xlane.f32.xlu0 %v1691
    %v1693 = vpop.xlane.xlu0 %1692
    %v1694 = vsel %vm1651, %v1039, -inf
    %1695 = vmax.xlane.f32.xlu0 %v1694
    %v1696 = vpop.xlane.xlu0 %1695
    %v1697 = vsel %vm1651, %v1042, -inf
    %1698 = vmax.xlane.f32.xlu0 %v1697
    %v1699 = vpop.xlane.xlu0 %1698
    %v1700 = vsel %vm1651, %v1116, -inf
    %1701 = vmax.xlane.f32.xlu0 %v1700
    %v1702 = vpop.xlane.xlu0 %1701
    %v1703 = vsel %vm1651, %v1119, -inf
    %1704 = vmax.xlane.f32.xlu0 %v1703
    %v1705 = vpop.xlane.xlu0 %1704
    %v1706 = vsel %vm1651, %v1124, -inf
    %1707 = vmax.xlane.f32.xlu0 %v1706
    %v1708 = vpop.xlane.xlu0 %1707
    %v1709 = vsel %vm1651, %v1127, -inf
    %1710 = vmax.xlane.f32.xlu0 %v1709
    %v1711 = vpop.xlane.xlu0 %1710
    %v1712 = vsel %vm1651, %v1132, -inf
    %1713 = vmax.xlane.f32.xlu0 %v1712
    %v1714 = vpop.xlane.xlu0 %1713
    %v1715 = vsel %vm1651, %v1135, -inf
    %1716 = vmax.xlane.f32.xlu0 %v1715
    %v1717 = vpop.xlane.xlu0 %1716
    %v1718 = vsel %vm1651, %v1140, -inf
    %1719 = vmax.xlane.f32.xlu0 %v1718
    %v1720 = vpop.xlane.xlu0 %1719
    %v1721 = vsel %vm1651, %v1143, -inf
    %1722 = vmax.xlane.f32.xlu0 %v1721
    %v1723 = vpop.xlane.xlu0 %1722
    %v1724 = vsel %vm1651, %v1217, -inf
    %1725 = vmax.xlane.f32.xlu0 %v1724
    %v1726 = vpop.xlane.xlu0 %1725
    %v1727 = vsel %vm1651, %v1220, -inf
    %1728 = vmax.xlane.f32.xlu0 %v1727
    %v1729 = vpop.xlane.xlu0 %1728
    %v1730 = vsel %vm1651, %v1225, -inf
    %1731 = vmax.xlane.f32.xlu0 %v1730
    %v1732 = vpop.xlane.xlu0 %1731
    %v1733 = vsel %vm1651, %v1228, -inf
    %1734 = vmax.xlane.f32.xlu0 %v1733
    %v1735 = vpop.xlane.xlu0 %1734
    %v1736 = vsel %vm1651, %v1233, -inf
    %1737 = vmax.xlane.f32.xlu0 %v1736
    %v1738 = vpop.xlane.xlu0 %1737
    %v1739 = vsel %vm1651, %v1236, -inf
    %1740 = vmax.xlane.f32.xlu0 %v1739
    %v1741 = vpop.xlane.xlu0 %1740
    %v1742 = vsel %vm1651, %v1241, -inf
    %1743 = vmax.xlane.f32.xlu0 %v1742
    %v1744 = vpop.xlane.xlu0 %1743
    %v1745 = vsel %vm1651, %v1244, -inf
    %1746 = vmax.xlane.f32.xlu0 %v1745
    %v1747 = vpop.xlane.xlu0 %1746
    %v1748 = vsel %vm1651, %v1318, -inf
    %1749 = vmax.xlane.f32.xlu0 %v1748
    %v1750 = vpop.xlane.xlu0 %1749
    %v1751 = vsel %vm1651, %v1321, -inf
    %1752 = vmax.xlane.f32.xlu0 %v1751
    %v1753 = vpop.xlane.xlu0 %1752
    %v1754 = vsel %vm1651, %v1326, -inf
    %1755 = vmax.xlane.f32.xlu0 %v1754
    %v1756 = vpop.xlane.xlu0 %1755
    %v1757 = vsel %vm1651, %v1329, -inf
    %1758 = vmax.xlane.f32.xlu0 %v1757
    %v1759 = vpop.xlane.xlu0 %1758
    %v1760 = vsel %vm1651, %v1334, -inf
    %1761 = vmax.xlane.f32.xlu0 %v1760
    %v1762 = vpop.xlane.xlu0 %1761
    %v1763 = vsel %vm1651, %v1337, -inf
    %1764 = vmax.xlane.f32.xlu0 %v1763
    %v1765 = vpop.xlane.xlu0 %1764
    %v1766 = vsel %vm1651, %v1342, -inf
    %1767 = vmax.xlane.f32.xlu0 %v1766
    %v1768 = vpop.xlane.xlu0 %1767
    %v1769 = vsel %vm1651, %v1345, -inf
    %1770 = vmax.xlane.f32.xlu0 %v1769
    %v1771 = vpop.xlane.xlu0 %1770
    %v1772 = vsel %vm1651, %v1419, -inf
    %1773 = vmax.xlane.f32.xlu0 %v1772
    %v1774 = vpop.xlane.xlu0 %1773
    %v1775 = vsel %vm1651, %v1422, -inf
    %1776 = vmax.xlane.f32.xlu0 %v1775
    %v1777 = vpop.xlane.xlu0 %1776
    %v1778 = vsel %vm1651, %v1427, -inf
    %1779 = vmax.xlane.f32.xlu0 %v1778
    %v1780 = vpop.xlane.xlu0 %1779
    %v1781 = vsel %vm1651, %v1430, -inf
    %1782 = vmax.xlane.f32.xlu0 %v1781
    %v1783 = vpop.xlane.xlu0 %1782
    %v1784 = vsel %vm1651, %v1435, -inf
    %1785 = vmax.xlane.f32.xlu0 %v1784
    %v1786 = vpop.xlane.xlu0 %1785
    %v1787 = vsel %vm1651, %v1438, -inf
    %1788 = vmax.xlane.f32.xlu0 %v1787
    %v1789 = vpop.xlane.xlu0 %1788
    %v1790 = vsel %vm1651, %v1443, -inf
    %1791 = vmax.xlane.f32.xlu0 %v1790
    %v1792 = vpop.xlane.xlu0 %1791
    %v1793 = vsel %vm1651, %v1446, -inf
    %1794 = vmax.xlane.f32.xlu0 %v1793
    %v1795 = vpop.xlane.xlu0 %1794
    %v1796 = vsel %vm1651, %v1520, -inf
    %1797 = vmax.xlane.f32.xlu0 %v1796
    %v1798 = vpop.xlane.xlu0 %1797
    %v1799 = vsel %vm1651, %v1523, -inf
    %1800 = vmax.xlane.f32.xlu0 %v1799
    %v1801 = vpop.xlane.xlu0 %1800
    %v1802 = vsel %vm1651, %v1528, -inf
    %1803 = vmax.xlane.f32.xlu0 %v1802
    %v1804 = vpop.xlane.xlu0 %1803
    %v1805 = vsel %vm1651, %v1531, -inf
    %1806 = vmax.xlane.f32.xlu0 %v1805
    %v1807 = vpop.xlane.xlu0 %1806
    %v1808 = vsel %vm1651, %v1536, -inf
    %1809 = vmax.xlane.f32.xlu0 %v1808
    %v1810 = vpop.xlane.xlu0 %1809
    %v1811 = vsel %vm1651, %v1539, -inf
    %1812 = vmax.xlane.f32.xlu0 %v1811
    %v1813 = vpop.xlane.xlu0 %1812
    %v1814 = vsel %vm1651, %v1544, -inf
    %1815 = vmax.xlane.f32.xlu0 %v1814
    %v1816 = vpop.xlane.xlu0 %1815
    %v1817 = vsel %vm1651, %v1547, -inf
    %1818 = vmax.xlane.f32.xlu0 %v1817
    %v1819 = vpop.xlane.xlu0 %1818
    %v1820 = vsel %vm1651, %v1621, -inf
    %1821 = vmax.xlane.f32.xlu0 %v1820
    %v1822 = vpop.xlane.xlu0 %1821
    %v1823 = vsel %vm1651, %v1624, -inf
    %1824 = vmax.xlane.f32.xlu0 %v1823
    %v1825 = vpop.xlane.xlu0 %1824
    %v1826 = vsel %vm1651, %v1629, -inf
    %1827 = vmax.xlane.f32.xlu0 %v1826
    %v1828 = vpop.xlane.xlu0 %1827
    %v1829 = vsel %vm1651, %v1632, -inf
    %1830 = vmax.xlane.f32.xlu0 %v1829
    %v1831 = vpop.xlane.xlu0 %1830
    %v1832 = vsel %vm1651, %v1637, -inf
    %1833 = vmax.xlane.f32.xlu0 %v1832
    %v1834 = vpop.xlane.xlu0 %1833
    %v1835 = vsel %vm1651, %v1640, -inf
    %1836 = vmax.xlane.f32.xlu0 %v1835
    %v1837 = vpop.xlane.xlu0 %1836
    %v1838 = vsel %vm1651, %v1645, -inf
    %1839 = vmax.xlane.f32.xlu0 %v1838
    %v1840 = vpop.xlane.xlu0 %1839
    %v1841 = vsel %vm1651, %v1648, -inf
    %1842 = vmax.xlane.f32.xlu0 %v1841
    %v1843 = vpop.xlane.xlu0 %1842
    %v1844 = vsub.f32 %v914, %v1654
    %v1845 = vsub.f32 %v917, %v1657
    %v1846 = vsub.f32 %v922, %v1660
    %v1847 = vsub.f32 %v925, %v1663
    %v1848 = vsub.f32 %v930, %v1666
    %v1849 = vsub.f32 %v933, %v1669
    %v1850 = vsub.f32 %v938, %v1672
    %v1851 = vsub.f32 %v941, %v1675
    %v1852 = vsub.f32 %v1015, %v1678
    %v1853 = vsub.f32 %v1018, %v1681
    %v1854 = vsub.f32 %v1023, %v1684
    %v1855 = vsub.f32 %v1026, %v1687
    %v1856 = vsub.f32 %v1031, %v1690
    %v1857 = vsub.f32 %v1034, %v1693
    %v1858 = vsub.f32 %v1039, %v1696
    %v1859 = vsub.f32 %v1042, %v1699
    %v1860 = vsub.f32 %v1116, %v1702
    %v1861 = vsub.f32 %v1119, %v1705
    %v1862 = vsub.f32 %v1124, %v1708
    %v1863 = vsub.f32 %v1127, %v1711
    %v1864 = vsub.f32 %v1132, %v1714
    %v1865 = vsub.f32 %v1135, %v1717
    %v1866 = vsub.f32 %v1140, %v1720
    %v1867 = vsub.f32 %v1143, %v1723
    %v1868 = vsub.f32 %v1217, %v1726
    %v1869 = vsub.f32 %v1220, %v1729
    %v1870 = vsub.f32 %v1225, %v1732
    %v1871 = vsub.f32 %v1228, %v1735
    %v1872 = vsub.f32 %v1233, %v1738
    %v1873 = vsub.f32 %v1236, %v1741
    %v1874 = vsub.f32 %v1241, %v1744
    %v1875 = vsub.f32 %v1244, %v1747
    %v1876 = vsub.f32 %v1318, %v1750
    %v1877 = vsub.f32 %v1321, %v1753
    %v1878 = vsub.f32 %v1326, %v1756
    %v1879 = vsub.f32 %v1329, %v1759
    %v1880 = vsub.f32 %v1334, %v1762
    %v1881 = vsub.f32 %v1337, %v1765
    %v1882 = vsub.f32 %v1342, %v1768
    %v1883 = vsub.f32 %v1345, %v1771
    %v1884 = vsub.f32 %v1419, %v1774
    %v1885 = vsub.f32 %v1422, %v1777
    %v1886 = vsub.f32 %v1427, %v1780
    %v1887 = vsub.f32 %v1430, %v1783
    %v1888 = vsub.f32 %v1435, %v1786
    %v1889 = vsub.f32 %v1438, %v1789
    %v1890 = vsub.f32 %v1443, %v1792
    %v1891 = vsub.f32 %v1446, %v1795
    %v1892 = vsub.f32 %v1520, %v1798
    %v1893 = vsub.f32 %v1523, %v1801
    %v1894 = vsub.f32 %v1528, %v1804
    %v1895 = vsub.f32 %v1531, %v1807
    %v1896 = vsub.f32 %v1536, %v1810
    %v1897 = vsub.f32 %v1539, %v1813
    %v1898 = vsub.f32 %v1544, %v1816
    %v1899 = vsub.f32 %v1547, %v1819
    %v1900 = vsub.f32 %v1621, %v1822
    %v1901 = vsub.f32 %v1624, %v1825
    %v1902 = vsub.f32 %v1629, %v1828
    %v1903 = vsub.f32 %v1632, %v1831
    %v1904 = vsub.f32 %v1637, %v1834
    %v1905 = vsub.f32 %v1640, %v1837
    %v1906 = vsub.f32 %v1645, %v1840
    %v1907 = vsub.f32 %v1648, %v1843
    %v1908 = vmul.f32 %v1844, 1.442695
    %v1909 = vpow.pop %v1908
    %v1910 = vmul.f32 %v1845, 1.442695
    %v1911 = vpow.pop %v1910
    %v1912 = vmul.f32 %v1846, 1.442695
    %v1913 = vpow.pop %v1912
    %v1914 = vmul.f32 %v1847, 1.442695
    %v1915 = vpow.pop %v1914
    %v1916 = vmul.f32 %v1848, 1.442695
    %v1917 = vpow.pop %v1916
    %v1918 = vmul.f32 %v1849, 1.442695
    %v1919 = vpow.pop %v1918
    %v1920 = vmul.f32 %v1850, 1.442695
    %v1921 = vpow.pop %v1920
    %v1922 = vmul.f32 %v1851, 1.442695
    %v1923 = vpow.pop %v1922
    %v1924 = vmul.f32 %v1852, 1.442695
    %v1925 = vpow.pop %v1924
    %v1926 = vmul.f32 %v1853, 1.442695
    %v1927 = vpow.pop %v1926
    %v1928 = vmul.f32 %v1854, 1.442695
    %v1929 = vpow.pop %v1928
    %v1930 = vmul.f32 %v1855, 1.442695
    %v1931 = vpow.pop %v1930
    %v1932 = vmul.f32 %v1856, 1.442695
    %v1933 = vpow.pop %v1932
    %v1934 = vmul.f32 %v1857, 1.442695
    %v1935 = vpow.pop %v1934
    %v1936 = vmul.f32 %v1858, 1.442695
    %v1937 = vpow.pop %v1936
    %v1938 = vmul.f32 %v1859, 1.442695
    %v1939 = vpow.pop %v1938
    %v1940 = vmul.f32 %v1860, 1.442695
    %v1941 = vpow.pop %v1940
    %v1942 = vmul.f32 %v1861, 1.442695
    %v1943 = vpow.pop %v1942
    %v1944 = vmul.f32 %v1862, 1.442695
    %v1945 = vpow.pop %v1944
    %v1946 = vmul.f32 %v1863, 1.442695
    %v1947 = vpow.pop %v1946
    %v1948 = vmul.f32 %v1864, 1.442695
    %v1949 = vpow.pop %v1948
    %v1950 = vmul.f32 %v1865, 1.442695
    %v1951 = vpow.pop %v1950
    %v1952 = vmul.f32 %v1866, 1.442695
    %v1953 = vpow.pop %v1952
    %v1954 = vmul.f32 %v1867, 1.442695
    %v1955 = vpow.pop %v1954
    %v1956 = vmul.f32 %v1868, 1.442695
    %v1957 = vpow.pop %v1956
    %v1958 = vmul.f32 %v1869, 1.442695
    %v1959 = vpow.pop %v1958
    %v1960 = vmul.f32 %v1870, 1.442695
    %v1961 = vpow.pop %v1960
    %v1962 = vmul.f32 %v1871, 1.442695
    %v1963 = vpow.pop %v1962
    %v1964 = vmul.f32 %v1872, 1.442695
    %v1965 = vpow.pop %v1964
    %v1966 = vmul.f32 %v1873, 1.442695
    %v1967 = vpow.pop %v1966
    %v1968 = vmul.f32 %v1874, 1.442695
    %v1969 = vpow.pop %v1968
    %v1970 = vmul.f32 %v1875, 1.442695
    %v1971 = vpow.pop %v1970
    %v1972 = vmul.f32 %v1876, 1.442695
    %v1973 = vpow.pop %v1972
    %v1974 = vmul.f32 %v1877, 1.442695
    %v1975 = vpow.pop %v1974
    %v1976 = vmul.f32 %v1878, 1.442695
    %v1977 = vpow.pop %v1976
    %v1978 = vmul.f32 %v1879, 1.442695
    %v1979 = vpow.pop %v1978
    %v1980 = vmul.f32 %v1880, 1.442695
    %v1981 = vpow.pop %v1980
    %v1982 = vmul.f32 %v1881, 1.442695
    %v1983 = vpow.pop %v1982
    %v1984 = vmul.f32 %v1882, 1.442695
    %v1985 = vpow.pop %v1984
    %v1986 = vmul.f32 %v1883, 1.442695
    %v1987 = vpow.pop %v1986
    %v1988 = vmul.f32 %v1884, 1.442695
    %v1989 = vpow.pop %v1988
    %v1990 = vmul.f32 %v1885, 1.442695
    %v1991 = vpow.pop %v1990
    %v1992 = vmul.f32 %v1886, 1.442695
    %v1993 = vpow.pop %v1992
    %v1994 = vmul.f32 %v1887, 1.442695
    %v1995 = vpow.pop %v1994
    %v1996 = vmul.f32 %v1888, 1.442695
    %v1997 = vpow.pop %v1996
    %v1998 = vmul.f32 %v1889, 1.442695
    %v1999 = vpow.pop %v1998
    %v2000 = vmul.f32 %v1890, 1.442695
    %v2001 = vpow.pop %v2000
    %v2002 = vmul.f32 %v1891, 1.442695
    %v2003 = vpow.pop %v2002
    %v2004 = vmul.f32 %v1892, 1.442695
    %v2005 = vpow.pop %v2004
    %v2006 = vmul.f32 %v1893, 1.442695
    %v2007 = vpow.pop %v2006
    %v2008 = vmul.f32 %v1894, 1.442695
    %v2009 = vpow.pop %v2008
    %v2010 = vmul.f32 %v1895, 1.442695
    %v2011 = vpow.pop %v2010
    %v2012 = vmul.f32 %v1896, 1.442695
    %v2013 = vpow.pop %v2012
    %v2014 = vmul.f32 %v1897, 1.442695
    %v2015 = vpow.pop %v2014
    %v2016 = vmul.f32 %v1898, 1.442695
    %v2017 = vpow.pop %v2016
    %v2018 = vmul.f32 %v1899, 1.442695
    %v2019 = vpow.pop %v2018
    %v2020 = vmul.f32 %v1900, 1.442695
    %v2021 = vpow.pop %v2020
    %v2022 = vmul.f32 %v1901, 1.442695
    %v2023 = vpow.pop %v2022
    %v2024 = vmul.f32 %v1902, 1.442695
    %v2025 = vpow.pop %v2024
    %v2026 = vmul.f32 %v1903, 1.442695
    %v2027 = vpow.pop %v2026
    %v2028 = vmul.f32 %v1904, 1.442695
    %v2029 = vpow.pop %v2028
    %v2030 = vmul.f32 %v1905, 1.442695
    %v2031 = vpow.pop %v2030
    %v2032 = vmul.f32 %v1906, 1.442695
    %v2033 = vpow.pop %v2032
    %v2034 = vmul.f32 %v1907, 1.442695
    %v2035 = vpow.pop %v2034
    %v2036 = vsel %vm1651, %v1909, 0.0
    %2037 = vadd.xlane.f32.xlu0 %v2036
    %v2038 = vpop.xlane.xlu0 %2037
    %v2039 = vsel %vm1651, %v1911, 0.0
    %2040 = vadd.xlane.f32.xlu0 %v2039
    %v2041 = vpop.xlane.xlu0 %2040
    %v2042 = vsel %vm1651, %v1913, 0.0
    %2043 = vadd.xlane.f32.xlu0 %v2042
    %v2044 = vpop.xlane.xlu0 %2043
    %v2045 = vsel %vm1651, %v1915, 0.0
    %2046 = vadd.xlane.f32.xlu0 %v2045
    %v2047 = vpop.xlane.xlu0 %2046
    %v2048 = vsel %vm1651, %v1917, 0.0
    %2049 = vadd.xlane.f32.xlu0 %v2048
    %v2050 = vpop.xlane.xlu0 %2049
    %v2051 = vsel %vm1651, %v1919, 0.0
    %2052 = vadd.xlane.f32.xlu0 %v2051
    %v2053 = vpop.xlane.xlu0 %2052
    %v2054 = vsel %vm1651, %v1921, 0.0
    %2055 = vadd.xlane.f32.xlu0 %v2054
    %v2056 = vpop.xlane.xlu0 %2055
    %v2057 = vsel %vm1651, %v1923, 0.0
    %2058 = vadd.xlane.f32.xlu0 %v2057
    %v2059 = vpop.xlane.xlu0 %2058
    %v2060 = vsel %vm1651, %v1925, 0.0
    %2061 = vadd.xlane.f32.xlu0 %v2060
    %v2062 = vpop.xlane.xlu0 %2061
    %v2063 = vsel %vm1651, %v1927, 0.0
    %2064 = vadd.xlane.f32.xlu0 %v2063
    %v2065 = vpop.xlane.xlu0 %2064
    %v2066 = vsel %vm1651, %v1929, 0.0
    %2067 = vadd.xlane.f32.xlu0 %v2066
    %v2068 = vpop.xlane.xlu0 %2067
    %v2069 = vsel %vm1651, %v1931, 0.0
    %2070 = vadd.xlane.f32.xlu0 %v2069
    %v2071 = vpop.xlane.xlu0 %2070
    %v2072 = vsel %vm1651, %v1933, 0.0
    %2073 = vadd.xlane.f32.xlu0 %v2072
    %v2074 = vpop.xlane.xlu0 %2073
    %v2075 = vsel %vm1651, %v1935, 0.0
    %2076 = vadd.xlane.f32.xlu0 %v2075
    %v2077 = vpop.xlane.xlu0 %2076
    %v2078 = vsel %vm1651, %v1937, 0.0
    %2079 = vadd.xlane.f32.xlu0 %v2078
    %v2080 = vpop.xlane.xlu0 %2079
    %v2081 = vsel %vm1651, %v1939, 0.0
    %2082 = vadd.xlane.f32.xlu0 %v2081
    %v2083 = vpop.xlane.xlu0 %2082
    %v2084 = vsel %vm1651, %v1941, 0.0
    %2085 = vadd.xlane.f32.xlu0 %v2084
    %v2086 = vpop.xlane.xlu0 %2085
    %v2087 = vsel %vm1651, %v1943, 0.0
    %2088 = vadd.xlane.f32.xlu0 %v2087
    %v2089 = vpop.xlane.xlu0 %2088
    %v2090 = vsel %vm1651, %v1945, 0.0
    %2091 = vadd.xlane.f32.xlu0 %v2090
    %v2092 = vpop.xlane.xlu0 %2091
    %v2093 = vsel %vm1651, %v1947, 0.0
    %2094 = vadd.xlane.f32.xlu0 %v2093
    %v2095 = vpop.xlane.xlu0 %2094
    %v2096 = vsel %vm1651, %v1949, 0.0
    %2097 = vadd.xlane.f32.xlu0 %v2096
    %v2098 = vpop.xlane.xlu0 %2097
    %v2099 = vsel %vm1651, %v1951, 0.0
    %2100 = vadd.xlane.f32.xlu0 %v2099
    %v2101 = vpop.xlane.xlu0 %2100
    %v2102 = vsel %vm1651, %v1953, 0.0
    %2103 = vadd.xlane.f32.xlu0 %v2102
    %v2104 = vpop.xlane.xlu0 %2103
    %v2105 = vsel %vm1651, %v1955, 0.0
    %2106 = vadd.xlane.f32.xlu0 %v2105
    %v2107 = vpop.xlane.xlu0 %2106
    %v2108 = vsel %vm1651, %v1957, 0.0
    %2109 = vadd.xlane.f32.xlu0 %v2108
    %v2110 = vpop.xlane.xlu0 %2109
    %v2111 = vsel %vm1651, %v1959, 0.0
    %2112 = vadd.xlane.f32.xlu0 %v2111
    %v2113 = vpop.xlane.xlu0 %2112
    %v2114 = vsel %vm1651, %v1961, 0.0
    %2115 = vadd.xlane.f32.xlu0 %v2114
    %v2116 = vpop.xlane.xlu0 %2115
    %v2117 = vsel %vm1651, %v1963, 0.0
    %2118 = vadd.xlane.f32.xlu0 %v2117
    %v2119 = vpop.xlane.xlu0 %2118
    %v2120 = vsel %vm1651, %v1965, 0.0
    %2121 = vadd.xlane.f32.xlu0 %v2120
    %v2122 = vpop.xlane.xlu0 %2121
    %v2123 = vsel %vm1651, %v1967, 0.0
    %2124 = vadd.xlane.f32.xlu0 %v2123
    %v2125 = vpop.xlane.xlu0 %2124
    %v2126 = vsel %vm1651, %v1969, 0.0
    %2127 = vadd.xlane.f32.xlu0 %v2126
    %v2128 = vpop.xlane.xlu0 %2127
    %v2129 = vsel %vm1651, %v1971, 0.0
    %2130 = vadd.xlane.f32.xlu0 %v2129
    %v2131 = vpop.xlane.xlu0 %2130
    %v2132 = vsel %vm1651, %v1973, 0.0
    %2133 = vadd.xlane.f32.xlu0 %v2132
    %v2134 = vpop.xlane.xlu0 %2133
    %v2135 = vsel %vm1651, %v1975, 0.0
    %2136 = vadd.xlane.f32.xlu0 %v2135
    %v2137 = vpop.xlane.xlu0 %2136
    %v2138 = vsel %vm1651, %v1977, 0.0
    %2139 = vadd.xlane.f32.xlu0 %v2138
    %v2140 = vpop.xlane.xlu0 %2139
    %v2141 = vsel %vm1651, %v1979, 0.0
    %2142 = vadd.xlane.f32.xlu0 %v2141
    %v2143 = vpop.xlane.xlu0 %2142
    %v2144 = vsel %vm1651, %v1981, 0.0
    %2145 = vadd.xlane.f32.xlu0 %v2144
    %v2146 = vpop.xlane.xlu0 %2145
    %v2147 = vsel %vm1651, %v1983, 0.0
    %2148 = vadd.xlane.f32.xlu0 %v2147
    %v2149 = vpop.xlane.xlu0 %2148
    %v2150 = vsel %vm1651, %v1985, 0.0
    %2151 = vadd.xlane.f32.xlu0 %v2150
    %v2152 = vpop.xlane.xlu0 %2151
    %v2153 = vsel %vm1651, %v1987, 0.0
    %2154 = vadd.xlane.f32.xlu0 %v2153
    %v2155 = vpop.xlane.xlu0 %2154
    %v2156 = vsel %vm1651, %v1989, 0.0
    %2157 = vadd.xlane.f32.xlu0 %v2156
    %v2158 = vpop.xlane.xlu0 %2157
    %v2159 = vsel %vm1651, %v1991, 0.0
    %2160 = vadd.xlane.f32.xlu0 %v2159
    %v2161 = vpop.xlane.xlu0 %2160
    %v2162 = vsel %vm1651, %v1993, 0.0
    %2163 = vadd.xlane.f32.xlu0 %v2162
    %v2164 = vpop.xlane.xlu0 %2163
    %v2165 = vsel %vm1651, %v1995, 0.0
    %2166 = vadd.xlane.f32.xlu0 %v2165
    %v2167 = vpop.xlane.xlu0 %2166
    %v2168 = vsel %vm1651, %v1997, 0.0
    %2169 = vadd.xlane.f32.xlu0 %v2168
    %v2170 = vpop.xlane.xlu0 %2169
    %v2171 = vsel %vm1651, %v1999, 0.0
    %2172 = vadd.xlane.f32.xlu0 %v2171
    %v2173 = vpop.xlane.xlu0 %2172
    %v2174 = vsel %vm1651, %v2001, 0.0
    %2175 = vadd.xlane.f32.xlu0 %v2174
    %v2176 = vpop.xlane.xlu0 %2175
    %v2177 = vsel %vm1651, %v2003, 0.0
    %2178 = vadd.xlane.f32.xlu0 %v2177
    %v2179 = vpop.xlane.xlu0 %2178
    %v2180 = vsel %vm1651, %v2005, 0.0
    %2181 = vadd.xlane.f32.xlu0 %v2180
    %v2182 = vpop.xlane.xlu0 %2181
    %v2183 = vsel %vm1651, %v2007, 0.0
    %2184 = vadd.xlane.f32.xlu0 %v2183
    %v2185 = vpop.xlane.xlu0 %2184
    %v2186 = vsel %vm1651, %v2009, 0.0
    %2187 = vadd.xlane.f32.xlu0 %v2186
    %v2188 = vpop.xlane.xlu0 %2187
    %v2189 = vsel %vm1651, %v2011, 0.0
    %2190 = vadd.xlane.f32.xlu0 %v2189
    %v2191 = vpop.xlane.xlu0 %2190
    %v2192 = vsel %vm1651, %v2013, 0.0
    %2193 = vadd.xlane.f32.xlu0 %v2192
    %v2194 = vpop.xlane.xlu0 %2193
    %v2195 = vsel %vm1651, %v2015, 0.0
    %2196 = vadd.xlane.f32.xlu0 %v2195
    %v2197 = vpop.xlane.xlu0 %2196
    %v2198 = vsel %vm1651, %v2017, 0.0
    %2199 = vadd.xlane.f32.xlu0 %v2198
    %v2200 = vpop.xlane.xlu0 %2199
    %v2201 = vsel %vm1651, %v2019, 0.0
    %2202 = vadd.xlane.f32.xlu0 %v2201
    %v2203 = vpop.xlane.xlu0 %2202
    %v2204 = vsel %vm1651, %v2021, 0.0
    %2205 = vadd.xlane.f32.xlu0 %v2204
    %v2206 = vpop.xlane.xlu0 %2205
    %v2207 = vsel %vm1651, %v2023, 0.0
    %2208 = vadd.xlane.f32.xlu0 %v2207
    %v2209 = vpop.xlane.xlu0 %2208
    %v2210 = vsel %vm1651, %v2025, 0.0
    %2211 = vadd.xlane.f32.xlu0 %v2210
    %v2212 = vpop.xlane.xlu0 %2211
    %v2213 = vsel %vm1651, %v2027, 0.0
    %2214 = vadd.xlane.f32.xlu0 %v2213
    %v2215 = vpop.xlane.xlu0 %2214
    %v2216 = vsel %vm1651, %v2029, 0.0
    %2217 = vadd.xlane.f32.xlu0 %v2216
    %v2218 = vpop.xlane.xlu0 %2217
    %v2219 = vsel %vm1651, %v2031, 0.0
    %2220 = vadd.xlane.f32.xlu0 %v2219
    %v2221 = vpop.xlane.xlu0 %2220
    %v2222 = vsel %vm1651, %v2033, 0.0
    %2223 = vadd.xlane.f32.xlu0 %v2222
    %v2224 = vpop.xlane.xlu0 %2223
    %v2225 = vsel %vm1651, %v2035, 0.0
    %2226 = vadd.xlane.f32.xlu0 %v2225
    %v2227 = vpop.xlane.xlu0 %2226
    %v2228 = vrcp.pop %v2038
    %v2229 = vrcp.pop %v2041
    %v2230 = vrcp.pop %v2044
    %v2231 = vrcp.pop %v2047
    %v2232 = vrcp.pop %v2050
    %v2233 = vrcp.pop %v2053
    %v2234 = vrcp.pop %v2056
    %v2235 = vrcp.pop %v2059
    %v2236 = vrcp.pop %v2062
    %v2237 = vrcp.pop %v2065
    %v2238 = vrcp.pop %v2068
    %v2239 = vrcp.pop %v2071
    %v2240 = vrcp.pop %v2074
    %v2241 = vrcp.pop %v2077
    %v2242 = vrcp.pop %v2080
    %v2243 = vrcp.pop %v2083
    %v2244 = vrcp.pop %v2086
    %v2245 = vrcp.pop %v2089
    %v2246 = vrcp.pop %v2092
    %v2247 = vrcp.pop %v2095
    %v2248 = vrcp.pop %v2098
    %v2249 = vrcp.pop %v2101
    %v2250 = vrcp.pop %v2104
    %v2251 = vrcp.pop %v2107
    %v2252 = vrcp.pop %v2110
    %v2253 = vrcp.pop %v2113
    %v2254 = vrcp.pop %v2116
    %v2255 = vrcp.pop %v2119
    %v2256 = vrcp.pop %v2122
    %v2257 = vrcp.pop %v2125
    %v2258 = vrcp.pop %v2128
    %v2259 = vrcp.pop %v2131
    %v2260 = vrcp.pop %v2134
    %v2261 = vrcp.pop %v2137
    %v2262 = vrcp.pop %v2140
    %v2263 = vrcp.pop %v2143
    %v2264 = vrcp.pop %v2146
    %v2265 = vrcp.pop %v2149
    %v2266 = vrcp.pop %v2152
    %v2267 = vrcp.pop %v2155
    %v2268 = vrcp.pop %v2158
    %v2269 = vrcp.pop %v2161
    %v2270 = vrcp.pop %v2164
    %v2271 = vrcp.pop %v2167
    %v2272 = vrcp.pop %v2170
    %v2273 = vrcp.pop %v2173
    %v2274 = vrcp.pop %v2176
    %v2275 = vrcp.pop %v2179
    %v2276 = vrcp.pop %v2182
    %v2277 = vrcp.pop %v2185
    %v2278 = vrcp.pop %v2188
    %v2279 = vrcp.pop %v2191
    %v2280 = vrcp.pop %v2194
    %v2281 = vrcp.pop %v2197
    %v2282 = vrcp.pop %v2200
    %v2283 = vrcp.pop %v2203
    %v2284 = vrcp.pop %v2206
    %v2285 = vrcp.pop %v2209
    %v2286 = vrcp.pop %v2212
    %v2287 = vrcp.pop %v2215
    %v2288 = vrcp.pop %v2218
    %v2289 = vrcp.pop %v2221
    %v2290 = vrcp.pop %v2224
    %v2291 = vrcp.pop %v2227
    %v2292 = vmul.f32 %v1909, %v2228
    %v2293 = vmul.f32 %v1911, %v2229
    %v2294 = vmul.f32 %v1913, %v2230
    %v2295 = vmul.f32 %v1915, %v2231
    %v2296 = vmul.f32 %v1917, %v2232
    %v2297 = vmul.f32 %v1919, %v2233
    %v2298 = vmul.f32 %v1921, %v2234
    %v2299 = vmul.f32 %v1923, %v2235
    %v2300 = vmul.f32 %v1925, %v2236
    %v2301 = vmul.f32 %v1927, %v2237
    %v2302 = vmul.f32 %v1929, %v2238
    %v2303 = vmul.f32 %v1931, %v2239
    %v2304 = vmul.f32 %v1933, %v2240
    %v2305 = vmul.f32 %v1935, %v2241
    %v2306 = vmul.f32 %v1937, %v2242
    %v2307 = vmul.f32 %v1939, %v2243
    %v2308 = vmul.f32 %v1941, %v2244
    %v2309 = vmul.f32 %v1943, %v2245
    %v2310 = vmul.f32 %v1945, %v2246
    %v2311 = vmul.f32 %v1947, %v2247
    %v2312 = vmul.f32 %v1949, %v2248
    %v2313 = vmul.f32 %v1951, %v2249
    %v2314 = vmul.f32 %v1953, %v2250
    %v2315 = vmul.f32 %v1955, %v2251
    %v2316 = vmul.f32 %v1957, %v2252
    %v2317 = vmul.f32 %v1959, %v2253
    %v2318 = vmul.f32 %v1961, %v2254
    %v2319 = vmul.f32 %v1963, %v2255
    %v2320 = vmul.f32 %v1965, %v2256
    %v2321 = vmul.f32 %v1967, %v2257
    %v2322 = vmul.f32 %v1969, %v2258
    %v2323 = vmul.f32 %v1971, %v2259
    %v2324 = vmul.f32 %v1973, %v2260
    %v2325 = vmul.f32 %v1975, %v2261
    %v2326 = vmul.f32 %v1977, %v2262
    %v2327 = vmul.f32 %v1979, %v2263
    %v2328 = vmul.f32 %v1981, %v2264
    %v2329 = vmul.f32 %v1983, %v2265
    %v2330 = vmul.f32 %v1985, %v2266
    %v2331 = vmul.f32 %v1987, %v2267
    %v2332 = vmul.f32 %v1989, %v2268
    %v2333 = vmul.f32 %v1991, %v2269
    %v2334 = vmul.f32 %v1993, %v2270
    %v2335 = vmul.f32 %v1995, %v2271
    %v2336 = vmul.f32 %v1997, %v2272
    %v2337 = vmul.f32 %v1999, %v2273
    %v2338 = vmul.f32 %v2001, %v2274
    %v2339 = vmul.f32 %v2003, %v2275
    %v2340 = vmul.f32 %v2005, %v2276
    %v2341 = vmul.f32 %v2007, %v2277
    %v2342 = vmul.f32 %v2009, %v2278
    %v2343 = vmul.f32 %v2011, %v2279
    %v2344 = vmul.f32 %v2013, %v2280
    %v2345 = vmul.f32 %v2015, %v2281
    %v2346 = vmul.f32 %v2017, %v2282
    %v2347 = vmul.f32 %v2019, %v2283
    %v2348 = vmul.f32 %v2021, %v2284
    %v2349 = vmul.f32 %v2023, %v2285
    %v2350 = vmul.f32 %v2025, %v2286
    %v2351 = vmul.f32 %v2027, %v2287
    %v2352 = vmul.f32 %v2029, %v2288
    %v2353 = vmul.f32 %v2031, %v2289
    %v2354 = vmul.f32 %v2033, %v2290
    %v2355 = vmul.f32 %v2035, %v2291
    %v2356 = vpack.c.bf16 %v2293, %v2292
    %v2357 = vpack.c.bf16 %v2295, %v2294
    %v2358 = vpack.c.bf16 %v2297, %v2296
    %v2359 = vpack.c.bf16 %v2299, %v2298
    %v2360 = vpack.c.bf16 %v2301, %v2300
    %v2361 = vpack.c.bf16 %v2303, %v2302
    %v2362 = vpack.c.bf16 %v2305, %v2304
    %v2363 = vpack.c.bf16 %v2307, %v2306
    %v2364 = vpack.c.bf16 %v2309, %v2308
    %v2365 = vpack.c.bf16 %v2311, %v2310
    %v2366 = vpack.c.bf16 %v2313, %v2312
    %v2367 = vpack.c.bf16 %v2315, %v2314
    %v2368 = vpack.c.bf16 %v2317, %v2316
    %v2369 = vpack.c.bf16 %v2319, %v2318
    %v2370 = vpack.c.bf16 %v2321, %v2320
    %v2371 = vpack.c.bf16 %v2323, %v2322
    %v2372 = vpack.c.bf16 %v2325, %v2324
    %v2373 = vpack.c.bf16 %v2327, %v2326
    %v2374 = vpack.c.bf16 %v2329, %v2328
    %v2375 = vpack.c.bf16 %v2331, %v2330
    %v2376 = vpack.c.bf16 %v2333, %v2332
    %v2377 = vpack.c.bf16 %v2335, %v2334
    %v2378 = vpack.c.bf16 %v2337, %v2336
    %v2379 = vpack.c.bf16 %v2339, %v2338
    %v2380 = vpack.c.bf16 %v2341, %v2340
    %v2381 = vpack.c.bf16 %v2343, %v2342
    %v2382 = vpack.c.bf16 %v2345, %v2344
    %v2383 = vpack.c.bf16 %v2347, %v2346
    %v2384 = vpack.c.bf16 %v2349, %v2348
    %v2385 = vpack.c.bf16 %v2351, %v2350
    %v2386 = vpack.c.bf16 %v2353, %v2352
    %v2387 = vpack.c.bf16 %v2355, %v2354
    %2388 = vrot.lane.b32.xlu0 %v810, 64
    %v2389 = vpop.permute.xlu0 %2388
    %2390 = vrot.lane.b32.xlu0 %v811, 64
    %v2391 = vpop.permute.xlu0 %2390
    %2392 = vrot.lane.b32.xlu0 %v812, 64
    %v2393 = vpop.permute.xlu0 %2392
    %2394 = vrot.lane.b32.xlu0 %v813, 64
    %v2395 = vpop.permute.xlu0 %2394
    %v2401 = vsel %vm1651, %v2356, 0
    %v2404 = vsel %vm1651, %v2357, 0
    %v2407 = vsel %vm1651, %v2358, 0
    %v2410 = vsel %vm1651, %v2359, 0
    %2412 = vmatprep.subr.bf16.mxu0 0
    %2413 = vmatpush1.bf16.msra.mxu0 0
    %2414 = vmatprep.subr.bf16.mxu0 0
    %2415 = vmatpush1.bf16.msra.mxu0 0
    %2416 = vmatprep.subr.bf16.mxu0 0
    %2417 = vmatpush1.bf16.msra.mxu0 0
    %2418 = vmatprep.subr.bf16.mxu0 0
    %2419 = vmatpush1.bf16.msra.mxu0 0
    %2420 = vmatprep.subr.bf16.mxu0 0
    %2421 = vmatpush1.bf16.msra.mxu0 %v2395
    %2422 = vmatprep.subr.bf16.mxu0 0
    %2423 = vmatpush1.bf16.msra.mxu0 %v2393
    %2424 = vmatprep.subr.bf16.mxu0 0
    %2425 = vmatpush1.bf16.msra.mxu0 %v2391
    %2426 = vmatprep.subr.bf16.mxu0 0
    %2427 = vmatpush1.bf16.msra.mxu0 %v2389
    %2428 = vmatprep.subr.bf16.mxu0 0
    %2429 = vmatpush2.bf16.msra.mxu0 0
    %2430 = vmatprep.subr.bf16.mxu0 0
    %2431 = vmatpush2.bf16.msra.mxu0 0
    %2432 = vmatprep.subr.bf16.mxu0 0
    %2433 = vmatpush2.bf16.msra.mxu0 0
    %2434 = vmatprep.subr.bf16.mxu0 0
    %2435 = vmatpush2.bf16.msra.mxu0 0
    %2436 = vmatprep.subr.bf16.mxu0 0
    %2437 = vmatpush2.bf16.msra.mxu0 0
    %2438 = vmatprep.subr.bf16.mxu0 0
    %2439 = vmatpush2.bf16.msra.mxu0 0
    %2440 = vmatprep.subr.bf16.mxu0 0
    %2441 = vmatpush2.bf16.msra.mxu0 0
    %2442 = vmatprep.subr.bf16.mxu0 0
    %2443 = vmatpush2.bf16.msra.mxu0 0
    %2444 = vmatprep.mubr.bf16.mxu0 0
    %2445 = vmatmul.mubr.bf16.gmra.mxu0 %v2401
    %v2446 = vpop.f32.mrf.mxu0
    %v2447 = vadd.f32 0.0, %v2446
    %v2448 = vpop.f32.mrf.mxu0
    %v2449 = vpop.f32.mrf.mxu0
    %v2450 = vadd.f32 0.0, %v2449
    %v2451 = vpop.f32.mrf.mxu0
    %2452 = vmatprep.mubr.bf16.mxu0 0
    %2453 = vmatmul.mubr.bf16.gmra.mxu0 %v2404
    %v2454 = vpop.f32.mrf.mxu0
    %v2455 = vadd.f32 0.0, %v2454
    %v2456 = vpop.f32.mrf.mxu0
    %v2457 = vpop.f32.mrf.mxu0
    %v2458 = vadd.f32 0.0, %v2457
    %v2459 = vpop.f32.mrf.mxu0
    %2460 = vmatprep.mubr.bf16.mxu0 0
    %2461 = vmatmul.mubr.bf16.gmra.mxu0 %v2407
    %v2462 = vpop.f32.mrf.mxu0
    %v2463 = vadd.f32 0.0, %v2462
    %v2464 = vpop.f32.mrf.mxu0
    %v2465 = vpop.f32.mrf.mxu0
    %v2466 = vadd.f32 0.0, %v2465
    %v2467 = vpop.f32.mrf.mxu0
    %2468 = vmatprep.mubr.bf16.mxu0 0
    %2469 = vmatmul.mubr.bf16.gmra.mxu0 %v2410
    %v2470 = vpop.f32.mrf.mxu0
    %v2471 = vadd.f32 0.0, %v2470
    %v2472 = vpop.f32.mrf.mxu0
    %v2473 = vpop.f32.mrf.mxu0
    %v2474 = vadd.f32 0.0, %v2473
    %v2475 = vpop.f32.mrf.mxu0
    %2476 = vdwg.mxu0
    %2477 = vrot.lane.b32.xlu0 %v814, 64
    %v2478 = vpop.permute.xlu0 %2477
    %2479 = vrot.lane.b32.xlu0 %v815, 64
    %v2480 = vpop.permute.xlu0 %2479
    %2481 = vrot.lane.b32.xlu0 %v816, 64
    %v2482 = vpop.permute.xlu0 %2481
    %2483 = vrot.lane.b32.xlu0 %v817, 64
    %v2484 = vpop.permute.xlu0 %2483
    %v2490 = vsel %vm1651, %v2360, 0
    %v2493 = vsel %vm1651, %v2361, 0
    %v2496 = vsel %vm1651, %v2362, 0
    %v2499 = vsel %vm1651, %v2363, 0
    %2501 = vmatprep.subr.bf16.mxu0 0
    %2502 = vmatpush1.bf16.msra.mxu0 0
    %2503 = vmatprep.subr.bf16.mxu0 0
    %2504 = vmatpush1.bf16.msra.mxu0 0
    %2505 = vmatprep.subr.bf16.mxu0 0
    %2506 = vmatpush1.bf16.msra.mxu0 0
    %2507 = vmatprep.subr.bf16.mxu0 0
    %2508 = vmatpush1.bf16.msra.mxu0 0
    %2509 = vmatprep.subr.bf16.mxu0 0
    %2510 = vmatpush1.bf16.msra.mxu0 %v2484
    %2511 = vmatprep.subr.bf16.mxu0 0
    %2512 = vmatpush1.bf16.msra.mxu0 %v2482
    %2513 = vmatprep.subr.bf16.mxu0 0
    %2514 = vmatpush1.bf16.msra.mxu0 %v2480
    %2515 = vmatprep.subr.bf16.mxu0 0
    %2516 = vmatpush1.bf16.msra.mxu0 %v2478
    %2517 = vmatprep.subr.bf16.mxu0 0
    %2518 = vmatpush2.bf16.msra.mxu0 0
    %2519 = vmatprep.subr.bf16.mxu0 0
    %2520 = vmatpush2.bf16.msra.mxu0 0
    %2521 = vmatprep.subr.bf16.mxu0 0
    %2522 = vmatpush2.bf16.msra.mxu0 0
    %2523 = vmatprep.subr.bf16.mxu0 0
    %2524 = vmatpush2.bf16.msra.mxu0 0
    %2525 = vmatprep.subr.bf16.mxu0 0
    %2526 = vmatpush2.bf16.msra.mxu0 0
    %2527 = vmatprep.subr.bf16.mxu0 0
    %2528 = vmatpush2.bf16.msra.mxu0 0
    %2529 = vmatprep.subr.bf16.mxu0 0
    %2530 = vmatpush2.bf16.msra.mxu0 0
    %2531 = vmatprep.subr.bf16.mxu0 0
    %2532 = vmatpush2.bf16.msra.mxu0 0
    %2533 = vmatprep.mubr.bf16.mxu0 0
    %2534 = vmatmul.mubr.bf16.gmra.mxu0 %v2490
    %v2535 = vpop.f32.mrf.mxu0
    %v2536 = vadd.f32 0.0, %v2535
    %v2537 = vpop.f32.mrf.mxu0
    %v2538 = vpop.f32.mrf.mxu0
    %v2539 = vadd.f32 0.0, %v2538
    %v2540 = vpop.f32.mrf.mxu0
    %2541 = vmatprep.mubr.bf16.mxu0 0
    %2542 = vmatmul.mubr.bf16.gmra.mxu0 %v2493
    %v2543 = vpop.f32.mrf.mxu0
    %v2544 = vadd.f32 0.0, %v2543
    %v2545 = vpop.f32.mrf.mxu0
    %v2546 = vpop.f32.mrf.mxu0
    %v2547 = vadd.f32 0.0, %v2546
    %v2548 = vpop.f32.mrf.mxu0
    %2549 = vmatprep.mubr.bf16.mxu0 0
    %2550 = vmatmul.mubr.bf16.gmra.mxu0 %v2496
    %v2551 = vpop.f32.mrf.mxu0
    %v2552 = vadd.f32 0.0, %v2551
    %v2553 = vpop.f32.mrf.mxu0
    %v2554 = vpop.f32.mrf.mxu0
    %v2555 = vadd.f32 0.0, %v2554
    %v2556 = vpop.f32.mrf.mxu0
    %2557 = vmatprep.mubr.bf16.mxu0 0
    %2558 = vmatmul.mubr.bf16.gmra.mxu0 %v2499
    %v2559 = vpop.f32.mrf.mxu0
    %v2560 = vadd.f32 0.0, %v2559
    %v2561 = vpop.f32.mrf.mxu0
    %v2562 = vpop.f32.mrf.mxu0
    %v2563 = vadd.f32 0.0, %v2562
    %v2564 = vpop.f32.mrf.mxu0
    %2565 = vdwg.mxu0
    %2566 = vrot.lane.b32.xlu0 %v818, 64
    %v2567 = vpop.permute.xlu0 %2566
    %2568 = vrot.lane.b32.xlu0 %v819, 64
    %v2569 = vpop.permute.xlu0 %2568
    %2570 = vrot.lane.b32.xlu0 %v820, 64
    %v2571 = vpop.permute.xlu0 %2570
    %2572 = vrot.lane.b32.xlu0 %v821, 64
    %v2573 = vpop.permute.xlu0 %2572
    %v2579 = vsel %vm1651, %v2364, 0
    %v2582 = vsel %vm1651, %v2365, 0
    %v2585 = vsel %vm1651, %v2366, 0
    %v2588 = vsel %vm1651, %v2367, 0
    %2590 = vmatprep.subr.bf16.mxu0 0
    %2591 = vmatpush1.bf16.msra.mxu0 0
    %2592 = vmatprep.subr.bf16.mxu0 0
    %2593 = vmatpush1.bf16.msra.mxu0 0
    %2594 = vmatprep.subr.bf16.mxu0 0
    %2595 = vmatpush1.bf16.msra.mxu0 0
    %2596 = vmatprep.subr.bf16.mxu0 0
    %2597 = vmatpush1.bf16.msra.mxu0 0
    %2598 = vmatprep.subr.bf16.mxu0 0
    %2599 = vmatpush1.bf16.msra.mxu0 %v2573
    %2600 = vmatprep.subr.bf16.mxu0 0
    %2601 = vmatpush1.bf16.msra.mxu0 %v2571
    %2602 = vmatprep.subr.bf16.mxu0 0
    %2603 = vmatpush1.bf16.msra.mxu0 %v2569
    %2604 = vmatprep.subr.bf16.mxu0 0
    %2605 = vmatpush1.bf16.msra.mxu0 %v2567
    %2606 = vmatprep.subr.bf16.mxu0 0
    %2607 = vmatpush2.bf16.msra.mxu0 0
    %2608 = vmatprep.subr.bf16.mxu0 0
    %2609 = vmatpush2.bf16.msra.mxu0 0
    %2610 = vmatprep.subr.bf16.mxu0 0
    %2611 = vmatpush2.bf16.msra.mxu0 0
    %2612 = vmatprep.subr.bf16.mxu0 0
    %2613 = vmatpush2.bf16.msra.mxu0 0
    %2614 = vmatprep.subr.bf16.mxu0 0
    %2615 = vmatpush2.bf16.msra.mxu0 0
    %2616 = vmatprep.subr.bf16.mxu0 0
    %2617 = vmatpush2.bf16.msra.mxu0 0
    %2618 = vmatprep.subr.bf16.mxu0 0
    %2619 = vmatpush2.bf16.msra.mxu0 0
    %2620 = vmatprep.subr.bf16.mxu0 0
    %2621 = vmatpush2.bf16.msra.mxu0 0
    %2622 = vmatprep.mubr.bf16.mxu0 0
    %2623 = vmatmul.mubr.bf16.gmra.mxu0 %v2579
    %v2624 = vpop.f32.mrf.mxu0
    %v2625 = vadd.f32 0.0, %v2624
    %v2626 = vpop.f32.mrf.mxu0
    %v2627 = vpop.f32.mrf.mxu0
    %v2628 = vadd.f32 0.0, %v2627
    %v2629 = vpop.f32.mrf.mxu0
    %2630 = vmatprep.mubr.bf16.mxu0 0
    %2631 = vmatmul.mubr.bf16.gmra.mxu0 %v2582
    %v2632 = vpop.f32.mrf.mxu0
    %v2633 = vadd.f32 0.0, %v2632
    %v2634 = vpop.f32.mrf.mxu0
    %v2635 = vpop.f32.mrf.mxu0
    %v2636 = vadd.f32 0.0, %v2635
    %v2637 = vpop.f32.mrf.mxu0
    %2638 = vmatprep.mubr.bf16.mxu0 0
    %2639 = vmatmul.mubr.bf16.gmra.mxu0 %v2585
    %v2640 = vpop.f32.mrf.mxu0
    %v2641 = vadd.f32 0.0, %v2640
    %v2642 = vpop.f32.mrf.mxu0
    %v2643 = vpop.f32.mrf.mxu0
    %v2644 = vadd.f32 0.0, %v2643
    %v2645 = vpop.f32.mrf.mxu0
    %2646 = vmatprep.mubr.bf16.mxu0 0
    %2647 = vmatmul.mubr.bf16.gmra.mxu0 %v2588
    %v2648 = vpop.f32.mrf.mxu0
    %v2649 = vadd.f32 0.0, %v2648
    %v2650 = vpop.f32.mrf.mxu0
    %v2651 = vpop.f32.mrf.mxu0
    %v2652 = vadd.f32 0.0, %v2651
    %v2653 = vpop.f32.mrf.mxu0
    %2654 = vdwg.mxu0
    %2655 = vrot.lane.b32.xlu0 %v822, 64
    %v2656 = vpop.permute.xlu0 %2655
    %2657 = vrot.lane.b32.xlu0 %v823, 64
    %v2658 = vpop.permute.xlu0 %2657
    %2659 = vrot.lane.b32.xlu0 %v824, 64
    %v2660 = vpop.permute.xlu0 %2659
    %2661 = vrot.lane.b32.xlu0 %v825, 64
    %v2662 = vpop.permute.xlu0 %2661
    %v2668 = vsel %vm1651, %v2368, 0
    %v2671 = vsel %vm1651, %v2369, 0
    %v2674 = vsel %vm1651, %v2370, 0
    %v2677 = vsel %vm1651, %v2371, 0
    %2679 = vmatprep.subr.bf16.mxu0 0
    %2680 = vmatpush1.bf16.msra.mxu0 0
    %2681 = vmatprep.subr.bf16.mxu0 0
    %2682 = vmatpush1.bf16.msra.mxu0 0
    %2683 = vmatprep.subr.bf16.mxu0 0
    %2684 = vmatpush1.bf16.msra.mxu0 0
    %2685 = vmatprep.subr.bf16.mxu0 0
    %2686 = vmatpush1.bf16.msra.mxu0 0
    %2687 = vmatprep.subr.bf16.mxu0 0
    %2688 = vmatpush1.bf16.msra.mxu0 %v2662
    %2689 = vmatprep.subr.bf16.mxu0 0
    %2690 = vmatpush1.bf16.msra.mxu0 %v2660
    %2691 = vmatprep.subr.bf16.mxu0 0
    %2692 = vmatpush1.bf16.msra.mxu0 %v2658
    %2693 = vmatprep.subr.bf16.mxu0 0
    %2694 = vmatpush1.bf16.msra.mxu0 %v2656
    %2695 = vmatprep.subr.bf16.mxu0 0
    %2696 = vmatpush2.bf16.msra.mxu0 0
    %2697 = vmatprep.subr.bf16.mxu0 0
    %2698 = vmatpush2.bf16.msra.mxu0 0
    %2699 = vmatprep.subr.bf16.mxu0 0
    %2700 = vmatpush2.bf16.msra.mxu0 0
    %2701 = vmatprep.subr.bf16.mxu0 0
    %2702 = vmatpush2.bf16.msra.mxu0 0
    %2703 = vmatprep.subr.bf16.mxu0 0
    %2704 = vmatpush2.bf16.msra.mxu0 0
    %2705 = vmatprep.subr.bf16.mxu0 0
    %2706 = vmatpush2.bf16.msra.mxu0 0
    %2707 = vmatprep.subr.bf16.mxu0 0
    %2708 = vmatpush2.bf16.msra.mxu0 0
    %2709 = vmatprep.subr.bf16.mxu0 0
    %2710 = vmatpush2.bf16.msra.mxu0 0
    %2711 = vmatprep.mubr.bf16.mxu0 0
    %2712 = vmatmul.mubr.bf16.gmra.mxu0 %v2668
    %v2713 = vpop.f32.mrf.mxu0
    %v2714 = vadd.f32 0.0, %v2713
    %v2715 = vpop.f32.mrf.mxu0
    %v2716 = vpop.f32.mrf.mxu0
    %v2717 = vadd.f32 0.0, %v2716
    %v2718 = vpop.f32.mrf.mxu0
    %2719 = vmatprep.mubr.bf16.mxu0 0
    %2720 = vmatmul.mubr.bf16.gmra.mxu0 %v2671
    %v2721 = vpop.f32.mrf.mxu0
    %v2722 = vadd.f32 0.0, %v2721
    %v2723 = vpop.f32.mrf.mxu0
    %v2724 = vpop.f32.mrf.mxu0
    %v2725 = vadd.f32 0.0, %v2724
    %v2726 = vpop.f32.mrf.mxu0
    %2727 = vmatprep.mubr.bf16.mxu0 0
    %2728 = vmatmul.mubr.bf16.gmra.mxu0 %v2674
    %v2729 = vpop.f32.mrf.mxu0
    %v2730 = vadd.f32 0.0, %v2729
    %v2731 = vpop.f32.mrf.mxu0
    %v2732 = vpop.f32.mrf.mxu0
    %v2733 = vadd.f32 0.0, %v2732
    %v2734 = vpop.f32.mrf.mxu0
    %2735 = vmatprep.mubr.bf16.mxu0 0
    %2736 = vmatmul.mubr.bf16.gmra.mxu0 %v2677
    %v2737 = vpop.f32.mrf.mxu0
    %v2738 = vadd.f32 0.0, %v2737
    %v2739 = vpop.f32.mrf.mxu0
    %v2740 = vpop.f32.mrf.mxu0
    %v2741 = vadd.f32 0.0, %v2740
    %v2742 = vpop.f32.mrf.mxu0
    %2743 = vdwg.mxu0
    %2744 = vrot.lane.b32.xlu0 %v826, 64
    %v2745 = vpop.permute.xlu0 %2744
    %2746 = vrot.lane.b32.xlu0 %v827, 64
    %v2747 = vpop.permute.xlu0 %2746
    %2748 = vrot.lane.b32.xlu0 %v828, 64
    %v2749 = vpop.permute.xlu0 %2748
    %2750 = vrot.lane.b32.xlu0 %v829, 64
    %v2751 = vpop.permute.xlu0 %2750
    %v2757 = vsel %vm1651, %v2372, 0
    %v2760 = vsel %vm1651, %v2373, 0
    %v2763 = vsel %vm1651, %v2374, 0
    %v2766 = vsel %vm1651, %v2375, 0
    %2768 = vmatprep.subr.bf16.mxu0 0
    %2769 = vmatpush1.bf16.msra.mxu0 0
    %2770 = vmatprep.subr.bf16.mxu0 0
    %2771 = vmatpush1.bf16.msra.mxu0 0
    %2772 = vmatprep.subr.bf16.mxu0 0
    %2773 = vmatpush1.bf16.msra.mxu0 0
    %2774 = vmatprep.subr.bf16.mxu0 0
    %2775 = vmatpush1.bf16.msra.mxu0 0
    %2776 = vmatprep.subr.bf16.mxu0 0
    %2777 = vmatpush1.bf16.msra.mxu0 %v2751
    %2778 = vmatprep.subr.bf16.mxu0 0
    %2779 = vmatpush1.bf16.msra.mxu0 %v2749
    %2780 = vmatprep.subr.bf16.mxu0 0
    %2781 = vmatpush1.bf16.msra.mxu0 %v2747
    %2782 = vmatprep.subr.bf16.mxu0 0
    %2783 = vmatpush1.bf16.msra.mxu0 %v2745
    %2784 = vmatprep.subr.bf16.mxu0 0
    %2785 = vmatpush2.bf16.msra.mxu0 0
    %2786 = vmatprep.subr.bf16.mxu0 0
    %2787 = vmatpush2.bf16.msra.mxu0 0
    %2788 = vmatprep.subr.bf16.mxu0 0
    %2789 = vmatpush2.bf16.msra.mxu0 0
    %2790 = vmatprep.subr.bf16.mxu0 0
    %2791 = vmatpush2.bf16.msra.mxu0 0
    %2792 = vmatprep.subr.bf16.mxu0 0
    %2793 = vmatpush2.bf16.msra.mxu0 0
    %2794 = vmatprep.subr.bf16.mxu0 0
    %2795 = vmatpush2.bf16.msra.mxu0 0
    %2796 = vmatprep.subr.bf16.mxu0 0
    %2797 = vmatpush2.bf16.msra.mxu0 0
    %2798 = vmatprep.subr.bf16.mxu0 0
    %2799 = vmatpush2.bf16.msra.mxu0 0
    %2800 = vmatprep.mubr.bf16.mxu0 0
    %2801 = vmatmul.mubr.bf16.gmra.mxu0 %v2757
    %v2802 = vpop.f32.mrf.mxu0
    %v2803 = vadd.f32 0.0, %v2802
    %v2804 = vpop.f32.mrf.mxu0
    %v2805 = vpop.f32.mrf.mxu0
    %v2806 = vadd.f32 0.0, %v2805
    %v2807 = vpop.f32.mrf.mxu0
    %2808 = vmatprep.mubr.bf16.mxu0 0
    %2809 = vmatmul.mubr.bf16.gmra.mxu0 %v2760
    %v2810 = vpop.f32.mrf.mxu0
    %v2811 = vadd.f32 0.0, %v2810
    %v2812 = vpop.f32.mrf.mxu0
    %v2813 = vpop.f32.mrf.mxu0
    %v2814 = vadd.f32 0.0, %v2813
    %v2815 = vpop.f32.mrf.mxu0
    %2816 = vmatprep.mubr.bf16.mxu0 0
    %2817 = vmatmul.mubr.bf16.gmra.mxu0 %v2763
    %v2818 = vpop.f32.mrf.mxu0
    %v2819 = vadd.f32 0.0, %v2818
    %v2820 = vpop.f32.mrf.mxu0
    %v2821 = vpop.f32.mrf.mxu0
    %v2822 = vadd.f32 0.0, %v2821
    %v2823 = vpop.f32.mrf.mxu0
    %2824 = vmatprep.mubr.bf16.mxu0 0
    %2825 = vmatmul.mubr.bf16.gmra.mxu0 %v2766
    %v2826 = vpop.f32.mrf.mxu0
    %v2827 = vadd.f32 0.0, %v2826
    %v2828 = vpop.f32.mrf.mxu0
    %v2829 = vpop.f32.mrf.mxu0
    %v2830 = vadd.f32 0.0, %v2829
    %v2831 = vpop.f32.mrf.mxu0
    %2832 = vdwg.mxu0
    %2833 = vrot.lane.b32.xlu0 %v830, 64
    %v2834 = vpop.permute.xlu0 %2833
    %2835 = vrot.lane.b32.xlu0 %v831, 64
    %v2836 = vpop.permute.xlu0 %2835
    %2837 = vrot.lane.b32.xlu0 %v832, 64
    %v2838 = vpop.permute.xlu0 %2837
    %2839 = vrot.lane.b32.xlu0 %v833, 64
    %v2840 = vpop.permute.xlu0 %2839
    %v2846 = vsel %vm1651, %v2376, 0
    %v2849 = vsel %vm1651, %v2377, 0
    %v2852 = vsel %vm1651, %v2378, 0
    %v2855 = vsel %vm1651, %v2379, 0
    %2857 = vmatprep.subr.bf16.mxu0 0
    %2858 = vmatpush1.bf16.msra.mxu0 0
    %2859 = vmatprep.subr.bf16.mxu0 0
    %2860 = vmatpush1.bf16.msra.mxu0 0
    %2861 = vmatprep.subr.bf16.mxu0 0
    %2862 = vmatpush1.bf16.msra.mxu0 0
    %2863 = vmatprep.subr.bf16.mxu0 0
    %2864 = vmatpush1.bf16.msra.mxu0 0
    %2865 = vmatprep.subr.bf16.mxu0 0
    %2866 = vmatpush1.bf16.msra.mxu0 %v2840
    %2867 = vmatprep.subr.bf16.mxu0 0
    %2868 = vmatpush1.bf16.msra.mxu0 %v2838
    %2869 = vmatprep.subr.bf16.mxu0 0
    %2870 = vmatpush1.bf16.msra.mxu0 %v2836
    %2871 = vmatprep.subr.bf16.mxu0 0
    %2872 = vmatpush1.bf16.msra.mxu0 %v2834
    %2873 = vmatprep.subr.bf16.mxu0 0
    %2874 = vmatpush2.bf16.msra.mxu0 0
    %2875 = vmatprep.subr.bf16.mxu0 0
    %2876 = vmatpush2.bf16.msra.mxu0 0
    %2877 = vmatprep.subr.bf16.mxu0 0
    %2878 = vmatpush2.bf16.msra.mxu0 0
    %2879 = vmatprep.subr.bf16.mxu0 0
    %2880 = vmatpush2.bf16.msra.mxu0 0
    %2881 = vmatprep.subr.bf16.mxu0 0
    %2882 = vmatpush2.bf16.msra.mxu0 0
    %2883 = vmatprep.subr.bf16.mxu0 0
    %2884 = vmatpush2.bf16.msra.mxu0 0
    %2885 = vmatprep.subr.bf16.mxu0 0
    %2886 = vmatpush2.bf16.msra.mxu0 0
    %2887 = vmatprep.subr.bf16.mxu0 0
    %2888 = vmatpush2.bf16.msra.mxu0 0
    %2889 = vmatprep.mubr.bf16.mxu0 0
    %2890 = vmatmul.mubr.bf16.gmra.mxu0 %v2846
    %v2891 = vpop.f32.mrf.mxu0
    %v2892 = vadd.f32 0.0, %v2891
    %v2893 = vpop.f32.mrf.mxu0
    %v2894 = vpop.f32.mrf.mxu0
    %v2895 = vadd.f32 0.0, %v2894
    %v2896 = vpop.f32.mrf.mxu0
    %2897 = vmatprep.mubr.bf16.mxu0 0
    %2898 = vmatmul.mubr.bf16.gmra.mxu0 %v2849
    %v2899 = vpop.f32.mrf.mxu0
    %v2900 = vadd.f32 0.0, %v2899
    %v2901 = vpop.f32.mrf.mxu0
    %v2902 = vpop.f32.mrf.mxu0
    %v2903 = vadd.f32 0.0, %v2902
    %v2904 = vpop.f32.mrf.mxu0
    %2905 = vmatprep.mubr.bf16.mxu0 0
    %2906 = vmatmul.mubr.bf16.gmra.mxu0 %v2852
    %v2907 = vpop.f32.mrf.mxu0
    %v2908 = vadd.f32 0.0, %v2907
    %v2909 = vpop.f32.mrf.mxu0
    %v2910 = vpop.f32.mrf.mxu0
    %v2911 = vadd.f32 0.0, %v2910
    %v2912 = vpop.f32.mrf.mxu0
    %2913 = vmatprep.mubr.bf16.mxu0 0
    %2914 = vmatmul.mubr.bf16.gmra.mxu0 %v2855
    %v2915 = vpop.f32.mrf.mxu0
    %v2916 = vadd.f32 0.0, %v2915
    %v2917 = vpop.f32.mrf.mxu0
    %v2918 = vpop.f32.mrf.mxu0
    %v2919 = vadd.f32 0.0, %v2918
    %v2920 = vpop.f32.mrf.mxu0
    %2921 = vdwg.mxu0
    %2922 = vrot.lane.b32.xlu0 %v834, 64
    %v2923 = vpop.permute.xlu0 %2922
    %2924 = vrot.lane.b32.xlu0 %v835, 64
    %v2925 = vpop.permute.xlu0 %2924
    %2926 = vrot.lane.b32.xlu0 %v836, 64
    %v2927 = vpop.permute.xlu0 %2926
    %2928 = vrot.lane.b32.xlu0 %v837, 64
    %v2929 = vpop.permute.xlu0 %2928
    %v2935 = vsel %vm1651, %v2380, 0
    %v2938 = vsel %vm1651, %v2381, 0
    %v2941 = vsel %vm1651, %v2382, 0
    %v2944 = vsel %vm1651, %v2383, 0
    %2946 = vmatprep.subr.bf16.mxu0 0
    %2947 = vmatpush1.bf16.msra.mxu0 0
    %2948 = vmatprep.subr.bf16.mxu0 0
    %2949 = vmatpush1.bf16.msra.mxu0 0
    %2950 = vmatprep.subr.bf16.mxu0 0
    %2951 = vmatpush1.bf16.msra.mxu0 0
    %2952 = vmatprep.subr.bf16.mxu0 0
    %2953 = vmatpush1.bf16.msra.mxu0 0
    %2954 = vmatprep.subr.bf16.mxu0 0
    %2955 = vmatpush1.bf16.msra.mxu0 %v2929
    %2956 = vmatprep.subr.bf16.mxu0 0
    %2957 = vmatpush1.bf16.msra.mxu0 %v2927
    %2958 = vmatprep.subr.bf16.mxu0 0
    %2959 = vmatpush1.bf16.msra.mxu0 %v2925
    %2960 = vmatprep.subr.bf16.mxu0 0
    %2961 = vmatpush1.bf16.msra.mxu0 %v2923
    %2962 = vmatprep.subr.bf16.mxu0 0
    %2963 = vmatpush2.bf16.msra.mxu0 0
    %2964 = vmatprep.subr.bf16.mxu0 0
    %2965 = vmatpush2.bf16.msra.mxu0 0
    %2966 = vmatprep.subr.bf16.mxu0 0
    %2967 = vmatpush2.bf16.msra.mxu0 0
    %2968 = vmatprep.subr.bf16.mxu0 0
    %2969 = vmatpush2.bf16.msra.mxu0 0
    %2970 = vmatprep.subr.bf16.mxu0 0
    %2971 = vmatpush2.bf16.msra.mxu0 0
    %2972 = vmatprep.subr.bf16.mxu0 0
    %2973 = vmatpush2.bf16.msra.mxu0 0
    %2974 = vmatprep.subr.bf16.mxu0 0
    %2975 = vmatpush2.bf16.msra.mxu0 0
    %2976 = vmatprep.subr.bf16.mxu0 0
    %2977 = vmatpush2.bf16.msra.mxu0 0
    %2978 = vmatprep.mubr.bf16.mxu0 0
    %2979 = vmatmul.mubr.bf16.gmra.mxu0 %v2935
    %v2980 = vpop.f32.mrf.mxu0
    %v2981 = vadd.f32 0.0, %v2980
    %v2982 = vpop.f32.mrf.mxu0
    %v2983 = vpop.f32.mrf.mxu0
    %v2984 = vadd.f32 0.0, %v2983
    %v2985 = vpop.f32.mrf.mxu0
    %2986 = vmatprep.mubr.bf16.mxu0 0
    %2987 = vmatmul.mubr.bf16.gmra.mxu0 %v2938
    %v2988 = vpop.f32.mrf.mxu0
    %v2989 = vadd.f32 0.0, %v2988
    %v2990 = vpop.f32.mrf.mxu0
    %v2991 = vpop.f32.mrf.mxu0
    %v2992 = vadd.f32 0.0, %v2991
    %v2993 = vpop.f32.mrf.mxu0
    %2994 = vmatprep.mubr.bf16.mxu0 0
    %2995 = vmatmul.mubr.bf16.gmra.mxu0 %v2941
    %v2996 = vpop.f32.mrf.mxu0
    %v2997 = vadd.f32 0.0, %v2996
    %v2998 = vpop.f32.mrf.mxu0
    %v2999 = vpop.f32.mrf.mxu0
    %v3000 = vadd.f32 0.0, %v2999
    %v3001 = vpop.f32.mrf.mxu0
    %3002 = vmatprep.mubr.bf16.mxu0 0
    %3003 = vmatmul.mubr.bf16.gmra.mxu0 %v2944
    %v3004 = vpop.f32.mrf.mxu0
    %v3005 = vadd.f32 0.0, %v3004
    %v3006 = vpop.f32.mrf.mxu0
    %v3007 = vpop.f32.mrf.mxu0
    %v3008 = vadd.f32 0.0, %v3007
    %v3009 = vpop.f32.mrf.mxu0
    %3010 = vdwg.mxu0
    %3011 = vrot.lane.b32.xlu0 %v838, 64
    %v3012 = vpop.permute.xlu0 %3011
    %3013 = vrot.lane.b32.xlu0 %v839, 64
    %v3014 = vpop.permute.xlu0 %3013
    %3015 = vrot.lane.b32.xlu0 %v840, 64
    %v3016 = vpop.permute.xlu0 %3015
    %3017 = vrot.lane.b32.xlu0 %v841, 64
    %v3018 = vpop.permute.xlu0 %3017
    %v3024 = vsel %vm1651, %v2384, 0
    %v3027 = vsel %vm1651, %v2385, 0
    %v3030 = vsel %vm1651, %v2386, 0
    %v3033 = vsel %vm1651, %v2387, 0
    %3035 = vmatprep.subr.bf16.mxu0 0
    %3036 = vmatpush1.bf16.msra.mxu0 0
    %3037 = vmatprep.subr.bf16.mxu0 0
    %3038 = vmatpush1.bf16.msra.mxu0 0
    %3039 = vmatprep.subr.bf16.mxu0 0
    %3040 = vmatpush1.bf16.msra.mxu0 0
    %3041 = vmatprep.subr.bf16.mxu0 0
    %3042 = vmatpush1.bf16.msra.mxu0 0
    %3043 = vmatprep.subr.bf16.mxu0 0
    %3044 = vmatpush1.bf16.msra.mxu0 %v3018
    %3045 = vmatprep.subr.bf16.mxu0 0
    %3046 = vmatpush1.bf16.msra.mxu0 %v3016
    %3047 = vmatprep.subr.bf16.mxu0 0
    %3048 = vmatpush1.bf16.msra.mxu0 %v3014
    %3049 = vmatprep.subr.bf16.mxu0 0
    %3050 = vmatpush1.bf16.msra.mxu0 %v3012
    %3051 = vmatprep.subr.bf16.mxu0 0
    %3052 = vmatpush2.bf16.msra.mxu0 0
    %3053 = vmatprep.subr.bf16.mxu0 0
    %3054 = vmatpush2.bf16.msra.mxu0 0
    %3055 = vmatprep.subr.bf16.mxu0 0
    %3056 = vmatpush2.bf16.msra.mxu0 0
    %3057 = vmatprep.subr.bf16.mxu0 0
    %3058 = vmatpush2.bf16.msra.mxu0 0
    %3059 = vmatprep.subr.bf16.mxu0 0
    %3060 = vmatpush2.bf16.msra.mxu0 0
    %3061 = vmatprep.subr.bf16.mxu0 0
    %3062 = vmatpush2.bf16.msra.mxu0 0
    %3063 = vmatprep.subr.bf16.mxu0 0
    %3064 = vmatpush2.bf16.msra.mxu0 0
    %3065 = vmatprep.subr.bf16.mxu0 0
    %3066 = vmatpush2.bf16.msra.mxu0 0
    %3067 = vmatprep.mubr.bf16.mxu0 0
    %3068 = vmatmul.mubr.bf16.gmra.mxu0 %v3024
    %v3069 = vpop.f32.mrf.mxu0
    %v3070 = vadd.f32 0.0, %v3069
    %v3071 = vpop.f32.mrf.mxu0
    %v3072 = vpop.f32.mrf.mxu0
    %v3073 = vadd.f32 0.0, %v3072
    %v3074 = vpop.f32.mrf.mxu0
    %3075 = vmatprep.mubr.bf16.mxu0 0
    %3076 = vmatmul.mubr.bf16.gmra.mxu0 %v3027
    %v3077 = vpop.f32.mrf.mxu0
    %v3078 = vadd.f32 0.0, %v3077
    %v3079 = vpop.f32.mrf.mxu0
    %v3080 = vpop.f32.mrf.mxu0
    %v3081 = vadd.f32 0.0, %v3080
    %v3082 = vpop.f32.mrf.mxu0
    %3083 = vmatprep.mubr.bf16.mxu0 0
    %3084 = vmatmul.mubr.bf16.gmra.mxu0 %v3030
    %v3085 = vpop.f32.mrf.mxu0
    %v3086 = vadd.f32 0.0, %v3085
    %v3087 = vpop.f32.mrf.mxu0
    %v3088 = vpop.f32.mrf.mxu0
    %v3089 = vadd.f32 0.0, %v3088
    %v3090 = vpop.f32.mrf.mxu0
    %3091 = vmatprep.mubr.bf16.mxu0 0
    %3092 = vmatmul.mubr.bf16.gmra.mxu0 %v3033
    %v3093 = vpop.f32.mrf.mxu0
    %v3094 = vadd.f32 0.0, %v3093
    %v3095 = vpop.f32.mrf.mxu0
    %v3096 = vpop.f32.mrf.mxu0
    %v3097 = vadd.f32 0.0, %v3096
    %v3098 = vpop.f32.mrf.mxu0
    %3099 = vdwg.mxu0
    %3116 = vrot.lane.b32.xlu0 %v2625, 8
    %v3117 = vpop.permute.xlu0 %3116
    %3118 = vrot.lane.b32.xlu0 %v2628, 8
    %v3119 = vpop.permute.xlu0 %3118
    %3120 = vrot.lane.b32.xlu0 %v2633, 8
    %v3121 = vpop.permute.xlu0 %3120
    %3122 = vrot.lane.b32.xlu0 %v2636, 8
    %v3123 = vpop.permute.xlu0 %3122
    %3124 = vrot.lane.b32.xlu0 %v2641, 8
    %v3125 = vpop.permute.xlu0 %3124
    %3126 = vrot.lane.b32.xlu0 %v2644, 8
    %v3127 = vpop.permute.xlu0 %3126
    %3128 = vrot.lane.b32.xlu0 %v2649, 8
    %v3129 = vpop.permute.xlu0 %3128
    %3130 = vrot.lane.b32.xlu0 %v2652, 8
    %v3131 = vpop.permute.xlu0 %3130
    %3132 = vrot.lane.b32.xlu0 %v2714, 8
    %v3133 = vpop.permute.xlu0 %3132
    %3134 = vrot.lane.b32.xlu0 %v2717, 8
    %v3135 = vpop.permute.xlu0 %3134
    %3136 = vrot.lane.b32.xlu0 %v2722, 8
    %v3137 = vpop.permute.xlu0 %3136
    %3138 = vrot.lane.b32.xlu0 %v2725, 8
    %v3139 = vpop.permute.xlu0 %3138
    %3140 = vrot.lane.b32.xlu0 %v2730, 8
    %v3141 = vpop.permute.xlu0 %3140
    %3142 = vrot.lane.b32.xlu0 %v2733, 8
    %v3143 = vpop.permute.xlu0 %3142
    %3144 = vrot.lane.b32.xlu0 %v2738, 8
    %v3145 = vpop.permute.xlu0 %3144
    %3146 = vrot.lane.b32.xlu0 %v2741, 8
    %v3147 = vpop.permute.xlu0 %3146
    %3180 = vrot.lane.b32.xlu0 %v2803, 16
    %v3181 = vpop.permute.xlu0 %3180
    %3182 = vrot.lane.b32.xlu0 %v2806, 16
    %v3183 = vpop.permute.xlu0 %3182
    %3184 = vrot.lane.b32.xlu0 %v2811, 16
    %v3185 = vpop.permute.xlu0 %3184
    %3186 = vrot.lane.b32.xlu0 %v2814, 16
    %v3187 = vpop.permute.xlu0 %3186
    %3188 = vrot.lane.b32.xlu0 %v2819, 16
    %v3189 = vpop.permute.xlu0 %3188
    %3190 = vrot.lane.b32.xlu0 %v2822, 16
    %v3191 = vpop.permute.xlu0 %3190
    %3192 = vrot.lane.b32.xlu0 %v2827, 16
    %v3193 = vpop.permute.xlu0 %3192
    %3194 = vrot.lane.b32.xlu0 %v2830, 16
    %v3195 = vpop.permute.xlu0 %3194
    %3196 = vrot.lane.b32.xlu0 %v2892, 16
    %v3197 = vpop.permute.xlu0 %3196
    %3198 = vrot.lane.b32.xlu0 %v2895, 16
    %v3199 = vpop.permute.xlu0 %3198
    %3200 = vrot.lane.b32.xlu0 %v2900, 16
    %v3201 = vpop.permute.xlu0 %3200
    %3202 = vrot.lane.b32.xlu0 %v2903, 16
    %v3203 = vpop.permute.xlu0 %3202
    %3204 = vrot.lane.b32.xlu0 %v2908, 16
    %v3205 = vpop.permute.xlu0 %3204
    %3206 = vrot.lane.b32.xlu0 %v2911, 16
    %v3207 = vpop.permute.xlu0 %3206
    %3208 = vrot.lane.b32.xlu0 %v2916, 16
    %v3209 = vpop.permute.xlu0 %3208
    %3210 = vrot.lane.b32.xlu0 %v2919, 16
    %v3211 = vpop.permute.xlu0 %3210
    %3244 = vrot.lane.b32.xlu0 %v2981, 24
    %v3245 = vpop.permute.xlu0 %3244
    %3246 = vrot.lane.b32.xlu0 %v2984, 24
    %v3247 = vpop.permute.xlu0 %3246
    %3248 = vrot.lane.b32.xlu0 %v2989, 24
    %v3249 = vpop.permute.xlu0 %3248
    %3250 = vrot.lane.b32.xlu0 %v2992, 24
    %v3251 = vpop.permute.xlu0 %3250
    %3252 = vrot.lane.b32.xlu0 %v2997, 24
    %v3253 = vpop.permute.xlu0 %3252
    %3254 = vrot.lane.b32.xlu0 %v3000, 24
    %v3255 = vpop.permute.xlu0 %3254
    %3256 = vrot.lane.b32.xlu0 %v3005, 24
    %v3257 = vpop.permute.xlu0 %3256
    %3258 = vrot.lane.b32.xlu0 %v3008, 24
    %v3259 = vpop.permute.xlu0 %3258
    %3260 = vrot.lane.b32.xlu0 %v3070, 24
    %v3261 = vpop.permute.xlu0 %3260
    %3262 = vrot.lane.b32.xlu0 %v3073, 24
    %v3263 = vpop.permute.xlu0 %3262
    %3264 = vrot.lane.b32.xlu0 %v3078, 24
    %v3265 = vpop.permute.xlu0 %3264
    %3266 = vrot.lane.b32.xlu0 %v3081, 24
    %v3267 = vpop.permute.xlu0 %3266
    %3268 = vrot.lane.b32.xlu0 %v3086, 24
    %v3269 = vpop.permute.xlu0 %3268
    %3270 = vrot.lane.b32.xlu0 %v3089, 24
    %v3271 = vpop.permute.xlu0 %3270
    %3272 = vrot.lane.b32.xlu0 %v3094, 24
    %v3273 = vpop.permute.xlu0 %3272
    %3274 = vrot.lane.b32.xlu0 %v3097, 24
    %v3275 = vpop.permute.xlu0 %3274
    %v3292 = vsel %vm854, %v2447, %v3117
    %v3293 = vsel %vm854, %v2450, %v3119
    %v3294 = vsel %vm854, %v2455, %v3121
    %v3295 = vsel %vm854, %v2458, %v3123
    %v3296 = vsel %vm854, %v2463, %v3125
    %v3297 = vsel %vm854, %v2466, %v3127
    %v3298 = vsel %vm854, %v2471, %v3129
    %v3299 = vsel %vm854, %v2474, %v3131
    %v3300 = vsel %vm854, %v2536, %v3133
    %v3301 = vsel %vm854, %v2539, %v3135
    %v3302 = vsel %vm854, %v2544, %v3137
    %v3303 = vsel %vm854, %v2547, %v3139
    %v3304 = vsel %vm854, %v2552, %v3141
    %v3305 = vsel %vm854, %v2555, %v3143
    %v3306 = vsel %vm854, %v2560, %v3145
    %v3307 = vsel %vm854, %v2563, %v3147
    %vm3308 = vcmask 130048
    %v3309 = vsel %vm3308, %v3292, %v3181
    %v3310 = vsel %vm3308, %v3293, %v3183
    %v3311 = vsel %vm3308, %v3294, %v3185
    %v3312 = vsel %vm3308, %v3295, %v3187
    %v3313 = vsel %vm3308, %v3296, %v3189
    %v3314 = vsel %vm3308, %v3297, %v3191
    %v3315 = vsel %vm3308, %v3298, %v3193
    %v3316 = vsel %vm3308, %v3299, %v3195
    %v3317 = vsel %vm3308, %v3300, %v3197
    %v3318 = vsel %vm3308, %v3301, %v3199
    %v3319 = vsel %vm3308, %v3302, %v3201
    %v3320 = vsel %vm3308, %v3303, %v3203
    %v3321 = vsel %vm3308, %v3304, %v3205
    %v3322 = vsel %vm3308, %v3305, %v3207
    %v3323 = vsel %vm3308, %v3306, %v3209
    %v3324 = vsel %vm3308, %v3307, %v3211
    %vm3325 = vcmask 195584
    %v3326 = vsel %vm3325, %v3309, %v3245
    %v3327 = vsel %vm3325, %v3310, %v3247
    %v3328 = vsel %vm3325, %v3311, %v3249
    %v3329 = vsel %vm3325, %v3312, %v3251
    %v3330 = vsel %vm3325, %v3313, %v3253
    %v3331 = vsel %vm3325, %v3314, %v3255
    %v3332 = vsel %vm3325, %v3315, %v3257
    %v3333 = vsel %vm3325, %v3316, %v3259
    %v3334 = vsel %vm3325, %v3317, %v3261
    %v3335 = vsel %vm3325, %v3318, %v3263
    %v3336 = vsel %vm3325, %v3319, %v3265
    %v3337 = vsel %vm3325, %v3320, %v3267
    %v3338 = vsel %vm3325, %v3321, %v3269
    %v3339 = vsel %vm3325, %v3322, %v3271
    %v3340 = vsel %vm3325, %v3323, %v3273
    %v3341 = vsel %vm3325, %v3324, %v3275
    %v3342 = vpack.c.bf16 %v3327, %v3326
    %v3343 = vpack.c.bf16 %v3329, %v3328
    %v3344 = vpack.c.bf16 %v3331, %v3330
    %v3345 = vpack.c.bf16 %v3333, %v3332
    %v3346 = vpack.c.bf16 %v3335, %v3334
    %v3347 = vpack.c.bf16 %v3337, %v3336
    %v3348 = vpack.c.bf16 %v3339, %v3338
    %v3349 = vpack.c.bf16 %v3341, %v3340
    %v3350 = vld [vmem:[#allocation11] sm:$0xf]
    %v3351 = vld [vmem:[#allocation11 + $0x4] sm:$0xf]
    %v3352 = vld [vmem:[#allocation11 + $0x8] sm:$0xf]
    %v3353 = vld [vmem:[#allocation11 + $0xc] sm:$0xf]
    %v3354 = vld [vmem:[#allocation13] sm:$0x1]
    %v3356 = vlaneseq
    %v3357 = vshrl.u32 %v3356, 7
    %v3358 = vsub.s32 0, %v3357
    %v3359 = vrot.slane %v3354, %v3358
    %v3365 = vunpack.c.l.b16 %v3350
    %v3366 = vunpack.c.l.b16 %v3351
    %v3367 = vunpack.c.l.b16 %v3352
    %v3368 = vunpack.c.l.b16 %v3353
    %v3369 = vpack.c.b16 %v3366, %v3365
    %v3370 = vpack.c.b16 %v3368, %v3367
    %v3374 = vsel %vm244, %v3342, 0
    %v3377 = vsel %vm244, %v3343, 0
    %v3380 = vsel %vm244, %v3344, 0
    %v3383 = vsel %vm244, %v3345, 0
    %v3386 = vsel %vm244, %v3346, 0
    %v3389 = vsel %vm244, %v3347, 0
    %v3392 = vsel %vm244, %v3348, 0
    %v3395 = vsel %vm244, %v3349, 0
    %3397 = vmatprep.subr.bf16.mxu0 0
    %3398 = vmatpush1.bf16.msra.mxu0 0
    %3399 = vmatprep.subr.bf16.mxu0 0
    %3400 = vmatpush1.bf16.msra.mxu0 0
    %3401 = vmatprep.subr.bf16.mxu0 0
    %3402 = vmatpush1.bf16.msra.mxu0 0
    %3403 = vmatprep.subr.bf16.mxu0 0
    %3404 = vmatpush1.bf16.msra.mxu0 0
    %3405 = vmatprep.subr.bf16.mxu0 0
    %3406 = vmatpush1.bf16.msra.mxu0 0
    %3407 = vmatprep.subr.bf16.mxu0 0
    %3408 = vmatpush1.bf16.msra.mxu0 0
    %3409 = vmatprep.subr.bf16.mxu0 0
    %3410 = vmatpush1.bf16.msra.mxu0 %v3370
    %3411 = vmatprep.subr.bf16.mxu0 0
    %3412 = vmatpush1.bf16.msra.mxu0 %v3369
    %3413 = vmatprep.subr.bf16.mxu0 0
    %3414 = vmatpush2.bf16.msra.mxu0 0
    %3415 = vmatprep.subr.bf16.mxu0 0
    %3416 = vmatpush2.bf16.msra.mxu0 0
    %3417 = vmatprep.subr.bf16.mxu0 0
    %3418 = vmatpush2.bf16.msra.mxu0 0
    %3419 = vmatprep.subr.bf16.mxu0 0
    %3420 = vmatpush2.bf16.msra.mxu0 0
    %3421 = vmatprep.subr.bf16.mxu0 0
    %3422 = vmatpush2.bf16.msra.mxu0 0
    %3423 = vmatprep.subr.bf16.mxu0 0
    %3424 = vmatpush2.bf16.msra.mxu0 0
    %3425 = vmatprep.subr.bf16.mxu0 0
    %3426 = vmatpush2.bf16.msra.mxu0 0
    %3427 = vmatprep.subr.bf16.mxu0 0
    %3428 = vmatpush2.bf16.msra.mxu0 0
    %3429 = vmatprep.mubr.bf16.mxu0 0
    %3430 = vmatmul.mubr.bf16.gmra.mxu0 %v3374
    %v3431 = vpop.f32.mrf.mxu0
    %v3432 = vadd.f32 %v3359, %v3431
    %v3433 = vpop.f32.mrf.mxu0
    %v3434 = vpop.f32.mrf.mxu0
    %v3435 = vadd.f32 %v3359, %v3434
    %v3436 = vpop.f32.mrf.mxu0
    %3437 = vmatprep.mubr.bf16.mxu0 0
    %3438 = vmatmul.mubr.bf16.gmra.mxu0 %v3377
    %v3439 = vpop.f32.mrf.mxu0
    %v3440 = vadd.f32 %v3359, %v3439
    %v3441 = vpop.f32.mrf.mxu0
    %v3442 = vpop.f32.mrf.mxu0
    %v3443 = vadd.f32 %v3359, %v3442
    %v3444 = vpop.f32.mrf.mxu0
    %3445 = vmatprep.mubr.bf16.mxu0 0
    %3446 = vmatmul.mubr.bf16.gmra.mxu0 %v3380
    %v3447 = vpop.f32.mrf.mxu0
    %v3448 = vadd.f32 %v3359, %v3447
    %v3449 = vpop.f32.mrf.mxu0
    %v3450 = vpop.f32.mrf.mxu0
    %v3451 = vadd.f32 %v3359, %v3450
    %v3452 = vpop.f32.mrf.mxu0
    %3453 = vmatprep.mubr.bf16.mxu0 0
    %3454 = vmatmul.mubr.bf16.gmra.mxu0 %v3383
    %v3455 = vpop.f32.mrf.mxu0
    %v3456 = vadd.f32 %v3359, %v3455
    %v3457 = vpop.f32.mrf.mxu0
    %v3458 = vpop.f32.mrf.mxu0
    %v3459 = vadd.f32 %v3359, %v3458
    %v3460 = vpop.f32.mrf.mxu0
    %3461 = vmatprep.mubr.bf16.mxu0 0
    %3462 = vmatmul.mubr.bf16.gmra.mxu0 %v3386
    %v3463 = vpop.f32.mrf.mxu0
    %v3464 = vadd.f32 %v3359, %v3463
    %v3465 = vpop.f32.mrf.mxu0
    %v3466 = vpop.f32.mrf.mxu0
    %v3467 = vadd.f32 %v3359, %v3466
    %v3468 = vpop.f32.mrf.mxu0
    %3469 = vmatprep.mubr.bf16.mxu0 0
    %3470 = vmatmul.mubr.bf16.gmra.mxu0 %v3389
    %v3471 = vpop.f32.mrf.mxu0
    %v3472 = vadd.f32 %v3359, %v3471
    %v3473 = vpop.f32.mrf.mxu0
    %v3474 = vpop.f32.mrf.mxu0
    %v3475 = vadd.f32 %v3359, %v3474
    %v3476 = vpop.f32.mrf.mxu0
    %3477 = vmatprep.mubr.bf16.mxu0 0
    %3478 = vmatmul.mubr.bf16.gmra.mxu0 %v3392
    %v3479 = vpop.f32.mrf.mxu0
    %v3480 = vadd.f32 %v3359, %v3479
    %v3481 = vpop.f32.mrf.mxu0
    %v3482 = vpop.f32.mrf.mxu0
    %v3483 = vadd.f32 %v3359, %v3482
    %v3484 = vpop.f32.mrf.mxu0
    %3485 = vmatprep.mubr.bf16.mxu0 0
    %3486 = vmatmul.mubr.bf16.gmra.mxu0 %v3395
    %v3487 = vpop.f32.mrf.mxu0
    %v3488 = vadd.f32 %v3359, %v3487
    %v3489 = vpop.f32.mrf.mxu0
    %v3490 = vpop.f32.mrf.mxu0
    %v3491 = vadd.f32 %v3359, %v3490
    %v3492 = vpop.f32.mrf.mxu0
    %3493 = vdwg.mxu0
    %v3494 = vadd.f32 %v3432, %v194
    %v3495 = vadd.f32 %v3435, %v195
    %v3496 = vadd.f32 %v3440, %v196
    %v3497 = vadd.f32 %v3443, %v197
    %v3498 = vadd.f32 %v3448, %v198
    %v3499 = vadd.f32 %v3451, %v199
    %v3500 = vadd.f32 %v3456, %v200
    %v3501 = vadd.f32 %v3459, %v201
    %v3502 = vadd.f32 %v3464, %v226
    %v3503 = vadd.f32 %v3467, %v227
    %v3504 = vadd.f32 %v3472, %v228
    %v3505 = vadd.f32 %v3475, %v229
    %v3506 = vadd.f32 %v3480, %v230
    %v3507 = vadd.f32 %v3483, %v231
    %v3508 = vadd.f32 %v3488, %v232
    %v3509 = vadd.f32 %v3491, %v233
    %v3510 = vld [vmem:[#allocation14] sm:$0x1]
    %v3511 = vld [vmem:[#allocation16] sm:$0x1]
    %v3512 = vsel %vm244, %v3494, 0.0
    %3513 = vadd.xlane.f32.xlu0 %v3512
    %v3514 = vpop.xlane.xlu0 %3513
    %v3515 = vsel %vm244, %v3495, 0.0
    %3516 = vadd.xlane.f32.xlu0 %v3515
    %v3517 = vpop.xlane.xlu0 %3516
    %v3518 = vsel %vm244, %v3496, 0.0
    %3519 = vadd.xlane.f32.xlu0 %v3518
    %v3520 = vpop.xlane.xlu0 %3519
    %v3521 = vsel %vm244, %v3497, 0.0
    %3522 = vadd.xlane.f32.xlu0 %v3521
    %v3523 = vpop.xlane.xlu0 %3522
    %v3524 = vsel %vm244, %v3498, 0.0
    %3525 = vadd.xlane.f32.xlu0 %v3524
    %v3526 = vpop.xlane.xlu0 %3525
    %v3527 = vsel %vm244, %v3499, 0.0
    %3528 = vadd.xlane.f32.xlu0 %v3527
    %v3529 = vpop.xlane.xlu0 %3528
    %v3530 = vsel %vm244, %v3500, 0.0
    %3531 = vadd.xlane.f32.xlu0 %v3530
    %v3532 = vpop.xlane.xlu0 %3531
    %v3533 = vsel %vm244, %v3501, 0.0
    %3534 = vadd.xlane.f32.xlu0 %v3533
    %v3535 = vpop.xlane.xlu0 %3534
    %v3536 = vsel %vm244, %v3502, 0.0
    %3537 = vadd.xlane.f32.xlu0 %v3536
    %v3538 = vpop.xlane.xlu0 %3537
    %v3539 = vsel %vm244, %v3503, 0.0
    %3540 = vadd.xlane.f32.xlu0 %v3539
    %v3541 = vpop.xlane.xlu0 %3540
    %v3542 = vsel %vm244, %v3504, 0.0
    %3543 = vadd.xlane.f32.xlu0 %v3542
    %v3544 = vpop.xlane.xlu0 %3543
    %v3545 = vsel %vm244, %v3505, 0.0
    %3546 = vadd.xlane.f32.xlu0 %v3545
    %v3547 = vpop.xlane.xlu0 %3546
    %v3548 = vsel %vm244, %v3506, 0.0
    %3549 = vadd.xlane.f32.xlu0 %v3548
    %v3550 = vpop.xlane.xlu0 %3549
    %v3551 = vsel %vm244, %v3507, 0.0
    %3552 = vadd.xlane.f32.xlu0 %v3551
    %v3553 = vpop.xlane.xlu0 %3552
    %v3554 = vsel %vm244, %v3508, 0.0
    %3555 = vadd.xlane.f32.xlu0 %v3554
    %v3556 = vpop.xlane.xlu0 %3555
    %v3557 = vsel %vm244, %v3509, 0.0
    %3558 = vadd.xlane.f32.xlu0 %v3557
    %v3559 = vpop.xlane.xlu0 %3558
    %v3560 = vmul.f32 %v3514, %v293
    %v3561 = vmul.f32 %v3517, %v293
    %v3562 = vmul.f32 %v3520, %v293
    %v3563 = vmul.f32 %v3523, %v293
    %v3564 = vmul.f32 %v3526, %v293
    %v3565 = vmul.f32 %v3529, %v293
    %v3566 = vmul.f32 %v3532, %v293
    %v3567 = vmul.f32 %v3535, %v293
    %v3568 = vmul.f32 %v3538, %v293
    %v3569 = vmul.f32 %v3541, %v293
    %v3570 = vmul.f32 %v3544, %v293
    %v3571 = vmul.f32 %v3547, %v293
    %v3572 = vmul.f32 %v3550, %v293
    %v3573 = vmul.f32 %v3553, %v293
    %v3574 = vmul.f32 %v3556, %v293
    %v3575 = vmul.f32 %v3559, %v293
    %v3576 = vsub.f32 %v3494, %v3560
    %v3577 = vsub.f32 %v3495, %v3561
    %v3578 = vsub.f32 %v3496, %v3562
    %v3579 = vsub.f32 %v3497, %v3563
    %v3580 = vsub.f32 %v3498, %v3564
    %v3581 = vsub.f32 %v3499, %v3565
    %v3582 = vsub.f32 %v3500, %v3566
    %v3583 = vsub.f32 %v3501, %v3567
    %v3584 = vsub.f32 %v3502, %v3568
    %v3585 = vsub.f32 %v3503, %v3569
    %v3586 = vsub.f32 %v3504, %v3570
    %v3587 = vsub.f32 %v3505, %v3571
    %v3588 = vsub.f32 %v3506, %v3572
    %v3589 = vsub.f32 %v3507, %v3573
    %v3590 = vsub.f32 %v3508, %v3574
    %v3591 = vsub.f32 %v3509, %v3575
    %v3592 = vmul.f32 %v3576, %v3576
    %v3593 = vmul.f32 %v3577, %v3577
    %v3594 = vmul.f32 %v3578, %v3578
    %v3595 = vmul.f32 %v3579, %v3579
    %v3596 = vmul.f32 %v3580, %v3580
    %v3597 = vmul.f32 %v3581, %v3581
    %v3598 = vmul.f32 %v3582, %v3582
    %v3599 = vmul.f32 %v3583, %v3583
    %v3600 = vmul.f32 %v3584, %v3584
    %v3601 = vmul.f32 %v3585, %v3585
    %v3602 = vmul.f32 %v3586, %v3586
    %v3603 = vmul.f32 %v3587, %v3587
    %v3604 = vmul.f32 %v3588, %v3588
    %v3605 = vmul.f32 %v3589, %v3589
    %v3606 = vmul.f32 %v3590, %v3590
    %v3607 = vmul.f32 %v3591, %v3591
    %v3608 = vsel %vm244, %v3592, 0.0
    %3609 = vadd.xlane.f32.xlu0 %v3608
    %v3610 = vpop.xlane.xlu0 %3609
    %v3611 = vsel %vm244, %v3593, 0.0
    %3612 = vadd.xlane.f32.xlu0 %v3611
    %v3613 = vpop.xlane.xlu0 %3612
    %v3614 = vsel %vm244, %v3594, 0.0
    %3615 = vadd.xlane.f32.xlu0 %v3614
    %v3616 = vpop.xlane.xlu0 %3615
    %v3617 = vsel %vm244, %v3595, 0.0
    %3618 = vadd.xlane.f32.xlu0 %v3617
    %v3619 = vpop.xlane.xlu0 %3618
    %v3620 = vsel %vm244, %v3596, 0.0
    %3621 = vadd.xlane.f32.xlu0 %v3620
    %v3622 = vpop.xlane.xlu0 %3621
    %v3623 = vsel %vm244, %v3597, 0.0
    %3624 = vadd.xlane.f32.xlu0 %v3623
    %v3625 = vpop.xlane.xlu0 %3624
    %v3626 = vsel %vm244, %v3598, 0.0
    %3627 = vadd.xlane.f32.xlu0 %v3626
    %v3628 = vpop.xlane.xlu0 %3627
    %v3629 = vsel %vm244, %v3599, 0.0
    %3630 = vadd.xlane.f32.xlu0 %v3629
    %v3631 = vpop.xlane.xlu0 %3630
    %v3632 = vsel %vm244, %v3600, 0.0
    %3633 = vadd.xlane.f32.xlu0 %v3632
    %v3634 = vpop.xlane.xlu0 %3633
    %v3635 = vsel %vm244, %v3601, 0.0
    %3636 = vadd.xlane.f32.xlu0 %v3635
    %v3637 = vpop.xlane.xlu0 %3636
    %v3638 = vsel %vm244, %v3602, 0.0
    %3639 = vadd.xlane.f32.xlu0 %v3638
    %v3640 = vpop.xlane.xlu0 %3639
    %v3641 = vsel %vm244, %v3603, 0.0
    %3642 = vadd.xlane.f32.xlu0 %v3641
    %v3643 = vpop.xlane.xlu0 %3642
    %v3644 = vsel %vm244, %v3604, 0.0
    %3645 = vadd.xlane.f32.xlu0 %v3644
    %v3646 = vpop.xlane.xlu0 %3645
    %v3647 = vsel %vm244, %v3605, 0.0
    %3648 = vadd.xlane.f32.xlu0 %v3647
    %v3649 = vpop.xlane.xlu0 %3648
    %v3650 = vsel %vm244, %v3606, 0.0
    %3651 = vadd.xlane.f32.xlu0 %v3650
    %v3652 = vpop.xlane.xlu0 %3651
    %v3653 = vsel %vm244, %v3607, 0.0
    %3654 = vadd.xlane.f32.xlu0 %v3653
    %v3655 = vpop.xlane.xlu0 %3654
    %v3656 = vmul.f32 %v3610, %v293
    %v3657 = vmul.f32 %v3613, %v293
    %v3658 = vmul.f32 %v3616, %v293
    %v3659 = vmul.f32 %v3619, %v293
    %v3660 = vmul.f32 %v3622, %v293
    %v3661 = vmul.f32 %v3625, %v293
    %v3662 = vmul.f32 %v3628, %v293
    %v3663 = vmul.f32 %v3631, %v293
    %v3664 = vmul.f32 %v3634, %v293
    %v3665 = vmul.f32 %v3637, %v293
    %v3666 = vmul.f32 %v3640, %v293
    %v3667 = vmul.f32 %v3643, %v293
    %v3668 = vmul.f32 %v3646, %v293
    %v3669 = vmul.f32 %v3649, %v293
    %v3670 = vmul.f32 %v3652, %v293
    %v3671 = vmul.f32 %v3655, %v293
    %v3672 = vadd.f32 %v3656, 1e-05
    %v3673 = vadd.f32 %v3657, 1e-05
    %v3674 = vadd.f32 %v3658, 1e-05
    %v3675 = vadd.f32 %v3659, 1e-05
    %v3676 = vadd.f32 %v3660, 1e-05
    %v3677 = vadd.f32 %v3661, 1e-05
    %v3678 = vadd.f32 %v3662, 1e-05
    %v3679 = vadd.f32 %v3663, 1e-05
    %v3680 = vadd.f32 %v3664, 1e-05
    %v3681 = vadd.f32 %v3665, 1e-05
    %v3682 = vadd.f32 %v3666, 1e-05
    %v3683 = vadd.f32 %v3667, 1e-05
    %v3684 = vadd.f32 %v3668, 1e-05
    %v3685 = vadd.f32 %v3669, 1e-05
    %v3686 = vadd.f32 %v3670, 1e-05
    %v3687 = vadd.f32 %v3671, 1e-05
    %v3688 = vrsqrt.pop %v3672
    %v3689 = vrsqrt.pop %v3673
    %v3690 = vrsqrt.pop %v3674
    %v3691 = vrsqrt.pop %v3675
    %v3692 = vrsqrt.pop %v3676
    %v3693 = vrsqrt.pop %v3677
    %v3694 = vrsqrt.pop %v3678
    %v3695 = vrsqrt.pop %v3679
    %v3696 = vrsqrt.pop %v3680
    %v3697 = vrsqrt.pop %v3681
    %v3698 = vrsqrt.pop %v3682
    %v3699 = vrsqrt.pop %v3683
    %v3700 = vrsqrt.pop %v3684
    %v3701 = vrsqrt.pop %v3685
    %v3702 = vrsqrt.pop %v3686
    %v3703 = vrsqrt.pop %v3687
    %v3704 = vmul.f32 %v3576, %v3688
    %v3705 = vmul.f32 %v3577, %v3689
    %v3706 = vmul.f32 %v3578, %v3690
    %v3707 = vmul.f32 %v3579, %v3691
    %v3708 = vmul.f32 %v3580, %v3692
    %v3709 = vmul.f32 %v3581, %v3693
    %v3710 = vmul.f32 %v3582, %v3694
    %v3711 = vmul.f32 %v3583, %v3695
    %v3712 = vmul.f32 %v3584, %v3696
    %v3713 = vmul.f32 %v3585, %v3697
    %v3714 = vmul.f32 %v3586, %v3698
    %v3715 = vmul.f32 %v3587, %v3699
    %v3716 = vmul.f32 %v3588, %v3700
    %v3717 = vmul.f32 %v3589, %v3701
    %v3718 = vmul.f32 %v3590, %v3702
    %v3719 = vmul.f32 %v3591, %v3703
    %v3721 = vlaneseq
    %v3722 = vshrl.u32 %v3721, 7
    %v3723 = vsub.s32 0, %v3722
    %v3724 = vrot.slane %v3510, %v3723
    %v3726 = vmul.f32 %v3704, %v3724
    %v3727 = vmul.f32 %v3705, %v3724
    %v3728 = vmul.f32 %v3706, %v3724
    %v3729 = vmul.f32 %v3707, %v3724
    %v3730 = vmul.f32 %v3708, %v3724
    %v3731 = vmul.f32 %v3709, %v3724
    %v3732 = vmul.f32 %v3710, %v3724
    %v3733 = vmul.f32 %v3711, %v3724
    %v3734 = vmul.f32 %v3712, %v3724
    %v3735 = vmul.f32 %v3713, %v3724
    %v3736 = vmul.f32 %v3714, %v3724
    %v3737 = vmul.f32 %v3715, %v3724
    %v3738 = vmul.f32 %v3716, %v3724
    %v3739 = vmul.f32 %v3717, %v3724
    %v3740 = vmul.f32 %v3718, %v3724
    %v3741 = vmul.f32 %v3719, %v3724
    %v3743 = vlaneseq
    %v3744 = vshrl.u32 %v3743, 7
    %v3745 = vsub.s32 0, %v3744
    %v3746 = vrot.slane %v3511, %v3745
    %v3748 = vadd.f32 %v3726, %v3746
    %v3749 = vadd.f32 %v3727, %v3746
    %v3750 = vadd.f32 %v3728, %v3746
    %v3751 = vadd.f32 %v3729, %v3746
    %v3752 = vadd.f32 %v3730, %v3746
    %v3753 = vadd.f32 %v3731, %v3746
    %v3754 = vadd.f32 %v3732, %v3746
    %v3755 = vadd.f32 %v3733, %v3746
    %v3756 = vadd.f32 %v3734, %v3746
    %v3757 = vadd.f32 %v3735, %v3746
    %v3758 = vadd.f32 %v3736, %v3746
    %v3759 = vadd.f32 %v3737, %v3746
    %v3760 = vadd.f32 %v3738, %v3746
    %v3761 = vadd.f32 %v3739, %v3746
    %v3762 = vadd.f32 %v3740, %v3746
    %v3763 = vadd.f32 %v3741, %v3746
    %v3764 = vpack.c.bf16 %v3749, %v3748
    %v3765 = vpack.c.bf16 %v3751, %v3750
    %v3766 = vpack.c.bf16 %v3753, %v3752
    %v3767 = vpack.c.bf16 %v3755, %v3754
    %v3768 = vpack.c.bf16 %v3757, %v3756
    %v3769 = vpack.c.bf16 %v3759, %v3758
    %v3770 = vpack.c.bf16 %v3761, %v3760
    %v3771 = vpack.c.bf16 %v3763, %v3762
    %v3772 = vld [vmem:[%s9] sm:$0xf]
    %v3773 = vld [vmem:[%s9 + $0x4] sm:$0xf]
    %v3774 = vld [vmem:[%s9 + $0x8] sm:$0xf]
    %v3775 = vld [vmem:[%s9 + $0xc] sm:$0xf]
    %v3776 = vld [vmem:[%s10] sm:$0x1]
    %v3778 = vlaneseq
    %v3779 = vshrl.u32 %v3778, 7
    %v3780 = vsub.s32 0, %v3779
    %v3781 = vrot.slane %v3776, %v3780
    %v3787 = vunpack.c.l.b16 %v3772
    %v3788 = vunpack.c.l.b16 %v3773
    %v3789 = vunpack.c.l.b16 %v3774
    %v3790 = vunpack.c.l.b16 %v3775
    %v3791 = vpack.c.b16 %v3788, %v3787
    %v3792 = vpack.c.b16 %v3790, %v3789
    %v3796 = vsel %vm244, %v3764, 0
    %v3799 = vsel %vm244, %v3765, 0
    %v3802 = vsel %vm244, %v3766, 0
    %v3805 = vsel %vm244, %v3767, 0
    %v3808 = vsel %vm244, %v3768, 0
    %v3811 = vsel %vm244, %v3769, 0
    %v3814 = vsel %vm244, %v3770, 0
    %v3817 = vsel %vm244, %v3771, 0
    %3819 = vmatprep.subr.bf16.mxu0 0
    %3820 = vmatpush1.bf16.msra.mxu0 0
    %3821 = vmatprep.subr.bf16.mxu0 0
    %3822 = vmatpush1.bf16.msra.mxu0 0
    %3823 = vmatprep.subr.bf16.mxu0 0
    %3824 = vmatpush1.bf16.msra.mxu0 0
    %3825 = vmatprep.subr.bf16.mxu0 0
    %3826 = vmatpush1.bf16.msra.mxu0 0
    %3827 = vmatprep.subr.bf16.mxu0 0
    %3828 = vmatpush1.bf16.msra.mxu0 0
    %3829 = vmatprep.subr.bf16.mxu0 0
    %3830 = vmatpush1.bf16.msra.mxu0 0
    %3831 = vmatprep.subr.bf16.mxu0 0
    %3832 = vmatpush1.bf16.msra.mxu0 %v3792
    %3833 = vmatprep.subr.bf16.mxu0 0
    %3834 = vmatpush1.bf16.msra.mxu0 %v3791
    %3835 = vmatprep.subr.bf16.mxu0 0
    %3836 = vmatpush2.bf16.msra.mxu0 0
    %3837 = vmatprep.subr.bf16.mxu0 0
    %3838 = vmatpush2.bf16.msra.mxu0 0
    %3839 = vmatprep.subr.bf16.mxu0 0
    %3840 = vmatpush2.bf16.msra.mxu0 0
    %3841 = vmatprep.subr.bf16.mxu0 0
    %3842 = vmatpush2.bf16.msra.mxu0 0
    %3843 = vmatprep.subr.bf16.mxu0 0
    %3844 = vmatpush2.bf16.msra.mxu0 0
    %3845 = vmatprep.subr.bf16.mxu0 0
    %3846 = vmatpush2.bf16.msra.mxu0 0
    %3847 = vmatprep.subr.bf16.mxu0 0
    %3848 = vmatpush2.bf16.msra.mxu0 0
    %3849 = vmatprep.subr.bf16.mxu0 0
    %3850 = vmatpush2.bf16.msra.mxu0 0
    %3851 = vmatprep.mubr.bf16.mxu0 0
    %3852 = vmatmul.mubr.bf16.gmra.mxu0 %v3796
    %v3853 = vpop.f32.mrf.mxu0
    %v3854 = vadd.f32 %v3781, %v3853
    %v3855 = vpop.f32.mrf.mxu0
    %v3856 = vpop.f32.mrf.mxu0
    %v3857 = vadd.f32 %v3781, %v3856
    %v3858 = vpop.f32.mrf.mxu0
    %3859 = vmatprep.mubr.bf16.mxu0 0
    %3860 = vmatmul.mubr.bf16.gmra.mxu0 %v3799
    %v3861 = vpop.f32.mrf.mxu0
    %v3862 = vadd.f32 %v3781, %v3861
    %v3863 = vpop.f32.mrf.mxu0
    %v3864 = vpop.f32.mrf.mxu0
    %v3865 = vadd.f32 %v3781, %v3864
    %v3866 = vpop.f32.mrf.mxu0
    %3867 = vmatprep.mubr.bf16.mxu0 0
    %3868 = vmatmul.mubr.bf16.gmra.mxu0 %v3802
    %v3869 = vpop.f32.mrf.mxu0
    %v3870 = vadd.f32 %v3781, %v3869
    %v3871 = vpop.f32.mrf.mxu0
    %v3872 = vpop.f32.mrf.mxu0
    %v3873 = vadd.f32 %v3781, %v3872
    %v3874 = vpop.f32.mrf.mxu0
    %3875 = vmatprep.mubr.bf16.mxu0 0
    %3876 = vmatmul.mubr.bf16.gmra.mxu0 %v3805
    %v3877 = vpop.f32.mrf.mxu0
    %v3878 = vadd.f32 %v3781, %v3877
    %v3879 = vpop.f32.mrf.mxu0
    %v3880 = vpop.f32.mrf.mxu0
    %v3881 = vadd.f32 %v3781, %v3880
    %v3882 = vpop.f32.mrf.mxu0
    %3883 = vmatprep.mubr.bf16.mxu0 0
    %3884 = vmatmul.mubr.bf16.gmra.mxu0 %v3808
    %v3885 = vpop.f32.mrf.mxu0
    %v3886 = vadd.f32 %v3781, %v3885
    %v3887 = vpop.f32.mrf.mxu0
    %v3888 = vpop.f32.mrf.mxu0
    %v3889 = vadd.f32 %v3781, %v3888
    %v3890 = vpop.f32.mrf.mxu0
    %3891 = vmatprep.mubr.bf16.mxu0 0
    %3892 = vmatmul.mubr.bf16.gmra.mxu0 %v3811
    %v3893 = vpop.f32.mrf.mxu0
    %v3894 = vadd.f32 %v3781, %v3893
    %v3895 = vpop.f32.mrf.mxu0
    %v3896 = vpop.f32.mrf.mxu0
    %v3897 = vadd.f32 %v3781, %v3896
    %v3898 = vpop.f32.mrf.mxu0
    %3899 = vmatprep.mubr.bf16.mxu0 0
    %3900 = vmatmul.mubr.bf16.gmra.mxu0 %v3814
    %v3901 = vpop.f32.mrf.mxu0
    %v3902 = vadd.f32 %v3781, %v3901
    %v3903 = vpop.f32.mrf.mxu0
    %v3904 = vpop.f32.mrf.mxu0
    %v3905 = vadd.f32 %v3781, %v3904
    %v3906 = vpop.f32.mrf.mxu0
    %3907 = vmatprep.mubr.bf16.mxu0 0
    %3908 = vmatmul.mubr.bf16.gmra.mxu0 %v3817
    %v3909 = vpop.f32.mrf.mxu0
    %v3910 = vadd.f32 %v3781, %v3909
    %v3911 = vpop.f32.mrf.mxu0
    %v3912 = vpop.f32.mrf.mxu0
    %v3913 = vadd.f32 %v3781, %v3912
    %v3914 = vpop.f32.mrf.mxu0
    %3915 = vdwg.mxu0
    %v3916 = vmul.f32 %v3854, 0.5
    %v3917 = vmul.f32 %v3857, 0.5
    %v3918 = vmul.f32 %v3862, 0.5
    %v3919 = vmul.f32 %v3865, 0.5
    %v3920 = vmul.f32 %v3870, 0.5
    %v3921 = vmul.f32 %v3873, 0.5
    %v3922 = vmul.f32 %v3878, 0.5
    %v3923 = vmul.f32 %v3881, 0.5
    %v3924 = vmul.f32 %v3886, 0.5
    %v3925 = vmul.f32 %v3889, 0.5
    %v3926 = vmul.f32 %v3894, 0.5
    %v3927 = vmul.f32 %v3897, 0.5
    %v3928 = vmul.f32 %v3902, 0.5
    %v3929 = vmul.f32 %v3905, 0.5
    %v3930 = vmul.f32 %v3910, 0.5
    %v3931 = vmul.f32 %v3913, 0.5
    %v3932 = vmul.f32 %v3854, 0.70710677
    %v3933 = vmul.f32 %v3857, 0.70710677
    %v3934 = vmul.f32 %v3862, 0.70710677
    %v3935 = vmul.f32 %v3865, 0.70710677
    %v3936 = vmul.f32 %v3870, 0.70710677
    %v3937 = vmul.f32 %v3873, 0.70710677
    %v3938 = vmul.f32 %v3878, 0.70710677
    %v3939 = vmul.f32 %v3881, 0.70710677
    %v3940 = vmul.f32 %v3886, 0.70710677
    %v3941 = vmul.f32 %v3889, 0.70710677
    %v3942 = vmul.f32 %v3894, 0.70710677
    %v3943 = vmul.f32 %v3897, 0.70710677
    %v3944 = vmul.f32 %v3902, 0.70710677
    %v3945 = vmul.f32 %v3905, 0.70710677
    %v3946 = vmul.f32 %v3910, 0.70710677
    %v3947 = vmul.f32 %v3913, 0.70710677
    %v3948 = verf.f32.pop %v3932
    %v3949 = verf.f32.pop %v3933
    %v3950 = verf.f32.pop %v3934
    %v3951 = verf.f32.pop %v3935
    %v3952 = verf.f32.pop %v3936
    %v3953 = verf.f32.pop %v3937
    %v3954 = verf.f32.pop %v3938
    %v3955 = verf.f32.pop %v3939
    %v3956 = verf.f32.pop %v3940
    %v3957 = verf.f32.pop %v3941
    %v3958 = verf.f32.pop %v3942
    %v3959 = verf.f32.pop %v3943
    %v3960 = verf.f32.pop %v3944
    %v3961 = verf.f32.pop %v3945
    %v3962 = verf.f32.pop %v3946
    %v3963 = verf.f32.pop %v3947
    %v3964 = vadd.f32 %v3948, 1.0
    %v3965 = vadd.f32 %v3949, 1.0
    %v3966 = vadd.f32 %v3950, 1.0
    %v3967 = vadd.f32 %v3951, 1.0
    %v3968 = vadd.f32 %v3952, 1.0
    %v3969 = vadd.f32 %v3953, 1.0
    %v3970 = vadd.f32 %v3954, 1.0
    %v3971 = vadd.f32 %v3955, 1.0
    %v3972 = vadd.f32 %v3956, 1.0
    %v3973 = vadd.f32 %v3957, 1.0
    %v3974 = vadd.f32 %v3958, 1.0
    %v3975 = vadd.f32 %v3959, 1.0
    %v3976 = vadd.f32 %v3960, 1.0
    %v3977 = vadd.f32 %v3961, 1.0
    %v3978 = vadd.f32 %v3962, 1.0
    %v3979 = vadd.f32 %v3963, 1.0
    %v3980 = vmul.f32 %v3916, %v3964
    %v3981 = vmul.f32 %v3917, %v3965
    %v3982 = vmul.f32 %v3918, %v3966
    %v3983 = vmul.f32 %v3919, %v3967
    %v3984 = vmul.f32 %v3920, %v3968
    %v3985 = vmul.f32 %v3921, %v3969
    %v3986 = vmul.f32 %v3922, %v3970
    %v3987 = vmul.f32 %v3923, %v3971
    %v3988 = vmul.f32 %v3924, %v3972
    %v3989 = vmul.f32 %v3925, %v3973
    %v3990 = vmul.f32 %v3926, %v3974
    %v3991 = vmul.f32 %v3927, %v3975
    %v3992 = vmul.f32 %v3928, %v3976
    %v3993 = vmul.f32 %v3929, %v3977
    %v3994 = vmul.f32 %v3930, %v3978
    %v3995 = vmul.f32 %v3931, %v3979
    %v3996 = vpack.c.bf16 %v3981, %v3980
    %v3997 = vpack.c.bf16 %v3983, %v3982
    %v3998 = vpack.c.bf16 %v3985, %v3984
    %v3999 = vpack.c.bf16 %v3987, %v3986
    %v4000 = vpack.c.bf16 %v3989, %v3988
    %v4001 = vpack.c.bf16 %v3991, %v3990
    %v4002 = vpack.c.bf16 %v3993, %v3992
    %v4003 = vpack.c.bf16 %v3995, %v3994
    %v4004 = vld [vmem:[#allocation17] sm:$0xf]
    %v4005 = vld [vmem:[#allocation17 + $0x4] sm:$0xf]
    %v4006 = vld [vmem:[#allocation17 + $0x8] sm:$0xf]
    %v4007 = vld [vmem:[#allocation17 + $0xc] sm:$0xf]
    %v4008 = vld [vmem:[%s12] sm:$0x1]
    %v4010 = vlaneseq
    %v4011 = vshrl.u32 %v4010, 7
    %v4012 = vsub.s32 0, %v4011
    %v4013 = vrot.slane %v4008, %v4012
    %v4019 = vunpack.c.l.b16 %v4004
    %v4020 = vunpack.c.l.b16 %v4005
    %v4021 = vunpack.c.l.b16 %v4006
    %v4022 = vunpack.c.l.b16 %v4007
    %v4023 = vpack.c.b16 %v4020, %v4019
    %v4024 = vpack.c.b16 %v4022, %v4021
    %v4028 = vsel %vm244, %v3996, 0
    %v4031 = vsel %vm244, %v3997, 0
    %v4034 = vsel %vm244, %v3998, 0
    %v4037 = vsel %vm244, %v3999, 0
    %v4040 = vsel %vm244, %v4000, 0
    %v4043 = vsel %vm244, %v4001, 0
    %v4046 = vsel %vm244, %v4002, 0
    %v4049 = vsel %vm244, %v4003, 0
    %4051 = vmatprep.subr.bf16.mxu0 0
    %4052 = vmatpush1.bf16.msra.mxu0 0
    %4053 = vmatprep.subr.bf16.mxu0 0
    %4054 = vmatpush1.bf16.msra.mxu0 0
    %4055 = vmatprep.subr.bf16.mxu0 0
    %4056 = vmatpush1.bf16.msra.mxu0 0
    %4057 = vmatprep.subr.bf16.mxu0 0
    %4058 = vmatpush1.bf16.msra.mxu0 0
    %4059 = vmatprep.subr.bf16.mxu0 0
    %4060 = vmatpush1.bf16.msra.mxu0 0
    %4061 = vmatprep.subr.bf16.mxu0 0
    %4062 = vmatpush1.bf16.msra.mxu0 0
    %4063 = vmatprep.subr.bf16.mxu0 0
    %4064 = vmatpush1.bf16.msra.mxu0 %v4024
    %4065 = vmatprep.subr.bf16.mxu0 0
    %4066 = vmatpush1.bf16.msra.mxu0 %v4023
    %4067 = vmatprep.subr.bf16.mxu0 0
    %4068 = vmatpush2.bf16.msra.mxu0 0
    %4069 = vmatprep.subr.bf16.mxu0 0
    %4070 = vmatpush2.bf16.msra.mxu0 0
    %4071 = vmatprep.subr.bf16.mxu0 0
    %4072 = vmatpush2.bf16.msra.mxu0 0
    %4073 = vmatprep.subr.bf16.mxu0 0
    %4074 = vmatpush2.bf16.msra.mxu0 0
    %4075 = vmatprep.subr.bf16.mxu0 0
    %4076 = vmatpush2.bf16.msra.mxu0 0
    %4077 = vmatprep.subr.bf16.mxu0 0
    %4078 = vmatpush2.bf16.msra.mxu0 0
    %4079 = vmatprep.subr.bf16.mxu0 0
    %4080 = vmatpush2.bf16.msra.mxu0 0
    %4081 = vmatprep.subr.bf16.mxu0 0
    %4082 = vmatpush2.bf16.msra.mxu0 0
    %4083 = vmatprep.mubr.bf16.mxu0 0
    %4084 = vmatmul.mubr.bf16.gmra.mxu0 %v4028
    %v4085 = vpop.f32.mrf.mxu0
    %v4086 = vadd.f32 %v4013, %v4085
    %v4087 = vpop.f32.mrf.mxu0
    %v4088 = vpop.f32.mrf.mxu0
    %v4089 = vadd.f32 %v4013, %v4088
    %v4090 = vpop.f32.mrf.mxu0
    %4091 = vmatprep.mubr.bf16.mxu0 0
    %4092 = vmatmul.mubr.bf16.gmra.mxu0 %v4031
    %v4093 = vpop.f32.mrf.mxu0
    %v4094 = vadd.f32 %v4013, %v4093
    %v4095 = vpop.f32.mrf.mxu0
    %v4096 = vpop.f32.mrf.mxu0
    %v4097 = vadd.f32 %v4013, %v4096
    %v4098 = vpop.f32.mrf.mxu0
    %4099 = vmatprep.mubr.bf16.mxu0 0
    %4100 = vmatmul.mubr.bf16.gmra.mxu0 %v4034
    %v4101 = vpop.f32.mrf.mxu0
    %v4102 = vadd.f32 %v4013, %v4101
    %v4103 = vpop.f32.mrf.mxu0
    %v4104 = vpop.f32.mrf.mxu0
    %v4105 = vadd.f32 %v4013, %v4104
    %v4106 = vpop.f32.mrf.mxu0
    %4107 = vmatprep.mubr.bf16.mxu0 0
    %4108 = vmatmul.mubr.bf16.gmra.mxu0 %v4037
    %v4109 = vpop.f32.mrf.mxu0
    %v4110 = vadd.f32 %v4013, %v4109
    %v4111 = vpop.f32.mrf.mxu0
    %v4112 = vpop.f32.mrf.mxu0
    %v4113 = vadd.f32 %v4013, %v4112
    %v4114 = vpop.f32.mrf.mxu0
    %4115 = vmatprep.mubr.bf16.mxu0 0
    %4116 = vmatmul.mubr.bf16.gmra.mxu0 %v4040
    %v4117 = vpop.f32.mrf.mxu0
    %v4118 = vadd.f32 %v4013, %v4117
    %v4119 = vpop.f32.mrf.mxu0
    %v4120 = vpop.f32.mrf.mxu0
    %v4121 = vadd.f32 %v4013, %v4120
    %v4122 = vpop.f32.mrf.mxu0
    %4123 = vmatprep.mubr.bf16.mxu0 0
    %4124 = vmatmul.mubr.bf16.gmra.mxu0 %v4043
    %v4125 = vpop.f32.mrf.mxu0
    %v4126 = vadd.f32 %v4013, %v4125
    %v4127 = vpop.f32.mrf.mxu0
    %v4128 = vpop.f32.mrf.mxu0
    %v4129 = vadd.f32 %v4013, %v4128
    %v4130 = vpop.f32.mrf.mxu0
    %4131 = vmatprep.mubr.bf16.mxu0 0
    %4132 = vmatmul.mubr.bf16.gmra.mxu0 %v4046
    %v4133 = vpop.f32.mrf.mxu0
    %v4134 = vadd.f32 %v4013, %v4133
    %v4135 = vpop.f32.mrf.mxu0
    %v4136 = vpop.f32.mrf.mxu0
    %v4137 = vadd.f32 %v4013, %v4136
    %v4138 = vpop.f32.mrf.mxu0
    %4139 = vmatprep.mubr.bf16.mxu0 0
    %4140 = vmatmul.mubr.bf16.gmra.mxu0 %v4049
    %v4141 = vpop.f32.mrf.mxu0
    %v4142 = vadd.f32 %v4013, %v4141
    %v4143 = vpop.f32.mrf.mxu0
    %v4144 = vpop.f32.mrf.mxu0
    %v4145 = vadd.f32 %v4013, %v4144
    %v4146 = vpop.f32.mrf.mxu0
    %4147 = vdwg.mxu0
    %v4148 = vadd.f32 %v4086, %v3494
    %v4149 = vadd.f32 %v4089, %v3495
    %v4150 = vadd.f32 %v4094, %v3496
    %v4151 = vadd.f32 %v4097, %v3497
    %v4152 = vadd.f32 %v4102, %v3498
    %v4153 = vadd.f32 %v4105, %v3499
    %v4154 = vadd.f32 %v4110, %v3500
    %v4155 = vadd.f32 %v4113, %v3501
    %v4156 = vadd.f32 %v4118, %v3502
    %v4157 = vadd.f32 %v4121, %v3503
    %v4158 = vadd.f32 %v4126, %v3504
    %v4159 = vadd.f32 %v4129, %v3505
    %v4160 = vadd.f32 %v4134, %v3506
    %v4161 = vadd.f32 %v4137, %v3507
    %v4162 = vadd.f32 %v4142, %v3508
    %v4163 = vadd.f32 %v4145, %v3509
    %4164 = vxpose.xlu0.b32.start [1/16] %v4148, 128
    %4165 = vxpose.xlu0.b32.cont [2/16] %v4149, 128
    %4166 = vxpose.xlu0.b32.cont [3/16] %v4150, 128
    %4167 = vxpose.xlu0.b32.cont [4/16] %v4151, 128
    %4168 = vxpose.xlu0.b32.cont [5/16] %v4152, 128
    %4169 = vxpose.xlu0.b32.cont [6/16] %v4153, 128
    %4170 = vxpose.xlu0.b32.cont [7/16] %v4154, 128
    %4171 = vxpose.xlu0.b32.cont [8/16] %v4155, 128
    %4172 = vxpose.xlu0.b32.cont [9/16] 0.0, 128
    %4173 = vxpose.xlu0.b32.cont [10/16] 0.0, 128
    %4174 = vxpose.xlu0.b32.cont [11/16] 0.0, 128
    %4175 = vxpose.xlu0.b32.cont [12/16] 0.0, 128
    %4176 = vxpose.xlu0.b32.cont [13/16] 0.0, 128
    %4177 = vxpose.xlu0.b32.cont [14/16] 0.0, 128
    %4178 = vxpose.xlu0.b32.cont [15/16] 0.0, 128
    %4179 = vxpose.xlu0.b32.end [16/16] 0.0, 128
    %v4180 = vpop.trf.xlu0
    %v4181 = vpop.trf.xlu0
    %v4182 = vpop.trf.xlu0
    %v4183 = vpop.trf.xlu0
    %v4184 = vpop.trf.xlu0
    %v4185 = vpop.trf.xlu0
    %v4186 = vpop.trf.xlu0
    %v4187 = vpop.trf.xlu0
    %v4188 = vpop.trf.xlu0
    %v4189 = vpop.trf.xlu0
    %v4190 = vpop.trf.xlu0
    %v4191 = vpop.trf.xlu0
    %v4192 = vpop.trf.xlu0
    %v4193 = vpop.trf.xlu0
    %v4194 = vpop.trf.xlu0
    %v4195 = vpop.trf.xlu0
    %4196 = vxpose.xlu0.b32.start [1/16] %v4156, 128
    %4197 = vxpose.xlu0.b32.cont [2/16] %v4157, 128
    %4198 = vxpose.xlu0.b32.cont [3/16] %v4158, 128
    %4199 = vxpose.xlu0.b32.cont [4/16] %v4159, 128
    %4200 = vxpose.xlu0.b32.cont [5/16] %v4160, 128
    %4201 = vxpose.xlu0.b32.cont [6/16] %v4161, 128
    %4202 = vxpose.xlu0.b32.cont [7/16] %v4162, 128
    %4203 = vxpose.xlu0.b32.cont [8/16] %v4163, 128
    %4204 = vxpose.xlu0.b32.cont [9/16] 0.0, 128
    %4205 = vxpose.xlu0.b32.cont [10/16] 0.0, 128
    %4206 = vxpose.xlu0.b32.cont [11/16] 0.0, 128
    %4207 = vxpose.xlu0.b32.cont [12/16] 0.0, 128
    %4208 = vxpose.xlu0.b32.cont [13/16] 0.0, 128
    %4209 = vxpose.xlu0.b32.cont [14/16] 0.0, 128
    %4210 = vxpose.xlu0.b32.cont [15/16] 0.0, 128
    %4211 = vxpose.xlu0.b32.end [16/16] 0.0, 128
    %v4212 = vpop.trf.xlu0
    %v4213 = vpop.trf.xlu0
    %v4214 = vpop.trf.xlu0
    %v4215 = vpop.trf.xlu0
    %v4216 = vpop.trf.xlu0
    %v4217 = vpop.trf.xlu0
    %v4218 = vpop.trf.xlu0
    %v4219 = vpop.trf.xlu0
    %v4220 = vpop.trf.xlu0
    %v4221 = vpop.trf.xlu0
    %v4222 = vpop.trf.xlu0
    %v4223 = vpop.trf.xlu0
    %v4224 = vpop.trf.xlu0
    %v4225 = vpop.trf.xlu0
    %v4226 = vpop.trf.xlu0
    %v4227 = vpop.trf.xlu0
    %v4228 = vcombine.high %v4180, 0.0
    %v4230 = vunpack.c.l.s4 1983009808
    %v4231 = vunpack.c.0.s8 %v4230
    %v4232 = vlaneseq
    %v4233 = vshrl.u32 %v4232, 7
    %v4234 = vsub.s32 %v4231, %v4233
    %v4235 = vrot.slane %v4180, %v4234
    %v4237 = vunpack.c.l.s4 1983009808
    %v4238 = vunpack.c.0.s8 %v4237
    %v4239 = vlaneseq
    %v4240 = vshrl.u32 %v4239, 7
    %v4241 = vsub.s32 %v4238, %v4240
    %v4242 = vrot.slane %v4228, %v4241
    %v4243 = vcombine.high %v4212, 0.0
    %v4245 = vunpack.c.l.s4 1983009808
    %v4246 = vunpack.c.0.s8 %v4245
    %v4247 = vlaneseq
    %v4248 = vshrl.u32 %v4247, 7
    %v4249 = vsub.s32 %v4246, %v4248
    %v4250 = vrot.slane %v4212, %v4249
    %v4252 = vunpack.c.l.s4 1983009808
    %v4253 = vunpack.c.0.s8 %v4252
    %v4254 = vlaneseq
    %v4255 = vshrl.u32 %v4254, 7
    %v4256 = vsub.s32 %v4253, %v4255
    %v4257 = vrot.slane %v4243, %v4256
    %v4258 = vcombine.low %v4235, %v4250
    %v4259 = vcombine.high %v4235, %v4250
    %v4261 = vunpack.c.l.s4 1934713408
    %v4262 = vunpack.c.0.s8 %v4261
    %v4263 = vlaneseq
    %v4264 = vshrl.u32 %v4263, 7
    %v4265 = vsub.s32 %v4262, %v4264
    %v4266 = vrot.slane %v4258, %v4265
    %v4268 = vunpack.c.l.s4 1934713408
    %v4269 = vunpack.c.0.s8 %v4268
    %v4270 = vlaneseq
    %v4271 = vshrl.u32 %v4270, 7
    %v4272 = vsub.s32 %v4269, %v4271
    %v4273 = vrot.slane %v4259, %v4272
    %v4274 = vcombine.low %v4242, %v4257
    %v4275 = vcombine.high %v4242, %v4257
    %v4277 = vunpack.c.l.s4 1934713408
    %v4278 = vunpack.c.0.s8 %v4277
    %v4279 = vlaneseq
    %v4280 = vshrl.u32 %v4279, 7
    %v4281 = vsub.s32 %v4278, %v4280
    %v4282 = vrot.slane %v4274, %v4281
    %v4284 = vunpack.c.l.s4 1934713408
    %v4285 = vunpack.c.0.s8 %v4284
    %v4286 = vlaneseq
    %v4287 = vshrl.u32 %v4286, 7
    %v4288 = vsub.s32 %v4285, %v4287
    %v4289 = vrot.slane %v4275, %v4288
    %v4290 = vcombine.high %v4266, 0.0
    %v4291 = vcombine.high %v4273, 0.0
    %v4292 = vcombine.high %v4282, 0.0
    %v4293 = vcombine.high %v4289, 0.0
    %v4294 = vcombine.high %v4181, 0.0
    %v4296 = vunpack.c.l.s4 1983009808
    %v4297 = vunpack.c.0.s8 %v4296
    %v4298 = vlaneseq
    %v4299 = vshrl.u32 %v4298, 7
    %v4300 = vsub.s32 %v4297, %v4299
    %v4301 = vrot.slane %v4181, %v4300
    %v4303 = vunpack.c.l.s4 1983009808
    %v4304 = vunpack.c.0.s8 %v4303
    %v4305 = vlaneseq
    %v4306 = vshrl.u32 %v4305, 7
    %v4307 = vsub.s32 %v4304, %v4306
    %v4308 = vrot.slane %v4294, %v4307
    %v4309 = vcombine.high %v4213, 0.0
    %v4311 = vunpack.c.l.s4 1983009808
    %v4312 = vunpack.c.0.s8 %v4311
    %v4313 = vlaneseq
    %v4314 = vshrl.u32 %v4313, 7
    %v4315 = vsub.s32 %v4312, %v4314
    %v4316 = vrot.slane %v4213, %v4315
    %v4318 = vunpack.c.l.s4 1983009808
    %v4319 = vunpack.c.0.s8 %v4318
    %v4320 = vlaneseq
    %v4321 = vshrl.u32 %v4320, 7
    %v4322 = vsub.s32 %v4319, %v4321
    %v4323 = vrot.slane %v4309, %v4322
    %v4324 = vcombine.low %v4301, %v4316
    %v4325 = vcombine.high %v4301, %v4316
    %v4327 = vunpack.c.l.s4 1934713408
    %v4328 = vunpack.c.0.s8 %v4327
    %v4329 = vlaneseq
    %v4330 = vshrl.u32 %v4329, 7
    %v4331 = vsub.s32 %v4328, %v4330
    %v4332 = vrot.slane %v4324, %v4331
    %v4334 = vunpack.c.l.s4 1934713408
    %v4335 = vunpack.c.0.s8 %v4334
    %v4336 = vlaneseq
    %v4337 = vshrl.u32 %v4336, 7
    %v4338 = vsub.s32 %v4335, %v4337
    %v4339 = vrot.slane %v4325, %v4338
    %v4340 = vcombine.low %v4308, %v4323
    %v4341 = vcombine.high %v4308, %v4323
    %v4343 = vunpack.c.l.s4 1934713408
    %v4344 = vunpack.c.0.s8 %v4343
    %v4345 = vlaneseq
    %v4346 = vshrl.u32 %v4345, 7
    %v4347 = vsub.s32 %v4344, %v4346
    %v4348 = vrot.slane %v4340, %v4347
    %v4350 = vunpack.c.l.s4 1934713408
    %v4351 = vunpack.c.0.s8 %v4350
    %v4352 = vlaneseq
    %v4353 = vshrl.u32 %v4352, 7
    %v4354 = vsub.s32 %v4351, %v4353
    %v4355 = vrot.slane %v4341, %v4354
    %v4356 = vcombine.high %v4332, 0.0
    %v4357 = vcombine.high %v4339, 0.0
    %v4358 = vcombine.high %v4348, 0.0
    %v4359 = vcombine.high %v4355, 0.0
    %v4360 = vcombine.high %v4182, 0.0
    %v4362 = vunpack.c.l.s4 1983009808
    %v4363 = vunpack.c.0.s8 %v4362
    %v4364 = vlaneseq
    %v4365 = vshrl.u32 %v4364, 7
    %v4366 = vsub.s32 %v4363, %v4365
    %v4367 = vrot.slane %v4182, %v4366
    %v4369 = vunpack.c.l.s4 1983009808
    %v4370 = vunpack.c.0.s8 %v4369
    %v4371 = vlaneseq
    %v4372 = vshrl.u32 %v4371, 7
    %v4373 = vsub.s32 %v4370, %v4372
    %v4374 = vrot.slane %v4360, %v4373
    %v4375 = vcombine.high %v4214, 0.0
    %v4377 = vunpack.c.l.s4 1983009808
    %v4378 = vunpack.c.0.s8 %v4377
    %v4379 = vlaneseq
    %v4380 = vshrl.u32 %v4379, 7
    %v4381 = vsub.s32 %v4378, %v4380
    %v4382 = vrot.slane %v4214, %v4381
    %v4384 = vunpack.c.l.s4 1983009808
    %v4385 = vunpack.c.0.s8 %v4384
    %v4386 = vlaneseq
    %v4387 = vshrl.u32 %v4386, 7
    %v4388 = vsub.s32 %v4385, %v4387
    %v4389 = vrot.slane %v4375, %v4388
    %v4390 = vcombine.low %v4367, %v4382
    %v4391 = vcombine.high %v4367, %v4382
    %v4393 = vunpack.c.l.s4 1934713408
    %v4394 = vunpack.c.0.s8 %v4393
    %v4395 = vlaneseq
    %v4396 = vshrl.u32 %v4395, 7
    %v4397 = vsub.s32 %v4394, %v4396
    %v4398 = vrot.slane %v4390, %v4397
    %v4400 = vunpack.c.l.s4 1934713408
    %v4401 = vunpack.c.0.s8 %v4400
    %v4402 = vlaneseq
    %v4403 = vshrl.u32 %v4402, 7
    %v4404 = vsub.s32 %v4401, %v4403
    %v4405 = vrot.slane %v4391, %v4404
    %v4406 = vcombine.low %v4374, %v4389
    %v4407 = vcombine.high %v4374, %v4389
    %v4409 = vunpack.c.l.s4 1934713408
    %v4410 = vunpack.c.0.s8 %v4409
    %v4411 = vlaneseq
    %v4412 = vshrl.u32 %v4411, 7
    %v4413 = vsub.s32 %v4410, %v4412
    %v4414 = vrot.slane %v4406, %v4413
    %v4416 = vunpack.c.l.s4 1934713408
    %v4417 = vunpack.c.0.s8 %v4416
    %v4418 = vlaneseq
    %v4419 = vshrl.u32 %v4418, 7
    %v4420 = vsub.s32 %v4417, %v4419
    %v4421 = vrot.slane %v4407, %v4420
    %v4422 = vcombine.high %v4398, 0.0
    %v4423 = vcombine.high %v4405, 0.0
    %v4424 = vcombine.high %v4414, 0.0
    %v4425 = vcombine.high %v4421, 0.0
    %v4426 = vcombine.high %v4183, 0.0
    %v4428 = vunpack.c.l.s4 1983009808
    %v4429 = vunpack.c.0.s8 %v4428
    %v4430 = vlaneseq
    %v4431 = vshrl.u32 %v4430, 7
    %v4432 = vsub.s32 %v4429, %v4431
    %v4433 = vrot.slane %v4183, %v4432
    %v4435 = vunpack.c.l.s4 1983009808
    %v4436 = vunpack.c.0.s8 %v4435
    %v4437 = vlaneseq
    %v4438 = vshrl.u32 %v4437, 7
    %v4439 = vsub.s32 %v4436, %v4438
    %v4440 = vrot.slane %v4426, %v4439
    %v4441 = vcombine.high %v4215, 0.0
    %v4443 = vunpack.c.l.s4 1983009808
    %v4444 = vunpack.c.0.s8 %v4443
    %v4445 = vlaneseq
    %v4446 = vshrl.u32 %v4445, 7
    %v4447 = vsub.s32 %v4444, %v4446
    %v4448 = vrot.slane %v4215, %v4447
    %v4450 = vunpack.c.l.s4 1983009808
    %v4451 = vunpack.c.0.s8 %v4450
    %v4452 = vlaneseq
    %v4453 = vshrl.u32 %v4452, 7
    %v4454 = vsub.s32 %v4451, %v4453
    %v4455 = vrot.slane %v4441, %v4454
    %v4456 = vcombine.low %v4433, %v4448
    %v4457 = vcombine.high %v4433, %v4448
    %v4459 = vunpack.c.l.s4 1934713408
    %v4460 = vunpack.c.0.s8 %v4459
    %v4461 = vlaneseq
    %v4462 = vshrl.u32 %v4461, 7
    %v4463 = vsub.s32 %v4460, %v4462
    %v4464 = vrot.slane %v4456, %v4463
    %v4466 = vunpack.c.l.s4 1934713408
    %v4467 = vunpack.c.0.s8 %v4466
    %v4468 = vlaneseq
    %v4469 = vshrl.u32 %v4468, 7
    %v4470 = vsub.s32 %v4467, %v4469
    %v4471 = vrot.slane %v4457, %v4470
    %v4472 = vcombine.low %v4440, %v4455
    %v4473 = vcombine.high %v4440, %v4455
    %v4475 = vunpack.c.l.s4 1934713408
    %v4476 = vunpack.c.0.s8 %v4475
    %v4477 = vlaneseq
    %v4478 = vshrl.u32 %v4477, 7
    %v4479 = vsub.s32 %v4476, %v4478
    %v4480 = vrot.slane %v4472, %v4479
    %v4482 = vunpack.c.l.s4 1934713408
    %v4483 = vunpack.c.0.s8 %v4482
    %v4484 = vlaneseq
    %v4485 = vshrl.u32 %v4484, 7
    %v4486 = vsub.s32 %v4483, %v4485
    %v4487 = vrot.slane %v4473, %v4486
    %v4488 = vcombine.high %v4464, 0.0
    %v4489 = vcombine.high %v4471, 0.0
    %v4490 = vcombine.high %v4480, 0.0
    %v4491 = vcombine.high %v4487, 0.0
    %4493 = vrot.lane.b32.xlu0 %v4290, 64
    %v4494 = vpop.permute.xlu0 %4493
    %4497 = vrot.lane.b32.xlu0 %v4291, 64
    %v4498 = vpop.permute.xlu0 %4497
    %4501 = vrot.lane.b32.xlu0 %v4292, 64
    %v4502 = vpop.permute.xlu0 %4501
    %4505 = vrot.lane.b32.xlu0 %v4293, 64
    %v4506 = vpop.permute.xlu0 %4505
    %4509 = vrot.lane.b32.xlu0 %v4356, 64
    %v4510 = vpop.permute.xlu0 %4509
    %4513 = vrot.lane.b32.xlu0 %v4357, 64
    %v4514 = vpop.permute.xlu0 %4513
    %4517 = vrot.lane.b32.xlu0 %v4358, 64
    %v4518 = vpop.permute.xlu0 %4517
    %4521 = vrot.lane.b32.xlu0 %v4359, 64
    %v4522 = vpop.permute.xlu0 %4521
    %4525 = vrot.lane.b32.xlu0 %v4422, 64
    %v4526 = vpop.permute.xlu0 %4525
    %4529 = vrot.lane.b32.xlu0 %v4423, 64
    %v4530 = vpop.permute.xlu0 %4529
    %4533 = vrot.lane.b32.xlu0 %v4424, 64
    %v4534 = vpop.permute.xlu0 %4533
    %4537 = vrot.lane.b32.xlu0 %v4425, 64
    %v4538 = vpop.permute.xlu0 %4537
    %4541 = vrot.lane.b32.xlu0 %v4488, 64
    %v4542 = vpop.permute.xlu0 %4541
    %4545 = vrot.lane.b32.xlu0 %v4489, 64
    %v4546 = vpop.permute.xlu0 %4545
    %4549 = vrot.lane.b32.xlu0 %v4490, 64
    %v4550 = vpop.permute.xlu0 %4549
    %4553 = vrot.lane.b32.xlu0 %v4491, 64
    %v4554 = vpop.permute.xlu0 %4553
    %v4556 = vsel %vm1651, %v4266, %v4494
    %v4557 = vsel %vm1651, %v4273, %v4498
    %v4558 = vsel %vm1651, %v4282, %v4502
    %v4559 = vsel %vm1651, %v4289, %v4506
    %v4560 = vsel %vm1651, %v4332, %v4510
    %v4561 = vsel %vm1651, %v4339, %v4514
    %v4562 = vsel %vm1651, %v4348, %v4518
    %v4563 = vsel %vm1651, %v4355, %v4522
    %v4564 = vsel %vm1651, %v4398, %v4526
    %v4565 = vsel %vm1651, %v4405, %v4530
    %v4566 = vsel %vm1651, %v4414, %v4534
    %v4567 = vsel %vm1651, %v4421, %v4538
    %v4568 = vsel %vm1651, %v4464, %v4542
    %v4569 = vsel %vm1651, %v4471, %v4546
    %v4570 = vsel %vm1651, %v4480, %v4550
    %v4571 = vsel %vm1651, %v4487, %v4554
    %v4588 = vcombine.low %v4556, %v4557
    %v4589 = vcombine.low %v4558, %v4559
    %v4591 = vunpack.c.l.s4 1983009808
    %v4592 = vunpack.c.0.s8 %v4591
    %v4593 = vlaneseq
    %v4594 = vshrl.u32 %v4593, 7
    %v4595 = vsub.s32 %v4592, %v4594
    %v4596 = vrot.slane %v4588, %v4595
    %v4598 = vunpack.c.l.s4 1983009808
    %v4599 = vunpack.c.0.s8 %v4598
    %v4600 = vlaneseq
    %v4601 = vshrl.u32 %v4600, 7
    %v4602 = vsub.s32 %v4599, %v4601
    %v4603 = vrot.slane %v4589, %v4602
    %v4604 = vcombine.low %v4596, %v4603
    %v4605 = vcombine.low %v4560, %v4561
    %v4606 = vcombine.low %v4562, %v4563
    %v4608 = vunpack.c.l.s4 1983009808
    %v4609 = vunpack.c.0.s8 %v4608
    %v4610 = vlaneseq
    %v4611 = vshrl.u32 %v4610, 7
    %v4612 = vsub.s32 %v4609, %v4611
    %v4613 = vrot.slane %v4605, %v4612
    %v4615 = vunpack.c.l.s4 1983009808
    %v4616 = vunpack.c.0.s8 %v4615
    %v4617 = vlaneseq
    %v4618 = vshrl.u32 %v4617, 7
    %v4619 = vsub.s32 %v4616, %v4618
    %v4620 = vrot.slane %v4606, %v4619
    %v4621 = vcombine.low %v4613, %v4620
    %v4622 = vcombine.low %v4564, %v4565
    %v4623 = vcombine.low %v4566, %v4567
    %v4625 = vunpack.c.l.s4 1983009808
    %v4626 = vunpack.c.0.s8 %v4625
    %v4627 = vlaneseq
    %v4628 = vshrl.u32 %v4627, 7
    %v4629 = vsub.s32 %v4626, %v4628
    %v4630 = vrot.slane %v4622, %v4629
    %v4632 = vunpack.c.l.s4 1983009808
    %v4633 = vunpack.c.0.s8 %v4632
    %v4634 = vlaneseq
    %v4635 = vshrl.u32 %v4634, 7
    %v4636 = vsub.s32 %v4633, %v4635
    %v4637 = vrot.slane %v4623, %v4636
    %v4638 = vcombine.low %v4630, %v4637
    %v4639 = vcombine.low %v4568, %v4569
    %v4640 = vcombine.low %v4570, %v4571
    %v4642 = vunpack.c.l.s4 1983009808
    %v4643 = vunpack.c.0.s8 %v4642
    %v4644 = vlaneseq
    %v4645 = vshrl.u32 %v4644, 7
    %v4646 = vsub.s32 %v4643, %v4645
    %v4647 = vrot.slane %v4639, %v4646
    %v4649 = vunpack.c.l.s4 1983009808
    %v4650 = vunpack.c.0.s8 %v4649
    %v4651 = vlaneseq
    %v4652 = vshrl.u32 %v4651, 7
    %v4653 = vsub.s32 %v4650, %v4652
    %v4654 = vrot.slane %v4640, %v4653
    %v4655 = vcombine.low %v4647, %v4654
    %4660 = vst [vmem:[#allocation19] sm:$0xff] %v4604
    %4661 = vst [vmem:[#allocation19 + $0x8] sm:$0xff] %v4621
    %4662 = vst [vmem:[#allocation19 + $0x10] sm:$0xff] %v4638
    %4663 = vst [vmem:[#allocation19 + $0x18] sm:$0xff] %v4655
    // Predicated region
    $region94: #{tpu_custom_call.1} parent=1 // pred_check
      _
    $region95: #{tpu_custom_call.1} parent=1 // pred_check_branch
      %4665 = sbr.rel (0) target = $region97
    $region96: #{tpu_custom_call.1} parent=1 // pred_region
      %s4667 = ssub.s32 512, 512
      %4668 = vsyncadd [#allocation4], %s4667
      %s4670 = sshll.u32 [#allocation19], 4
      %s4671 = int_to_ptr.vmem [resolvable:$true] %s4670
      %4673 = dma.vmem_to_hbm [thread:$0]  %s4671, 512, %s13, [#allocation4]
    $region97: #{tpu_custom_call.1} parent=1 // pred_fallthru
      _
    // Predicated region
    $region98: #{tpu_custom_call.1} parent=1 // pred_check
      _
    $region99: #{tpu_custom_call.1} parent=1 // pred_check_branch
      %4675 = sbr.rel (0) target = $region101
    $region100: #{tpu_custom_call.1} parent=1 // pred_region
      %4676 = dma.done [#allocation4], 512
    $region101: #{tpu_custom_call.1} parent=1 // pred_fallthru
      _
    %4677 = vsyncpa [#allocation3], 1
    %4678 = vsyncpa [#allocation6], 1
    %4679 = vsyncpa [#allocation9], 1
    %4680 = vsyncpa [#allocation12], 1
    %4681 = vsyncpa [#allocation15], 1
    %4682 = vsyncpa [#allocation18], 1
    %4683 = vsyncpa [#allocation4], 1

</llo_original>
